<compile_context>
chip_gen: v7x
topology: tpu7x:2x2x1
jax: 0.10.0
libtpu: 0.0.40
codegen_flags: <defaults>
</compile_context>

<pallas_src>
import functools

import jax
import jax.numpy as jnp
from jax.experimental import pallas as pl
from jax.experimental.pallas import tpu as pltpu

BN_EPS = 1e-5
LANE = 128


def _conv_stats_kernel(xp_ref, w_ref, y_ref, psum_ref, psumsq_ref, *,
                       KH, KW, OH, OW, Cin, Cpad, stride):
    """Per-image conv (KH*KW shifted-slab matmuls) + per-channel partial stats.

    xp_ref : (1, Hp, Wp, Cin)      bf16   padded NHWC image
    w_ref  : (KH*KW, Cin, Cpad)    bf16   weights, Cout zero-padded to Cpad lanes
    y_ref  : (1, OH, OW, Cpad)     f32    conv output (lane-dense)
    psum   : (1, 1, Cpad)          f32    sum_y over this image's OH*OW rows
    psumsq : (1, 1, Cpad)          f32    sum_y^2 over this image's OH*OW rows
    """
    acc = jnp.zeros((OH * OW, Cpad), jnp.float32)
    if stride != 1:
        # TODO(synk): stride>1 path uses strided value slicing; less tuned than stride=1.
        x_full = xp_ref[0]
    for dh in range(KH):
        for dw in range(KW):
            if stride == 1:
                slab = xp_ref[0, dh:dh + OH, dw:dw + OW, :]
            else:
                slab = jax.lax.slice(
                    x_full, (dh, dw, 0),
                    (dh + (OH - 1) * stride + 1,
                     dw + (OW - 1) * stride + 1, Cin),
                    (stride, stride, 1))
            slab2 = slab.reshape(OH * OW, Cin)
            acc = acc + jnp.dot(slab2, w_ref[dh * KW + dw],
                                preferred_element_type=jnp.float32)
    y_ref[...] = acc.reshape(1, OH, OW, Cpad)
    psum_ref[...] = jnp.sum(acc, axis=0, keepdims=True).reshape(1, 1, Cpad)
    psumsq_ref[...] = jnp.sum(acc * acc, axis=0, keepdims=True).reshape(1, 1, Cpad)


def _bn_act_kernel(y_ref, scale_ref, shift_ref, o_ref, *, apply_act):
    """Per-row-tile normalize + affine (+ReLU). All f32, lane-dense (Cpad=128)."""
    out = y_ref[...] * scale_ref[...] + shift_ref[...]
    if apply_act:
        out = jnp.maximum(out, 0.0)
    o_ref[...] = out


def conv_block_forward(x_nchw, conv_w, conv_b, bn_gamma, bn_beta, *,
                       stride=1, padding=1, apply_act=True):
    """Forward pass matching ConvBlock(in_c, out_c, k, stride, padding, apply_act).

    x_nchw : (N, Cin, H, W)        conv_w : (Cout, Cin, KH, KW)   conv_b : (Cout,)
    """
    N, Cin, H, W = x_nchw.shape
    Cout, _, KH, KW = conv_w.shape
    OH = (H + 2 * padding - KH) // stride + 1
    OW = (W + 2 * padding - KW) // stride + 1
    M = N * OH * OW
    Cpad = ((Cout + LANE - 1) // LANE) * LANE
    Hp, Wp = H + 2 * padding, W + 2 * padding

    # ---- glue: NCHW -> NHWC + spatial zero pad (no im2col materialization) -------
    x = jnp.transpose(x_nchw, (0, 2, 3, 1))
    xp = jnp.pad(x, ((0, 0), (padding, padding), (padding, padding), (0, 0)))
    xp = xp.astype(jnp.bfloat16)

    # Weights (Cout,Cin,KH,KW) -> (KH*KW, Cin, Cpad), bf16 for the MXU.
    w = jnp.transpose(conv_w, (2, 3, 1, 0)).reshape(KH * KW, Cin, Cout)
    w = jnp.pad(w, ((0, 0), (0, 0), (0, Cpad - Cout))).astype(jnp.bfloat16)

    # Conv bias is exactly cancelled by training-mode BN's mean subtraction: drop it.
    del conv_b

    # ---- pass 1: conv + per-image channel sum/sumsq -------------------------------
    kernel_a = functools.partial(_conv_stats_kernel, KH=KH, KW=KW, OH=OH, OW=OW,
                                 Cin=Cin, Cpad=Cpad, stride=stride)
    flops_a = 2 * M * KH * KW * Cin * Cpad
    bytes_a = xp.size * 2 + w.size * 2 + M * Cpad * 4 + 2 * N * Cpad * 4
    y, psum, psumsq = pl.pallas_call(
        kernel_a,
        grid=(N,),
        in_specs=[
            pl.BlockSpec((1, Hp, Wp, Cin), lambda n: (n, 0, 0, 0)),
            pl.BlockSpec((KH * KW, Cin, Cpad), lambda n: (0, 0, 0)),   # resident
        ],
        out_specs=(
            pl.BlockSpec((1, OH, OW, Cpad), lambda n: (n, 0, 0, 0)),
            pl.BlockSpec((1, 1, Cpad), lambda n: (n, 0, 0)),
            pl.BlockSpec((1, 1, Cpad), lambda n: (n, 0, 0)),
        ),
        out_shape=(
            jax.ShapeDtypeStruct((N, OH, OW, Cpad), jnp.float32),
            jax.ShapeDtypeStruct((N, 1, Cpad), jnp.float32),
            jax.ShapeDtypeStruct((N, 1, Cpad), jnp.float32),
        ),
        compiler_params=pltpu.CompilerParams(
            dimension_semantics=("parallel",),
            vmem_limit_bytes=32 * 1024 * 1024),
        cost_estimate=pl.CostEstimate(flops=flops_a, transcendentals=0,
                                      bytes_accessed=bytes_a),
    )(xp, w)

    # ---- glue: global BN stats (biased var over N,H,W) folded to scale/shift ------
    count = jnp.float32(M)
    mean = jnp.sum(psum, axis=(0, 1)) / count
    var = jnp.maximum(jnp.sum(psumsq, axis=(0, 1)) / count - mean * mean, 0.0)
    gamma = jnp.pad(bn_gamma.astype(jnp.float32), (0, Cpad - Cout))
    beta = jnp.pad(bn_beta.astype(jnp.float32), (0, Cpad - Cout))
    scale = gamma * jax.lax.rsqrt(var + BN_EPS)
    shift = beta - mean * scale
    scale = scale.reshape(1, Cpad)
    shift = shift.reshape(1, Cpad)

    # ---- pass 2: normalize + affine (+ReLU), tiled over rows, lane-dense out ------
    y2 = y.reshape(M, Cpad)                      # collapse leading dims (no copy)
    TM = min(M, 256)                             # raise toward 512-1024 for big shapes
    kernel_b = functools.partial(_bn_act_kernel, apply_act=apply_act)
    out2 = pl.pallas_call(
        kernel_b,
        grid=(pl.cdiv(M, TM),),
        in_specs=[
            pl.BlockSpec((TM, Cpad), lambda i: (i, 0)),
            pl.BlockSpec((1, Cpad), lambda i: (0, 0)),
            pl.BlockSpec((1, Cpad), lambda i: (0, 0)),
        ],
        out_specs=pl.BlockSpec((TM, Cpad), lambda i: (i, 0)),
        out_shape=jax.ShapeDtypeStruct((M, Cpad), jnp.float32),
        compiler_params=pltpu.CompilerParams(
            dimension_semantics=("parallel",),
            vmem_limit_bytes=32 * 1024 * 1024),
        cost_estimate=pl.CostEstimate(flops=2 * M * Cpad, transcendentals=0,
                                      bytes_accessed=2 * M * Cpad * 4),
    )(y2, scale, shift)

    # ---- glue: strip channel padding, back to NCHW --------------------------------
    out = out2[:, :Cout].reshape(N, OH, OW, Cout)
    return jnp.transpose(out, (0, 3, 1, 2))


def _reference(x, w, b, gamma, beta, stride, padding, apply_act):
    """Pure-JAX reference: Conv2d + training-mode BatchNorm2d + ReLU (f32)."""
    y = jax.lax.conv_general_dilated(
        x, w, window_strides=(stride, stride),
        padding=[(padding, padding), (padding, padding)],
        dimension_numbers=("NCHW", "OIHW", "NCHW"))
    y = y + b.reshape(1, -1, 1, 1)
    mean = jnp.mean(y, axis=(0, 2, 3), keepdims=True)
    var = jnp.mean((y - mean) ** 2, axis=(0, 2, 3), keepdims=True)
    y = (y - mean) * jax.lax.rsqrt(var + BN_EPS)
    y = y * gamma.reshape(1, -1, 1, 1) + beta.reshape(1, -1, 1, 1)
    if apply_act:
        y = jnp.maximum(y, 0.0)
    return y


if __name__ == "__main__":
    # ConvBlock(in_channels=4, out_channels=8, kernel_size=3, stride=1, padding=1)
    N, Cin, H, W = 2, 4, 16, 16
    Cout, KH, KW = 8, 3, 3

    key = jax.random.PRNGKey(0)
    kx, kw, kb = jax.random.split(key, 3)

    x = jax.random.normal(kx, (N, Cin, H, W), dtype=jnp.float32)
    fan_in = Cin * KH * KW
    bound = 1.0 / (fan_in ** 0.5)
    conv_w = jax.random.uniform(kw, (Cout, Cin, KH, KW), jnp.float32, -bound, bound)
    conv_b = jax.random.uniform(kb, (Cout,), jnp.float32, -bound, bound)
    bn_gamma = jnp.ones((Cout,), jnp.float32)   # nn.BatchNorm2d default weight
    bn_beta = jnp.zeros((Cout,), jnp.float32)   # nn.BatchNorm2d default bias

    out = conv_block_forward(x, conv_w, conv_b, bn_gamma, bn_beta,
                             stride=1, padding=1, apply_act=True)
    out = jax.block_until_ready(out)
    assert out.shape == (N, Cout, H, W)

    ref = _reference(x, conv_w, conv_b, bn_gamma, bn_beta, 1, 1, True)
    err = float(jnp.max(jnp.abs(out - ref)))
    assert err < 5e-2, f"max abs err {err}"   # loose tol: bf16 MXU inputs vs f32 ref

    print("KERNEL_OK")
</pallas_src>

<mosaic_0001>
module attributes {stable_mosaic.version = 11 : i64} {
  func.func @_conv_stats_kernel(%arg0: i32, %arg1: memref<1x18x18x4xbf16, #tpu.memory_space<vmem>>, %arg2: memref<9x4x128xbf16, #tpu.memory_space<vmem>>, %arg3: memref<1x16x16x128xf32, #tpu.memory_space<vmem>>, %arg4: memref<1x1x128xf32, #tpu.memory_space<vmem>>, %arg5: memref<1x1x128xf32, #tpu.memory_space<vmem>>) attributes {dimension_semantics = [#tpu.dimension_semantics<parallel>], iteration_bounds = array<i64: 2>, scalar_prefetch = 0 : i64, scratch_operands = 0 : i64, tpu.core_type = #tpu.core_type<tc>, window_params = [{transform_indices = @transform_0, window_bounds = array<i64: 1, 18, 18, 4>}, {pipeline_mode = #tpu.pipeline_mode<synchronous>, transform_indices = @transform_1, window_bounds = array<i64: 9, 4, 128>}, {transform_indices = @transform_2, window_bounds = array<i64: 1, 16, 16, 128>}, {transform_indices = @transform_3, window_bounds = array<i64: 1, 1, 128>}, {transform_indices = @transform_4, window_bounds = array<i64: 1, 1, 128>}]} {
    %cst = arith.constant 0.000000e+00 : f32
    %0 = vector.broadcast %cst : f32 to vector<256x128xf32>
    %c0 = arith.constant 0 : index
    %c0_0 = arith.constant 0 : index
    %c0_1 = arith.constant 0 : index
    %c0_2 = arith.constant 0 : index
    %1 = vector.load %arg1[%c0, %c0_0, %c0_1, %c0_2] : memref<1x18x18x4xbf16, #tpu.memory_space<vmem>>, vector<1x16x16x4xbf16>
    %2 = vector.shape_cast %1 : vector<1x16x16x4xbf16> to vector<16x16x4xbf16>
    %3 = vector.shape_cast %2 : vector<16x16x4xbf16> to vector<256x4xbf16>
    %c0_3 = arith.constant 0 : index
    %c0_4 = arith.constant 0 : index
    %c0_5 = arith.constant 0 : index
    %4 = vector.load %arg2[%c0_3, %c0_4, %c0_5] : memref<9x4x128xbf16, #tpu.memory_space<vmem>>, vector<1x4x128xbf16>
    %5 = vector.shape_cast %4 : vector<1x4x128xbf16> to vector<4x128xbf16>
    %cst_6 = arith.constant dense<0.000000e+00> : vector<256x128xf32>
    %6 = tpu.matmul %3, %5, %cst_6 {dimension_numbers = #tpu.dot_dimension_numbers<[1], [0], [0], [1], [0, 0, 1, 1], [], []>} : vector<256x4xbf16>, vector<4x128xbf16>, vector<256x128xf32> -> vector<256x128xf32>
    %7 = arith.addf %0, %6 : vector<256x128xf32>
    %c0_7 = arith.constant 0 : index
    %c0_8 = arith.constant 0 : index
    %c1 = arith.constant 1 : index
    %c0_9 = arith.constant 0 : index
    %8 = vector.load %arg1[%c0_7, %c0_8, %c1, %c0_9] : memref<1x18x18x4xbf16, #tpu.memory_space<vmem>>, vector<1x16x16x4xbf16>
    %9 = vector.shape_cast %8 : vector<1x16x16x4xbf16> to vector<16x16x4xbf16>
    %10 = vector.shape_cast %9 : vector<16x16x4xbf16> to vector<256x4xbf16>
    %c1_10 = arith.constant 1 : index
    %c0_11 = arith.constant 0 : index
    %c0_12 = arith.constant 0 : index
    %11 = vector.load %arg2[%c1_10, %c0_11, %c0_12] : memref<9x4x128xbf16, #tpu.memory_space<vmem>>, vector<1x4x128xbf16>
    %12 = vector.shape_cast %11 : vector<1x4x128xbf16> to vector<4x128xbf16>
    %cst_13 = arith.constant dense<0.000000e+00> : vector<256x128xf32>
    %13 = tpu.matmul %10, %12, %cst_13 {dimension_numbers = #tpu.dot_dimension_numbers<[1], [0], [0], [1], [0, 0, 1, 1], [], []>} : vector<256x4xbf16>, vector<4x128xbf16>, vector<256x128xf32> -> vector<256x128xf32>
    %14 = arith.addf %7, %13 : vector<256x128xf32>
    %c0_14 = arith.constant 0 : index
    %c0_15 = arith.constant 0 : index
    %c2 = arith.constant 2 : index
    %c0_16 = arith.constant 0 : index
    %15 = vector.load %arg1[%c0_14, %c0_15, %c2, %c0_16] : memref<1x18x18x4xbf16, #tpu.memory_space<vmem>>, vector<1x16x16x4xbf16>
    %16 = vector.shape_cast %15 : vector<1x16x16x4xbf16> to vector<16x16x4xbf16>
    %17 = vector.shape_cast %16 : vector<16x16x4xbf16> to vector<256x4xbf16>
    %c2_17 = arith.constant 2 : index
    %c0_18 = arith.constant 0 : index
    %c0_19 = arith.constant 0 : index
    %18 = vector.load %arg2[%c2_17, %c0_18, %c0_19] : memref<9x4x128xbf16, #tpu.memory_space<vmem>>, vector<1x4x128xbf16>
    %19 = vector.shape_cast %18 : vector<1x4x128xbf16> to vector<4x128xbf16>
    %cst_20 = arith.constant dense<0.000000e+00> : vector<256x128xf32>
    %20 = tpu.matmul %17, %19, %cst_20 {dimension_numbers = #tpu.dot_dimension_numbers<[1], [0], [0], [1], [0, 0, 1, 1], [], []>} : vector<256x4xbf16>, vector<4x128xbf16>, vector<256x128xf32> -> vector<256x128xf32>
    %21 = arith.addf %14, %20 : vector<256x128xf32>
    %c0_21 = arith.constant 0 : index
    %c1_22 = arith.constant 1 : index
    %c0_23 = arith.constant 0 : index
    %c0_24 = arith.constant 0 : index
    %22 = vector.load %arg1[%c0_21, %c1_22, %c0_23, %c0_24] : memref<1x18x18x4xbf16, #tpu.memory_space<vmem>>, vector<1x16x16x4xbf16>
    %23 = vector.shape_cast %22 : vector<1x16x16x4xbf16> to vector<16x16x4xbf16>
    %24 = vector.shape_cast %23 : vector<16x16x4xbf16> to vector<256x4xbf16>
    %c3 = arith.constant 3 : index
    %c0_25 = arith.constant 0 : index
    %c0_26 = arith.constant 0 : index
    %25 = vector.load %arg2[%c3, %c0_25, %c0_26] : memref<9x4x128xbf16, #tpu.memory_space<vmem>>, vector<1x4x128xbf16>
    %26 = vector.shape_cast %25 : vector<1x4x128xbf16> to vector<4x128xbf16>
    %cst_27 = arith.constant dense<0.000000e+00> : vector<256x128xf32>
    %27 = tpu.matmul %24, %26, %cst_27 {dimension_numbers = #tpu.dot_dimension_numbers<[1], [0], [0], [1], [0, 0, 1, 1], [], []>} : vector<256x4xbf16>, vector<4x128xbf16>, vector<256x128xf32> -> vector<256x128xf32>
    %28 = arith.addf %21, %27 : vector<256x128xf32>
    %c0_28 = arith.constant 0 : index
    %c1_29 = arith.constant 1 : index
    %c1_30 = arith.constant 1 : index
    %c0_31 = arith.constant 0 : index
    %29 = vector.load %arg1[%c0_28, %c1_29, %c1_30, %c0_31] : memref<1x18x18x4xbf16, #tpu.memory_space<vmem>>, vector<1x16x16x4xbf16>
    %30 = vector.shape_cast %29 : vector<1x16x16x4xbf16> to vector<16x16x4xbf16>
    %31 = vector.shape_cast %30 : vector<16x16x4xbf16> to vector<256x4xbf16>
    %c4 = arith.constant 4 : index
    %c0_32 = arith.constant 0 : index
    %c0_33 = arith.constant 0 : index
    %32 = vector.load %arg2[%c4, %c0_32, %c0_33] : memref<9x4x128xbf16, #tpu.memory_space<vmem>>, vector<1x4x128xbf16>
    %33 = vector.shape_cast %32 : vector<1x4x128xbf16> to vector<4x128xbf16>
    %cst_34 = arith.constant dense<0.000000e+00> : vector<256x128xf32>
    %34 = tpu.matmul %31, %33, %cst_34 {dimension_numbers = #tpu.dot_dimension_numbers<[1], [0], [0], [1], [0, 0, 1, 1], [], []>} : vector<256x4xbf16>, vector<4x128xbf16>, vector<256x128xf32> -> vector<256x128xf32>
    %35 = arith.addf %28, %34 : vector<256x128xf32>
    %c0_35 = arith.constant 0 : index
    %c1_36 = arith.constant 1 : index
    %c2_37 = arith.constant 2 : index
    %c0_38 = arith.constant 0 : index
    %36 = vector.load %arg1[%c0_35, %c1_36, %c2_37, %c0_38] : memref<1x18x18x4xbf16, #tpu.memory_space<vmem>>, vector<1x16x16x4xbf16>
    %37 = vector.shape_cast %36 : vector<1x16x16x4xbf16> to vector<16x16x4xbf16>
    %38 = vector.shape_cast %37 : vector<16x16x4xbf16> to vector<256x4xbf16>
    %c5 = arith.constant 5 : index
    %c0_39 = arith.constant 0 : index
    %c0_40 = arith.constant 0 : index
    %39 = vector.load %arg2[%c5, %c0_39, %c0_40] : memref<9x4x128xbf16, #tpu.memory_space<vmem>>, vector<1x4x128xbf16>
    %40 = vector.shape_cast %39 : vector<1x4x128xbf16> to vector<4x128xbf16>
    %cst_41 = arith.constant dense<0.000000e+00> : vector<256x128xf32>
    %41 = tpu.matmul %38, %40, %cst_41 {dimension_numbers = #tpu.dot_dimension_numbers<[1], [0], [0], [1], [0, 0, 1, 1], [], []>} : vector<256x4xbf16>, vector<4x128xbf16>, vector<256x128xf32> -> vector<256x128xf32>
    %42 = arith.addf %35, %41 : vector<256x128xf32>
    %c0_42 = arith.constant 0 : index
    %c2_43 = arith.constant 2 : index
    %c0_44 = arith.constant 0 : index
    %c0_45 = arith.constant 0 : index
    %43 = vector.load %arg1[%c0_42, %c2_43, %c0_44, %c0_45] : memref<1x18x18x4xbf16, #tpu.memory_space<vmem>>, vector<1x16x16x4xbf16>
    %44 = vector.shape_cast %43 : vector<1x16x16x4xbf16> to vector<16x16x4xbf16>
    %45 = vector.shape_cast %44 : vector<16x16x4xbf16> to vector<256x4xbf16>
    %c6 = arith.constant 6 : index
    %c0_46 = arith.constant 0 : index
    %c0_47 = arith.constant 0 : index
    %46 = vector.load %arg2[%c6, %c0_46, %c0_47] : memref<9x4x128xbf16, #tpu.memory_space<vmem>>, vector<1x4x128xbf16>
    %47 = vector.shape_cast %46 : vector<1x4x128xbf16> to vector<4x128xbf16>
    %cst_48 = arith.constant dense<0.000000e+00> : vector<256x128xf32>
    %48 = tpu.matmul %45, %47, %cst_48 {dimension_numbers = #tpu.dot_dimension_numbers<[1], [0], [0], [1], [0, 0, 1, 1], [], []>} : vector<256x4xbf16>, vector<4x128xbf16>, vector<256x128xf32> -> vector<256x128xf32>
    %49 = arith.addf %42, %48 : vector<256x128xf32>
    %c0_49 = arith.constant 0 : index
    %c2_50 = arith.constant 2 : index
    %c1_51 = arith.constant 1 : index
    %c0_52 = arith.constant 0 : index
    %50 = vector.load %arg1[%c0_49, %c2_50, %c1_51, %c0_52] : memref<1x18x18x4xbf16, #tpu.memory_space<vmem>>, vector<1x16x16x4xbf16>
    %51 = vector.shape_cast %50 : vector<1x16x16x4xbf16> to vector<16x16x4xbf16>
    %52 = vector.shape_cast %51 : vector<16x16x4xbf16> to vector<256x4xbf16>
    %c7 = arith.constant 7 : index
    %c0_53 = arith.constant 0 : index
    %c0_54 = arith.constant 0 : index
    %53 = vector.load %arg2[%c7, %c0_53, %c0_54] : memref<9x4x128xbf16, #tpu.memory_space<vmem>>, vector<1x4x128xbf16>
    %54 = vector.shape_cast %53 : vector<1x4x128xbf16> to vector<4x128xbf16>
    %cst_55 = arith.constant dense<0.000000e+00> : vector<256x128xf32>
    %55 = tpu.matmul %52, %54, %cst_55 {dimension_numbers = #tpu.dot_dimension_numbers<[1], [0], [0], [1], [0, 0, 1, 1], [], []>} : vector<256x4xbf16>, vector<4x128xbf16>, vector<256x128xf32> -> vector<256x128xf32>
    %56 = arith.addf %49, %55 : vector<256x128xf32>
    %c0_56 = arith.constant 0 : index
    %c2_57 = arith.constant 2 : index
    %c2_58 = arith.constant 2 : index
    %c0_59 = arith.constant 0 : index
    %57 = vector.load %arg1[%c0_56, %c2_57, %c2_58, %c0_59] : memref<1x18x18x4xbf16, #tpu.memory_space<vmem>>, vector<1x16x16x4xbf16>
    %58 = vector.shape_cast %57 : vector<1x16x16x4xbf16> to vector<16x16x4xbf16>
    %59 = vector.shape_cast %58 : vector<16x16x4xbf16> to vector<256x4xbf16>
    %c8 = arith.constant 8 : index
    %c0_60 = arith.constant 0 : index
    %c0_61 = arith.constant 0 : index
    %60 = vector.load %arg2[%c8, %c0_60, %c0_61] : memref<9x4x128xbf16, #tpu.memory_space<vmem>>, vector<1x4x128xbf16>
    %61 = vector.shape_cast %60 : vector<1x4x128xbf16> to vector<4x128xbf16>
    %cst_62 = arith.constant dense<0.000000e+00> : vector<256x128xf32>
    %62 = tpu.matmul %59, %61, %cst_62 {dimension_numbers = #tpu.dot_dimension_numbers<[1], [0], [0], [1], [0, 0, 1, 1], [], []>} : vector<256x4xbf16>, vector<4x128xbf16>, vector<256x128xf32> -> vector<256x128xf32>
    %63 = arith.addf %56, %62 : vector<256x128xf32>
    %64 = vector.shape_cast %63 : vector<256x128xf32> to vector<1x16x16x128xf32>
    %c0_63 = arith.constant 0 : index
    %c0_64 = arith.constant 0 : index
    %c0_65 = arith.constant 0 : index
    %c0_66 = arith.constant 0 : index
    %65 = vector.load %arg3[%c0_63, %c0_64, %c0_65, %c0_66] : memref<1x16x16x128xf32, #tpu.memory_space<vmem>>, vector<1x16x16x128xf32>
    tpu.vector_store %arg3[%c0_63, %c0_64, %c0_65, %c0_66], %64 {strides = array<i32>} : memref<1x16x16x128xf32, #tpu.memory_space<vmem>>, vector<1x16x16x128xf32>,
    %cst_67 = arith.constant dense<0.000000e+00> : vector<128xf32>
    %66 = vector.multi_reduction <add>, %63, %cst_67 [0] : vector<256x128xf32> to vector<128xf32>
    %67 = vector.shape_cast %66 : vector<128xf32> to vector<1x128xf32>
    %68 = vector.shape_cast %67 : vector<1x128xf32> to vector<1x1x128xf32>
    %c0_68 = arith.constant 0 : index
    %c0_69 = arith.constant 0 : index
    %c0_70 = arith.constant 0 : index
    %69 = vector.load %arg4[%c0_68, %c0_69, %c0_70] : memref<1x1x128xf32, #tpu.memory_space<vmem>>, vector<1x1x128xf32>
    tpu.vector_store %arg4[%c0_68, %c0_69, %c0_70], %68 {strides = array<i32>} : memref<1x1x128xf32, #tpu.memory_space<vmem>>, vector<1x1x128xf32>,
    %70 = arith.mulf %63, %63 : vector<256x128xf32>
    %cst_71 = arith.constant dense<0.000000e+00> : vector<128xf32>
    %71 = vector.multi_reduction <add>, %70, %cst_71 [0] : vector<256x128xf32> to vector<128xf32>
    %72 = vector.shape_cast %71 : vector<128xf32> to vector<1x128xf32>
    %73 = vector.shape_cast %72 : vector<1x128xf32> to vector<1x1x128xf32>
    %c0_72 = arith.constant 0 : index
    %c0_73 = arith.constant 0 : index
    %c0_74 = arith.constant 0 : index
    %74 = vector.load %arg5[%c0_72, %c0_73, %c0_74] : memref<1x1x128xf32, #tpu.memory_space<vmem>>, vector<1x1x128xf32>
    tpu.vector_store %arg5[%c0_72, %c0_73, %c0_74], %73 {strides = array<i32>} : memref<1x1x128xf32, #tpu.memory_space<vmem>>, vector<1x1x128xf32>,
    return
  }
  func.func @transform_0(%arg0: i32) -> (i32, i32, i32, i32) {
    %c0_i32 = arith.constant 0 : i32
    %c0_i32_0 = arith.constant 0 : i32
    %c0_i32_1 = arith.constant 0 : i32
    %c0_i32_2 = arith.constant 0 : i32
    return %arg0, %c0_i32, %c0_i32_0, %c0_i32_1 : i32, i32, i32, i32
  }
  func.func @transform_1(%arg0: i32) -> (i32, i32, i32) {
    %c0_i32 = arith.constant 0 : i32
    %c0_i32_0 = arith.constant 0 : i32
    %c0_i32_1 = arith.constant 0 : i32
    %c0_i32_2 = arith.constant 0 : i32
    return %c0_i32, %c0_i32_0, %c0_i32_1 : i32, i32, i32
  }
  func.func @transform_2(%arg0: i32) -> (i32, i32, i32, i32) {
    %c0_i32 = arith.constant 0 : i32
    %c0_i32_0 = arith.constant 0 : i32
    %c0_i32_1 = arith.constant 0 : i32
    %c0_i32_2 = arith.constant 0 : i32
    return %arg0, %c0_i32, %c0_i32_0, %c0_i32_1 : i32, i32, i32, i32
  }
  func.func @transform_3(%arg0: i32) -> (i32, i32, i32) {
    %c0_i32 = arith.constant 0 : i32
    %c0_i32_0 = arith.constant 0 : i32
    %c0_i32_1 = arith.constant 0 : i32
    return %arg0, %c0_i32, %c0_i32_0 : i32, i32, i32
  }
  func.func @transform_4(%arg0: i32) -> (i32, i32, i32) {
    %c0_i32 = arith.constant 0 : i32
    %c0_i32_0 = arith.constant 0 : i32
    %c0_i32_1 = arith.constant 0 : i32
    return %arg0, %c0_i32, %c0_i32_0 : i32, i32, i32
  }
}

</mosaic_0001>

<llo_original>
// kernel: tpu_custom_call.1
$region0: #{tpu_custom_call.1}
  #allocation0 [shape = 'u32[]', space=smem, size = 0x4, offset = 0x4, fixed_abs, tag = 'smem constant byte address 0x4 - core index']
  #allocation1 [shape = 'u32[144,128]{1,0:T(1,128)}', space=vmem, size = 0x12000, scoped, tag = 'internal scratch']
  %s0 = inlined_call_operand.vmem [shape: bf16[2,18,18,4], index: 0, kind: input, shape index: {}]
  %s1 = inlined_call_operand.vmem [shape: bf16[9,4,128], index: 1, kind: input, shape index: {}]
  %s2 = inlined_call_operand.hbm [shape: f32[2,16,16,128], index: 2, kind: output, shape index: {0}]
  %s3 = inlined_call_operand.hbm [shape: f32[2,1,128], index: 3, kind: output, shape index: {1}]
  %s4 = inlined_call_operand.hbm [shape: f32[2,1,128], index: 4, kind: output, shape index: {2}]
  %5 = xla_tuple %s2, %s3, %s4
  %s6 = sld [smem:[#allocation0]]
  $region57: #{tpu_custom_call.1} parent=0
    _
  %s8 = ssub.s32 1, %s6
  %s9 = scalar_select 0, %s8, %s6
  $region1: #{tpu_custom_call.1} parent=0
    #allocation2 [shape = 'u8[262144]{0}', space=vmem, size = 0x40000, scoped, tag = 'output window, operand 0']
    #allocation3 [shape = 's32[2]{0}', space=sflag, size = 0x8, scoped, tag = 'scoped memory for tpu_custom_call.1']
    #allocation4 [shape = 'u8[1024]{0}', space=vmem, size = 0x400, scoped, tag = 'output window, operand 1']
    #allocation5 [shape = 's32[2]{0}', space=sflag, size = 0x8, scoped, tag = 'scoped memory for tpu_custom_call.1']
    #allocation6 [shape = 'u8[1024]{0}', space=vmem, size = 0x400, scoped, tag = 'output window, operand 2']
    %10 = vsyncpa [#allocation3], 0
    %s11 = scalar_lea.sflag [#allocation3], 1
    %12 = vsyncpa %s11, 0
    %13 = vsyncpa [#allocation5], 0
    %s14 = scalar_lea.sflag [#allocation5], 1
    %15 = vsyncpa %s14, 0
    loop: start=0, step=1, limit=4
    $region2: #{tpu_custom_call.1} parent=1 // loop_pre_header
      _
    $region3: #{tpu_custom_call.1} parent=1 // loop_header
      %s17 = sphi 0, %s21
      %p18 = scmp.ge.s32.totalorder %s17, 4
      %s27 = sphi 0, %s29
      %s30 = sphi 0, %s27
      %s31 = sphi 0, %s30
      %s47 = sphi 0, %s31
      %s51 = sphi 0, %s51
      %s53 = sphi 0, %s51
      %s54 = sphi 0, %s53
      %s68 = sphi 0, %s54
      %s74 = sphi 0, %s76
      %s77 = sphi 0, %s74
      %s78 = sphi 0, %s77
      %s94 = sphi 0, %s78
      %s100 = sphi 0, %s102
      %s103 = sphi 0, %s100
      %s104 = sphi 0, %s103
      %s120 = sphi 0, %s104
      %s126 = sphi 0, %s128
      %s129 = sphi 0, %s126
      %s130 = sphi 0, %s129
      %s146 = sphi 0, %s130
    $region4: #{tpu_custom_call.1} parent=1 // loop_header_branch
      %20 = sbr.rel (%p18) target = $region8
    $region5: #{tpu_custom_call.1} parent=1 // loop_body
      %s22 = ssub.s32 %s17, 1
      %s23 = ssub.s32 %s17, 2
      %s24 = sadd.s32 %s17, 1
      %s25 = ssub.s32 %s17, %s24
      %p26 = scmp.eq.s32.totalorder %s25, 0
      %s28 = sadd.s32 %s27, 1
      %s29 = scalar_select %p26, %s27, %s28
      %p32 = pneg %p26
      %p33 = scmp.eq.s32.totalorder %s17, 1
      %p34 = por %p32, %p33
      %p35 = scmp.ne.s32.totalorder %s27, %s30
      %p36 = scmp.eq.s32.totalorder %s17, 0
      %p37 = por %p35, %p36
      %p38 = scmp.ne.s32.totalorder %s27, %s30
      %p39 = scmp.eq.s32.totalorder %s22, 1
      %p40 = por %p38, %p39
      %p41 = scmp.ne.s32.totalorder %s30, %s31
      %p42 = scmp.eq.s32.totalorder %s22, 0
      %p43 = por %p41, %p42
      %p44 = scmp.ne.s32.totalorder %s30, %s31
      %p45 = scmp.eq.s32.totalorder %s23, 1
      %p46 = por %p44, %p45
      %p48 = scmp.ne.s32.totalorder %s31, %s47
      %p49 = scmp.eq.s32.totalorder %s23, 0
      %p50 = por %p48, %p49
      %s52 = sadd.s32 %s51, 1
      %p55 = scmp.eq.s32.totalorder %s17, 1
      %p56 = scmp.ne.s32.totalorder %s51, %s53
      %p57 = scmp.eq.s32.totalorder %s17, 0
      %p58 = por %p56, %p57
      %p59 = scmp.ne.s32.totalorder %s51, %s53
      %p60 = scmp.eq.s32.totalorder %s22, 1
      %p61 = por %p59, %p60
      %p62 = scmp.ne.s32.totalorder %s53, %s54
      %p63 = scmp.eq.s32.totalorder %s22, 0
      %p64 = por %p62, %p63
      %p65 = scmp.ne.s32.totalorder %s53, %s54
      %p66 = scmp.eq.s32.totalorder %s23, 1
      %p67 = por %p65, %p66
      %p69 = scmp.ne.s32.totalorder %s54, %s68
      %p70 = scmp.eq.s32.totalorder %s23, 0
      %p71 = por %p69, %p70
      %s72 = ssub.s32 %s17, %s24
      %p73 = scmp.eq.s32.totalorder %s72, 0
      %s75 = sadd.s32 %s74, 1
      %s76 = scalar_select %p73, %s74, %s75
      %p79 = pneg %p73
      %p80 = scmp.eq.s32.totalorder %s17, 1
      %p81 = por %p79, %p80
      %p82 = scmp.ne.s32.totalorder %s74, %s77
      %p83 = scmp.eq.s32.totalorder %s17, 0
      %p84 = por %p82, %p83
      %p85 = scmp.ne.s32.totalorder %s74, %s77
      %p86 = scmp.eq.s32.totalorder %s22, 1
      %p87 = por %p85, %p86
      %p88 = scmp.ne.s32.totalorder %s77, %s78
      %p89 = scmp.eq.s32.totalorder %s22, 0
      %p90 = por %p88, %p89
      %p91 = scmp.ne.s32.totalorder %s77, %s78
      %p92 = scmp.eq.s32.totalorder %s23, 1
      %p93 = por %p91, %p92
      %p95 = scmp.ne.s32.totalorder %s78, %s94
      %p96 = scmp.eq.s32.totalorder %s23, 0
      %p97 = por %p95, %p96
      %s98 = ssub.s32 %s17, %s24
      %p99 = scmp.eq.s32.totalorder %s98, 0
      %s101 = sadd.s32 %s100, 1
      %s102 = scalar_select %p99, %s100, %s101
      %p105 = pneg %p99
      %p106 = scmp.eq.s32.totalorder %s17, 1
      %p107 = por %p105, %p106
      %p108 = scmp.ne.s32.totalorder %s100, %s103
      %p109 = scmp.eq.s32.totalorder %s17, 0
      %p110 = por %p108, %p109
      %p111 = scmp.ne.s32.totalorder %s100, %s103
      %p112 = scmp.eq.s32.totalorder %s22, 1
      %p113 = por %p111, %p112
      %p114 = scmp.ne.s32.totalorder %s103, %s104
      %p115 = scmp.eq.s32.totalorder %s22, 0
      %p116 = por %p114, %p115
      %p117 = scmp.ne.s32.totalorder %s103, %s104
      %p118 = scmp.eq.s32.totalorder %s23, 1
      %p119 = por %p117, %p118
      %p121 = scmp.ne.s32.totalorder %s104, %s120
      %p122 = scmp.eq.s32.totalorder %s23, 0
      %p123 = por %p121, %p122
      %s124 = ssub.s32 %s17, %s24
      %p125 = scmp.eq.s32.totalorder %s124, 0
      %s127 = sadd.s32 %s126, 1
      %s128 = scalar_select %p125, %s126, %s127
      %p131 = pneg %p125
      %p132 = scmp.eq.s32.totalorder %s17, 1
      %p133 = por %p131, %p132
      %p134 = scmp.ne.s32.totalorder %s126, %s129
      %p135 = scmp.eq.s32.totalorder %s17, 0
      %p136 = por %p134, %p135
      %p137 = scmp.ne.s32.totalorder %s126, %s129
      %p138 = scmp.eq.s32.totalorder %s22, 1
      %p139 = por %p137, %p138
      %p140 = scmp.ne.s32.totalorder %s129, %s130
      %p141 = scmp.eq.s32.totalorder %s22, 0
      %p142 = por %p140, %p141
      %p143 = scmp.ne.s32.totalorder %s129, %s130
      %p144 = scmp.eq.s32.totalorder %s23, 1
      %p145 = por %p143, %p144
      %p147 = scmp.ne.s32.totalorder %s130, %s146
      %p148 = scmp.eq.s32.totalorder %s23, 0
      %p149 = por %p147, %p148
      %p150 = scmp.le.s32.totalorder 1, %s17
      %p151 = scmp.lt.s32.totalorder %s17, 3
      %p152 = pnand %p150, %p151
      %p153 = pneg %p152
      // Predicated region
      $region9: #{tpu_custom_call.1} parent=5 // pred_check
        _
      $region10: #{tpu_custom_call.1} parent=5 // pred_check_branch
        %155 = sbr.rel (%p152) target = $region12
      $region11: #{tpu_custom_call.1} parent=5 // pred_region
        %s156 = ssub.s32 %s17, 1
        // Predicated region
        $region13: #{tpu_custom_call.1} parent=11 // pred_check
          %p157 = pneg %p64
        $region14: #{tpu_custom_call.1} parent=11 // pred_check_branch
          %159 = sbr.rel (%p157) target = $region16
        $region15: #{tpu_custom_call.1} parent=11 // pred_region
          _
        $region16: #{tpu_custom_call.1} parent=11 // pred_fallthru
          _
      $region12: #{tpu_custom_call.1} parent=5 // pred_fallthru
        _
      %p160 = scmp.lt.s32.totalorder %s17, 2
      // Predicated region
      $region17: #{tpu_custom_call.1} parent=5 // pred_check
        %p161 = pneg %p160
      $region18: #{tpu_custom_call.1} parent=5 // pred_check_branch
        %163 = sbr.rel (%p161) target = $region20
      $region19: #{tpu_custom_call.1} parent=5 // pred_region
        // Predicated region
        $region21: #{tpu_custom_call.1} parent=19 // pred_check
          %p164 = pneg %p37
        $region22: #{tpu_custom_call.1} parent=19 // pred_check_branch
          %166 = sbr.rel (%p164) target = $region24
        $region23: #{tpu_custom_call.1} parent=19 // pred_region
          %p167 = scmp.lt.s32.totalorder %s17, 1
          %s168 = scalar_select %p167, %s17, 1
          %s169 = smul.addr %s168, 54
          %s170 = smul.addr %s169, 4
          %s171 = scalar_lea.vmem %s0, %s170
        $region24: #{tpu_custom_call.1} parent=19 // pred_fallthru
          _
      $region20: #{tpu_custom_call.1} parent=5 // pred_fallthru
        _
      %p172 = scmp.le.s32.totalorder 1, %s17
      %p173 = scmp.lt.s32.totalorder %s17, 3
      %p174 = pnand %p172, %p173
      %p175 = pneg %p174
      // Predicated region
      $region25: #{tpu_custom_call.1} parent=5 // pred_check
        _
      $region26: #{tpu_custom_call.1} parent=5 // pred_check_branch
        %177 = sbr.rel (%p174) target = $region28
      $region27: #{tpu_custom_call.1} parent=5 // pred_region
        %s178 = ssub.s32 %s17, 1
        %p179 = scmp.lt.s32.totalorder %s22, 1
        %s180 = scalar_select %p179, %s22, 1
        %s181 = smul.addr %s180, 54
        %s182 = smul.addr %s181, 4
        %s183 = scalar_lea.vmem %s0, %s182
        %p184 = pneg %p43
        %p185 = pneg %p40
        %p186 = pneg %p64
        %p187 = pneg %p61
        %p188 = pneg %p90
        %p189 = pneg %p87
        %s190 = sand.u32 %s77, 1
        %s191 = scalar_lea.sflag [#allocation3], %s190
        %s192 = sand.u32 %s77, 1
        %s193 = smul.addr %s192, 256
        %s194 = scalar_lea.vmem [#allocation2], %s193
        %p195 = pneg %p116
        %p196 = pneg %p113
        %s197 = sand.u32 %s22, 1
        %s198 = scalar_lea.sflag [#allocation5], %s197
        %s199 = sand.u32 %s103, 1
        %s200 = scalar_lea.vmem [#allocation4], %s199
        %p201 = pneg %p142
        %p202 = pneg %p139
        %s203 = sand.u32 %s22, 1
        %s204 = scalar_lea.sflag [#allocation5], %s203
        %s205 = sand.u32 %s129, 1
        %s206 = scalar_lea.vmem [#allocation6], %s205
        %p207 = scmp.lt.s32.totalorder %s22, 1
        %s208 = scalar_select %p207, %s22, 1
        %s209 = smul.addr %s208, 54
        %s210 = smul.addr %s209, 4
        %s211 = scalar_lea.vmem %s0, %s210
        %v213 = vld [vmem:[%s211] sm:$0xf]
        %v214 = vld [vmem:[%s211 + $0x4] sm:$0xf]
        %v215 = vld [vmem:[%s211 + $0xc] sm:$0xf]
        %v216 = vld [vmem:[%s211 + $0x10] sm:$0xf]
        %v217 = vld [vmem:[%s211 + $0x18] sm:$0xf]
        %v218 = vld [vmem:[%s211 + $0x1c] sm:$0xf]
        %v219 = vld [vmem:[%s211 + $0x24] sm:$0xf]
        %v220 = vld [vmem:[%s211 + $0x28] sm:$0xf]
        %v221 = vld [vmem:[%s211 + $0x30] sm:$0xf]
        %v222 = vld [vmem:[%s211 + $0x34] sm:$0xf]
        %v223 = vld [vmem:[%s211 + $0x3c] sm:$0xf]
        %v224 = vld [vmem:[%s211 + $0x40] sm:$0xf]
        %v225 = vld [vmem:[%s211 + $0x48] sm:$0xf]
        %v226 = vld [vmem:[%s211 + $0x4c] sm:$0xf]
        %v227 = vld [vmem:[%s211 + $0x54] sm:$0xf]
        %v228 = vld [vmem:[%s211 + $0x58] sm:$0xf]
        %v229 = vld [vmem:[%s211 + $0x60] sm:$0xf]
        %v230 = vld [vmem:[%s211 + $0x64] sm:$0xf]
        %v231 = vld [vmem:[%s211 + $0x6c] sm:$0xf]
        %v232 = vld [vmem:[%s211 + $0x70] sm:$0xf]
        %v233 = vld [vmem:[%s211 + $0x78] sm:$0xf]
        %v234 = vld [vmem:[%s211 + $0x7c] sm:$0xf]
        %v235 = vld [vmem:[%s211 + $0x84] sm:$0xf]
        %v236 = vld [vmem:[%s211 + $0x88] sm:$0xf]
        %v237 = vld [vmem:[%s211 + $0x90] sm:$0xf]
        %v238 = vld [vmem:[%s211 + $0x94] sm:$0xf]
        %v239 = vld [vmem:[%s211 + $0x9c] sm:$0xf]
        %v240 = vld [vmem:[%s211 + $0xa0] sm:$0xf]
        %v241 = vld [vmem:[%s211 + $0xa8] sm:$0xf]
        %v242 = vld [vmem:[%s211 + $0xac] sm:$0xf]
        %v243 = vld [vmem:[%s211 + $0xb4] sm:$0xf]
        %v244 = vld [vmem:[%s211 + $0xb8] sm:$0xf]
        %v245 = vld [vmem:[%s1] sm:$0x3]
        %v246 = vld [vmem:[%s211 + $0x8] sm:$0x1]
        %v247 = vld [vmem:[%s211 + $0x14] sm:$0x1]
        %v248 = vld [vmem:[%s211 + $0x20] sm:$0x1]
        %v249 = vld [vmem:[%s211 + $0x2c] sm:$0x1]
        %v250 = vld [vmem:[%s211 + $0x38] sm:$0x1]
        %v251 = vld [vmem:[%s211 + $0x44] sm:$0x1]
        %v252 = vld [vmem:[%s211 + $0x50] sm:$0x1]
        %v253 = vld [vmem:[%s211 + $0x5c] sm:$0x1]
        %v254 = vld [vmem:[%s211 + $0x68] sm:$0x1]
        %v255 = vld [vmem:[%s211 + $0x74] sm:$0x1]
        %v256 = vld [vmem:[%s211 + $0x80] sm:$0x1]
        %v257 = vld [vmem:[%s211 + $0x8c] sm:$0x1]
        %v258 = vld [vmem:[%s211 + $0x98] sm:$0x1]
        %v259 = vld [vmem:[%s211 + $0xa4] sm:$0x1]
        %v260 = vld [vmem:[%s211 + $0xb0] sm:$0x1]
        %v261 = vld [vmem:[%s211 + $0xbc] sm:$0x1]
        %vm262 = vsmask.f32 3328
        %vm263 = vsmask.f32 7440
        %vm264 = vmor %vm262, %vm263
        %v266 = vshrl.u32 %v213, 16
        %v268 = vrot.slane %v266, 4
        %v269 = vshll.u32 %v213, 16
        %v271 = vrot.slane %v269, 5
        %v272 = vor.u32 %v268, %v271
        %v273 = vrot.slane %v272, 4
        %v275 = vshll.u32 %v214, 16
        %v277 = vrot.slane %v275, 5
        %v278 = vsel %vm264, %v273, %v277
        %v279 = vshrl.u32 %v214, 16
        %v281 = vrot.slane %v279, 4
        %v282 = vor.u32 %v281, %v277
        %v283 = vrot.slane %v282, 4
        %v285 = vshll.u32 %v246, 16
        %v287 = vrot.slane %v285, 5
        %v288 = vsel %vm264, %v283, %v287
        %v290 = vshrl.u32 %v215, 16
        %v292 = vrot.slane %v290, 4
        %v293 = vshll.u32 %v215, 16
        %v295 = vrot.slane %v293, 5
        %v296 = vor.u32 %v292, %v295
        %v297 = vrot.slane %v296, 4
        %v299 = vshll.u32 %v216, 16
        %v301 = vrot.slane %v299, 5
        %v302 = vsel %vm264, %v297, %v301
        %v303 = vshrl.u32 %v216, 16
        %v305 = vrot.slane %v303, 4
        %v306 = vor.u32 %v305, %v301
        %v307 = vrot.slane %v306, 4
        %v309 = vshll.u32 %v247, 16
        %v311 = vrot.slane %v309, 5
        %v312 = vsel %vm264, %v307, %v311
        %v314 = vshrl.u32 %v217, 16
        %v316 = vrot.slane %v314, 4
        %v317 = vshll.u32 %v217, 16
        %v319 = vrot.slane %v317, 5
        %v320 = vor.u32 %v316, %v319
        %v321 = vrot.slane %v320, 4
        %v323 = vshll.u32 %v218, 16
        %v325 = vrot.slane %v323, 5
        %v326 = vsel %vm264, %v321, %v325
        %v327 = vshrl.u32 %v218, 16
        %v329 = vrot.slane %v327, 4
        %v330 = vor.u32 %v329, %v325
        %v331 = vrot.slane %v330, 4
        %v333 = vshll.u32 %v248, 16
        %v335 = vrot.slane %v333, 5
        %v336 = vsel %vm264, %v331, %v335
        %v338 = vshrl.u32 %v219, 16
        %v340 = vrot.slane %v338, 4
        %v341 = vshll.u32 %v219, 16
        %v343 = vrot.slane %v341, 5
        %v344 = vor.u32 %v340, %v343
        %v345 = vrot.slane %v344, 4
        %v347 = vshll.u32 %v220, 16
        %v349 = vrot.slane %v347, 5
        %v350 = vsel %vm264, %v345, %v349
        %v351 = vshrl.u32 %v220, 16
        %v353 = vrot.slane %v351, 4
        %v354 = vor.u32 %v353, %v349
        %v355 = vrot.slane %v354, 4
        %v357 = vshll.u32 %v249, 16
        %v359 = vrot.slane %v357, 5
        %v360 = vsel %vm264, %v355, %v359
        %v362 = vshrl.u32 %v221, 16
        %v364 = vrot.slane %v362, 4
        %v365 = vshll.u32 %v221, 16
        %v367 = vrot.slane %v365, 5
        %v368 = vor.u32 %v364, %v367
        %v369 = vrot.slane %v368, 4
        %v371 = vshll.u32 %v222, 16
        %v373 = vrot.slane %v371, 5
        %v374 = vsel %vm264, %v369, %v373
        %v375 = vshrl.u32 %v222, 16
        %v377 = vrot.slane %v375, 4
        %v378 = vor.u32 %v377, %v373
        %v379 = vrot.slane %v378, 4
        %v381 = vshll.u32 %v250, 16
        %v383 = vrot.slane %v381, 5
        %v384 = vsel %vm264, %v379, %v383
        %v386 = vshrl.u32 %v223, 16
        %v388 = vrot.slane %v386, 4
        %v389 = vshll.u32 %v223, 16
        %v391 = vrot.slane %v389, 5
        %v392 = vor.u32 %v388, %v391
        %v393 = vrot.slane %v392, 4
        %v395 = vshll.u32 %v224, 16
        %v397 = vrot.slane %v395, 5
        %v398 = vsel %vm264, %v393, %v397
        %v399 = vshrl.u32 %v224, 16
        %v401 = vrot.slane %v399, 4
        %v402 = vor.u32 %v401, %v397
        %v403 = vrot.slane %v402, 4
        %v405 = vshll.u32 %v251, 16
        %v407 = vrot.slane %v405, 5
        %v408 = vsel %vm264, %v403, %v407
        %v410 = vshrl.u32 %v225, 16
        %v412 = vrot.slane %v410, 4
        %v413 = vshll.u32 %v225, 16
        %v415 = vrot.slane %v413, 5
        %v416 = vor.u32 %v412, %v415
        %v417 = vrot.slane %v416, 4
        %v419 = vshll.u32 %v226, 16
        %v421 = vrot.slane %v419, 5
        %v422 = vsel %vm264, %v417, %v421
        %v423 = vshrl.u32 %v226, 16
        %v425 = vrot.slane %v423, 4
        %v426 = vor.u32 %v425, %v421
        %v427 = vrot.slane %v426, 4
        %v429 = vshll.u32 %v252, 16
        %v431 = vrot.slane %v429, 5
        %v432 = vsel %vm264, %v427, %v431
        %v434 = vshrl.u32 %v227, 16
        %v436 = vrot.slane %v434, 4
        %v437 = vshll.u32 %v227, 16
        %v439 = vrot.slane %v437, 5
        %v440 = vor.u32 %v436, %v439
        %v441 = vrot.slane %v440, 4
        %v443 = vshll.u32 %v228, 16
        %v445 = vrot.slane %v443, 5
        %v446 = vsel %vm264, %v441, %v445
        %v447 = vshrl.u32 %v228, 16
        %v449 = vrot.slane %v447, 4
        %v450 = vor.u32 %v449, %v445
        %v451 = vrot.slane %v450, 4
        %v453 = vshll.u32 %v253, 16
        %v455 = vrot.slane %v453, 5
        %v456 = vsel %vm264, %v451, %v455
        %v458 = vshrl.u32 %v229, 16
        %v460 = vrot.slane %v458, 4
        %v461 = vshll.u32 %v229, 16
        %v463 = vrot.slane %v461, 5
        %v464 = vor.u32 %v460, %v463
        %v465 = vrot.slane %v464, 4
        %v467 = vshll.u32 %v230, 16
        %v469 = vrot.slane %v467, 5
        %v470 = vsel %vm264, %v465, %v469
        %v471 = vshrl.u32 %v230, 16
        %v473 = vrot.slane %v471, 4
        %v474 = vor.u32 %v473, %v469
        %v475 = vrot.slane %v474, 4
        %v477 = vshll.u32 %v254, 16
        %v479 = vrot.slane %v477, 5
        %v480 = vsel %vm264, %v475, %v479
        %v482 = vshrl.u32 %v231, 16
        %v484 = vrot.slane %v482, 4
        %v485 = vshll.u32 %v231, 16
        %v487 = vrot.slane %v485, 5
        %v488 = vor.u32 %v484, %v487
        %v489 = vrot.slane %v488, 4
        %v491 = vshll.u32 %v232, 16
        %v493 = vrot.slane %v491, 5
        %v494 = vsel %vm264, %v489, %v493
        %v495 = vshrl.u32 %v232, 16
        %v497 = vrot.slane %v495, 4
        %v498 = vor.u32 %v497, %v493
        %v499 = vrot.slane %v498, 4
        %v501 = vshll.u32 %v255, 16
        %v503 = vrot.slane %v501, 5
        %v504 = vsel %vm264, %v499, %v503
        %v506 = vshrl.u32 %v233, 16
        %v508 = vrot.slane %v506, 4
        %v509 = vshll.u32 %v233, 16
        %v511 = vrot.slane %v509, 5
        %v512 = vor.u32 %v508, %v511
        %v513 = vrot.slane %v512, 4
        %v515 = vshll.u32 %v234, 16
        %v517 = vrot.slane %v515, 5
        %v518 = vsel %vm264, %v513, %v517
        %v519 = vshrl.u32 %v234, 16
        %v521 = vrot.slane %v519, 4
        %v522 = vor.u32 %v521, %v517
        %v523 = vrot.slane %v522, 4
        %v525 = vshll.u32 %v256, 16
        %v527 = vrot.slane %v525, 5
        %v528 = vsel %vm264, %v523, %v527
        %v530 = vshrl.u32 %v235, 16
        %v532 = vrot.slane %v530, 4
        %v533 = vshll.u32 %v235, 16
        %v535 = vrot.slane %v533, 5
        %v536 = vor.u32 %v532, %v535
        %v537 = vrot.slane %v536, 4
        %v539 = vshll.u32 %v236, 16
        %v541 = vrot.slane %v539, 5
        %v542 = vsel %vm264, %v537, %v541
        %v543 = vshrl.u32 %v236, 16
        %v545 = vrot.slane %v543, 4
        %v546 = vor.u32 %v545, %v541
        %v547 = vrot.slane %v546, 4
        %v549 = vshll.u32 %v257, 16
        %v551 = vrot.slane %v549, 5
        %v552 = vsel %vm264, %v547, %v551
        %v554 = vshrl.u32 %v237, 16
        %v556 = vrot.slane %v554, 4
        %v557 = vshll.u32 %v237, 16
        %v559 = vrot.slane %v557, 5
        %v560 = vor.u32 %v556, %v559
        %v561 = vrot.slane %v560, 4
        %v563 = vshll.u32 %v238, 16
        %v565 = vrot.slane %v563, 5
        %v566 = vsel %vm264, %v561, %v565
        %v567 = vshrl.u32 %v238, 16
        %v569 = vrot.slane %v567, 4
        %v570 = vor.u32 %v569, %v565
        %v571 = vrot.slane %v570, 4
        %v573 = vshll.u32 %v258, 16
        %v575 = vrot.slane %v573, 5
        %v576 = vsel %vm264, %v571, %v575
        %v578 = vshrl.u32 %v239, 16
        %v580 = vrot.slane %v578, 4
        %v581 = vshll.u32 %v239, 16
        %v583 = vrot.slane %v581, 5
        %v584 = vor.u32 %v580, %v583
        %v585 = vrot.slane %v584, 4
        %v587 = vshll.u32 %v240, 16
        %v589 = vrot.slane %v587, 5
        %v590 = vsel %vm264, %v585, %v589
        %v591 = vshrl.u32 %v240, 16
        %v593 = vrot.slane %v591, 4
        %v594 = vor.u32 %v593, %v589
        %v595 = vrot.slane %v594, 4
        %v597 = vshll.u32 %v259, 16
        %v599 = vrot.slane %v597, 5
        %v600 = vsel %vm264, %v595, %v599
        %v602 = vshrl.u32 %v241, 16
        %v604 = vrot.slane %v602, 4
        %v605 = vshll.u32 %v241, 16
        %v607 = vrot.slane %v605, 5
        %v608 = vor.u32 %v604, %v607
        %v609 = vrot.slane %v608, 4
        %v611 = vshll.u32 %v242, 16
        %v613 = vrot.slane %v611, 5
        %v614 = vsel %vm264, %v609, %v613
        %v615 = vshrl.u32 %v242, 16
        %v617 = vrot.slane %v615, 4
        %v618 = vor.u32 %v617, %v613
        %v619 = vrot.slane %v618, 4
        %v621 = vshll.u32 %v260, 16
        %v623 = vrot.slane %v621, 5
        %v624 = vsel %vm264, %v619, %v623
        %v626 = vshrl.u32 %v243, 16
        %v628 = vrot.slane %v626, 4
        %v629 = vshll.u32 %v243, 16
        %v631 = vrot.slane %v629, 5
        %v632 = vor.u32 %v628, %v631
        %v633 = vrot.slane %v632, 4
        %v635 = vshll.u32 %v244, 16
        %v637 = vrot.slane %v635, 5
        %v638 = vsel %vm264, %v633, %v637
        %v639 = vshrl.u32 %v244, 16
        %v641 = vrot.slane %v639, 4
        %v642 = vor.u32 %v641, %v637
        %v643 = vrot.slane %v642, 4
        %v645 = vshll.u32 %v261, 16
        %v647 = vrot.slane %v645, 5
        %v648 = vsel %vm264, %v643, %v647
        %s649 = scalar_lea.vmem %s1, 2
        %v650 = vld [vmem:[%s649] sm:$0x3]
        %v651 = vunpack.c.l.b16 %v278
        %v652 = vunpack.c.l.b16 %v288
        %v653 = vunpack.c.l.b16 %v302
        %v654 = vunpack.c.l.b16 %v312
        %v655 = vunpack.c.l.b16 %v326
        %v656 = vunpack.c.l.b16 %v336
        %v657 = vunpack.c.l.b16 %v350
        %v658 = vunpack.c.l.b16 %v360
        %v659 = vunpack.c.l.b16 %v374
        %v660 = vunpack.c.l.b16 %v384
        %v661 = vunpack.c.l.b16 %v398
        %v662 = vunpack.c.l.b16 %v408
        %v663 = vunpack.c.l.b16 %v422
        %v664 = vunpack.c.l.b16 %v432
        %v665 = vunpack.c.l.b16 %v446
        %v666 = vunpack.c.l.b16 %v456
        %v667 = vunpack.c.l.b16 %v470
        %v668 = vunpack.c.l.b16 %v480
        %v669 = vunpack.c.l.b16 %v494
        %v670 = vunpack.c.l.b16 %v504
        %v671 = vunpack.c.l.b16 %v518
        %v672 = vunpack.c.l.b16 %v528
        %v673 = vunpack.c.l.b16 %v542
        %v674 = vunpack.c.l.b16 %v552
        %v675 = vunpack.c.l.b16 %v566
        %v676 = vunpack.c.l.b16 %v576
        %v677 = vunpack.c.l.b16 %v590
        %v678 = vunpack.c.l.b16 %v600
        %v679 = vunpack.c.l.b16 %v614
        %v680 = vunpack.c.l.b16 %v624
        %v681 = vunpack.c.l.b16 %v638
        %v682 = vunpack.c.l.b16 %v648
        %v683 = vpack.c.b16 %v652, %v651
        %v684 = vpack.c.b16 %v654, %v653
        %v685 = vpack.c.b16 %v656, %v655
        %v686 = vpack.c.b16 %v658, %v657
        %v687 = vpack.c.b16 %v660, %v659
        %v688 = vpack.c.b16 %v662, %v661
        %v689 = vpack.c.b16 %v664, %v663
        %v690 = vpack.c.b16 %v666, %v665
        %v691 = vpack.c.b16 %v668, %v667
        %v692 = vpack.c.b16 %v670, %v669
        %v693 = vpack.c.b16 %v672, %v671
        %v694 = vpack.c.b16 %v674, %v673
        %v695 = vpack.c.b16 %v676, %v675
        %v696 = vpack.c.b16 %v678, %v677
        %v697 = vpack.c.b16 %v680, %v679
        %v698 = vpack.c.b16 %v682, %v681
        %vm699 = vcmask 31744
        %v701 = vsel %vm699, %v683, 0
        %v704 = vsel %vm699, %v684, 0
        %v707 = vsel %vm699, %v685, 0
        %v710 = vsel %vm699, %v686, 0
        %v713 = vsel %vm699, %v687, 0
        %v716 = vsel %vm699, %v688, 0
        %v719 = vsel %vm699, %v689, 0
        %v722 = vsel %vm699, %v690, 0
        %v725 = vsel %vm699, %v691, 0
        %v728 = vsel %vm699, %v692, 0
        %v731 = vsel %vm699, %v693, 0
        %v734 = vsel %vm699, %v694, 0
        %v737 = vsel %vm699, %v695, 0
        %v740 = vsel %vm699, %v696, 0
        %v743 = vsel %vm699, %v697, 0
        %v746 = vsel %vm699, %v698, 0
        %vm748 = vcmask 1041408
        %v750 = vsel %vm748, %v650, 0
        %752 = vmatprep.subr.bf16.mxu0 0
        %753 = vmatpush1.bf16.msra.mxu0 %v750
        %754 = vmatprep.subr.bf16.mxu0 0
        %755 = vmatpush1.bf16.msra.mxu0 0
        %756 = vmatprep.subr.bf16.mxu0 0
        %757 = vmatpush1.bf16.msra.mxu0 0
        %758 = vmatprep.subr.bf16.mxu0 0
        %759 = vmatpush1.bf16.msra.mxu0 0
        %760 = vmatprep.subr.bf16.mxu0 0
        %761 = vmatpush1.bf16.msra.mxu0 0
        %762 = vmatprep.subr.bf16.mxu0 0
        %763 = vmatpush1.bf16.msra.mxu0 0
        %764 = vmatprep.subr.bf16.mxu0 0
        %765 = vmatpush1.bf16.msra.mxu0 0
        %766 = vmatprep.subr.bf16.mxu0 0
        %767 = vmatpush1.bf16.msra.mxu0 0
        %768 = vmatprep.subr.bf16.mxu0 0
        %769 = vmatpush1.bf16.msra.mxu0 0
        %770 = vmatprep.subr.bf16.mxu0 0
        %771 = vmatpush1.bf16.msra.mxu0 0
        %772 = vmatprep.subr.bf16.mxu0 0
        %773 = vmatpush1.bf16.msra.mxu0 0
        %774 = vmatprep.subr.bf16.mxu0 0
        %775 = vmatpush1.bf16.msra.mxu0 0
        %776 = vmatprep.subr.bf16.mxu0 0
        %777 = vmatpush1.bf16.msra.mxu0 0
        %778 = vmatprep.subr.bf16.mxu0 0
        %779 = vmatpush1.bf16.msra.mxu0 0
        %780 = vmatprep.subr.bf16.mxu0 0
        %781 = vmatpush1.bf16.msra.mxu0 0
        %782 = vmatprep.subr.bf16.mxu0 0
        %783 = vmatpush1.bf16.msra.mxu0 0
        %784 = vmatprep.mubr.bf16.mxu0 0
        %785 = vmatmul.mubr.bf16.gmra.mrb[0].mxu0 %v701
        %v786 = vpop.f32.mrb[0].mxu0
        %v787 = vadd.f32 0.0, %v786
        %v788 = vpop.f32.mrb[0].mxu0
        %v789 = vpop.f32.mrb[0].mxu0
        %v790 = vadd.f32 0.0, %v789
        %v791 = vpop.f32.mrb[0].mxu0
        %792 = vmatprep.mubr.bf16.mxu0 0
        %793 = vmatmul.mubr.bf16.gmra.mrb[0].mxu0 %v704
        %v794 = vpop.f32.mrb[0].mxu0
        %v795 = vadd.f32 0.0, %v794
        %v796 = vpop.f32.mrb[0].mxu0
        %v797 = vpop.f32.mrb[0].mxu0
        %v798 = vadd.f32 0.0, %v797
        %v799 = vpop.f32.mrb[0].mxu0
        %800 = vmatprep.mubr.bf16.mxu0 0
        %801 = vmatmul.mubr.bf16.gmra.mrb[0].mxu0 %v707
        %v802 = vpop.f32.mrb[0].mxu0
        %v803 = vadd.f32 0.0, %v802
        %v804 = vpop.f32.mrb[0].mxu0
        %v805 = vpop.f32.mrb[0].mxu0
        %v806 = vadd.f32 0.0, %v805
        %v807 = vpop.f32.mrb[0].mxu0
        %808 = vmatprep.mubr.bf16.mxu0 0
        %809 = vmatmul.mubr.bf16.gmra.mrb[0].mxu0 %v710
        %v810 = vpop.f32.mrb[0].mxu0
        %v811 = vadd.f32 0.0, %v810
        %v812 = vpop.f32.mrb[0].mxu0
        %v813 = vpop.f32.mrb[0].mxu0
        %v814 = vadd.f32 0.0, %v813
        %v815 = vpop.f32.mrb[0].mxu0
        %816 = vmatprep.mubr.bf16.mxu0 0
        %817 = vmatmul.mubr.bf16.gmra.mrb[0].mxu0 %v713
        %v818 = vpop.f32.mrb[0].mxu0
        %v819 = vadd.f32 0.0, %v818
        %v820 = vpop.f32.mrb[0].mxu0
        %v821 = vpop.f32.mrb[0].mxu0
        %v822 = vadd.f32 0.0, %v821
        %v823 = vpop.f32.mrb[0].mxu0
        %824 = vmatprep.mubr.bf16.mxu0 0
        %825 = vmatmul.mubr.bf16.gmra.mrb[0].mxu0 %v716
        %v826 = vpop.f32.mrb[0].mxu0
        %v827 = vadd.f32 0.0, %v826
        %v828 = vpop.f32.mrb[0].mxu0
        %v829 = vpop.f32.mrb[0].mxu0
        %v830 = vadd.f32 0.0, %v829
        %v831 = vpop.f32.mrb[0].mxu0
        %832 = vmatprep.mubr.bf16.mxu0 0
        %833 = vmatmul.mubr.bf16.gmra.mrb[0].mxu0 %v719
        %v834 = vpop.f32.mrb[0].mxu0
        %v835 = vadd.f32 0.0, %v834
        %v836 = vpop.f32.mrb[0].mxu0
        %v837 = vpop.f32.mrb[0].mxu0
        %v838 = vadd.f32 0.0, %v837
        %v839 = vpop.f32.mrb[0].mxu0
        %840 = vmatprep.mubr.bf16.mxu0 0
        %841 = vmatmul.mubr.bf16.gmra.mrb[0].mxu0 %v722
        %v842 = vpop.f32.mrb[0].mxu0
        %v843 = vadd.f32 0.0, %v842
        %v844 = vpop.f32.mrb[0].mxu0
        %v845 = vpop.f32.mrb[0].mxu0
        %v846 = vadd.f32 0.0, %v845
        %v847 = vpop.f32.mrb[0].mxu0
        %848 = vmatprep.mubr.bf16.mxu0 0
        %849 = vmatmul.mubr.bf16.gmra.mrb[0].mxu0 %v725
        %v850 = vpop.f32.mrb[0].mxu0
        %v851 = vadd.f32 0.0, %v850
        %v852 = vpop.f32.mrb[0].mxu0
        %v853 = vpop.f32.mrb[0].mxu0
        %v854 = vadd.f32 0.0, %v853
        %v855 = vpop.f32.mrb[0].mxu0
        %856 = vmatprep.mubr.bf16.mxu0 0
        %857 = vmatmul.mubr.bf16.gmra.mrb[0].mxu0 %v728
        %v858 = vpop.f32.mrb[0].mxu0
        %v859 = vadd.f32 0.0, %v858
        %v860 = vpop.f32.mrb[0].mxu0
        %v861 = vpop.f32.mrb[0].mxu0
        %v862 = vadd.f32 0.0, %v861
        %v863 = vpop.f32.mrb[0].mxu0
        %864 = vmatprep.mubr.bf16.mxu0 0
        %865 = vmatmul.mubr.bf16.gmra.mrb[0].mxu0 %v731
        %v866 = vpop.f32.mrb[0].mxu0
        %v867 = vadd.f32 0.0, %v866
        %v868 = vpop.f32.mrb[0].mxu0
        %v869 = vpop.f32.mrb[0].mxu0
        %v870 = vadd.f32 0.0, %v869
        %v871 = vpop.f32.mrb[0].mxu0
        %872 = vmatprep.mubr.bf16.mxu0 0
        %873 = vmatmul.mubr.bf16.gmra.mrb[0].mxu0 %v734
        %v874 = vpop.f32.mrb[0].mxu0
        %v875 = vadd.f32 0.0, %v874
        %v876 = vpop.f32.mrb[0].mxu0
        %v877 = vpop.f32.mrb[0].mxu0
        %v878 = vadd.f32 0.0, %v877
        %v879 = vpop.f32.mrb[0].mxu0
        %880 = vmatprep.mubr.bf16.mxu0 0
        %881 = vmatmul.mubr.bf16.gmra.mrb[0].mxu0 %v737
        %v882 = vpop.f32.mrb[0].mxu0
        %v883 = vadd.f32 0.0, %v882
        %v884 = vpop.f32.mrb[0].mxu0
        %v885 = vpop.f32.mrb[0].mxu0
        %v886 = vadd.f32 0.0, %v885
        %v887 = vpop.f32.mrb[0].mxu0
        %888 = vmatprep.mubr.bf16.mxu0 0
        %889 = vmatmul.mubr.bf16.gmra.mrb[0].mxu0 %v740
        %v890 = vpop.f32.mrb[0].mxu0
        %v891 = vadd.f32 0.0, %v890
        %v892 = vpop.f32.mrb[0].mxu0
        %v893 = vpop.f32.mrb[0].mxu0
        %v894 = vadd.f32 0.0, %v893
        %v895 = vpop.f32.mrb[0].mxu0
        %896 = vmatprep.mubr.bf16.mxu0 0
        %897 = vmatmul.mubr.bf16.gmra.mrb[0].mxu0 %v743
        %v898 = vpop.f32.mrb[0].mxu0
        %v899 = vadd.f32 0.0, %v898
        %v900 = vpop.f32.mrb[0].mxu0
        %v901 = vpop.f32.mrb[0].mxu0
        %v902 = vadd.f32 0.0, %v901
        %v903 = vpop.f32.mrb[0].mxu0
        %904 = vmatprep.mubr.bf16.mxu0 0
        %905 = vmatmul.mubr.bf16.gmra.mrb[0].mxu0 %v746
        %v906 = vpop.f32.mrb[0].mxu0
        %v907 = vadd.f32 0.0, %v906
        %v908 = vpop.f32.mrb[0].mxu0
        %v909 = vpop.f32.mrb[0].mxu0
        %v910 = vadd.f32 0.0, %v909
        %v911 = vpop.f32.mrb[0].mxu0
        %912 = vdwg.mxu0
        %v945 = vunpack.c.l.b16 %v213
        %v946 = vunpack.c.l.b16 %v214
        %v947 = vunpack.c.l.b16 %v215
        %v948 = vunpack.c.l.b16 %v216
        %v949 = vunpack.c.l.b16 %v217
        %v950 = vunpack.c.l.b16 %v218
        %v951 = vunpack.c.l.b16 %v219
        %v952 = vunpack.c.l.b16 %v220
        %v953 = vunpack.c.l.b16 %v221
        %v954 = vunpack.c.l.b16 %v222
        %v955 = vunpack.c.l.b16 %v223
        %v956 = vunpack.c.l.b16 %v224
        %v957 = vunpack.c.l.b16 %v225
        %v958 = vunpack.c.l.b16 %v226
        %v959 = vunpack.c.l.b16 %v227
        %v960 = vunpack.c.l.b16 %v228
        %v961 = vunpack.c.l.b16 %v229
        %v962 = vunpack.c.l.b16 %v230
        %v963 = vunpack.c.l.b16 %v231
        %v964 = vunpack.c.l.b16 %v232
        %v965 = vunpack.c.l.b16 %v233
        %v966 = vunpack.c.l.b16 %v234
        %v967 = vunpack.c.l.b16 %v235
        %v968 = vunpack.c.l.b16 %v236
        %v969 = vunpack.c.l.b16 %v237
        %v970 = vunpack.c.l.b16 %v238
        %v971 = vunpack.c.l.b16 %v239
        %v972 = vunpack.c.l.b16 %v240
        %v973 = vunpack.c.l.b16 %v241
        %v974 = vunpack.c.l.b16 %v242
        %v975 = vunpack.c.l.b16 %v243
        %v976 = vunpack.c.l.b16 %v244
        %v977 = vpack.c.b16 %v946, %v945
        %v978 = vpack.c.b16 %v948, %v947
        %v979 = vpack.c.b16 %v950, %v949
        %v980 = vpack.c.b16 %v952, %v951
        %v981 = vpack.c.b16 %v954, %v953
        %v982 = vpack.c.b16 %v956, %v955
        %v983 = vpack.c.b16 %v958, %v957
        %v984 = vpack.c.b16 %v960, %v959
        %v985 = vpack.c.b16 %v962, %v961
        %v986 = vpack.c.b16 %v964, %v963
        %v987 = vpack.c.b16 %v966, %v965
        %v988 = vpack.c.b16 %v968, %v967
        %v989 = vpack.c.b16 %v970, %v969
        %v990 = vpack.c.b16 %v972, %v971
        %v991 = vpack.c.b16 %v974, %v973
        %v992 = vpack.c.b16 %v976, %v975
        %v994 = vsel %vm699, %v977, 0
        %v997 = vsel %vm699, %v978, 0
        %v1000 = vsel %vm699, %v979, 0
        %v1003 = vsel %vm699, %v980, 0
        %v1006 = vsel %vm699, %v981, 0
        %v1009 = vsel %vm699, %v982, 0
        %v1012 = vsel %vm699, %v983, 0
        %v1015 = vsel %vm699, %v984, 0
        %v1018 = vsel %vm699, %v985, 0
        %v1021 = vsel %vm699, %v986, 0
        %v1024 = vsel %vm699, %v987, 0
        %v1027 = vsel %vm699, %v988, 0
        %v1030 = vsel %vm699, %v989, 0
        %v1033 = vsel %vm699, %v990, 0
        %v1036 = vsel %vm699, %v991, 0
        %v1039 = vsel %vm699, %v992, 0
        %v1042 = vsel %vm748, %v245, 0
        %1044 = vmatprep.subr.bf16.mxu0 0
        %1045 = vmatpush1.bf16.msra.mxu0 %v1042
        %1046 = vmatprep.subr.bf16.mxu0 0
        %1047 = vmatpush1.bf16.msra.mxu0 0
        %1048 = vmatprep.subr.bf16.mxu0 0
        %1049 = vmatpush1.bf16.msra.mxu0 0
        %1050 = vmatprep.subr.bf16.mxu0 0
        %1051 = vmatpush1.bf16.msra.mxu0 0
        %1052 = vmatprep.subr.bf16.mxu0 0
        %1053 = vmatpush1.bf16.msra.mxu0 0
        %1054 = vmatprep.subr.bf16.mxu0 0
        %1055 = vmatpush1.bf16.msra.mxu0 0
        %1056 = vmatprep.subr.bf16.mxu0 0
        %1057 = vmatpush1.bf16.msra.mxu0 0
        %1058 = vmatprep.subr.bf16.mxu0 0
        %1059 = vmatpush1.bf16.msra.mxu0 0
        %1060 = vmatprep.subr.bf16.mxu0 0
        %1061 = vmatpush1.bf16.msra.mxu0 0
        %1062 = vmatprep.subr.bf16.mxu0 0
        %1063 = vmatpush1.bf16.msra.mxu0 0
        %1064 = vmatprep.subr.bf16.mxu0 0
        %1065 = vmatpush1.bf16.msra.mxu0 0
        %1066 = vmatprep.subr.bf16.mxu0 0
        %1067 = vmatpush1.bf16.msra.mxu0 0
        %1068 = vmatprep.subr.bf16.mxu0 0
        %1069 = vmatpush1.bf16.msra.mxu0 0
        %1070 = vmatprep.subr.bf16.mxu0 0
        %1071 = vmatpush1.bf16.msra.mxu0 0
        %1072 = vmatprep.subr.bf16.mxu0 0
        %1073 = vmatpush1.bf16.msra.mxu0 0
        %1074 = vmatprep.subr.bf16.mxu0 0
        %1075 = vmatpush1.bf16.msra.mxu0 0
        %1076 = vmatprep.mubr.bf16.mxu0 0
        %1077 = vmatmul.mubr.bf16.gmra.mrb[0].mxu0 %v994
        %v1078 = vpop.f32.mrb[0].mxu0
        %v1079 = vadd.f32 %v787, %v1078
        %v1080 = vpop.f32.mrb[0].mxu0
        %v1081 = vpop.f32.mrb[0].mxu0
        %v1082 = vadd.f32 %v790, %v1081
        %v1083 = vpop.f32.mrb[0].mxu0
        %1084 = vmatprep.mubr.bf16.mxu0 0
        %1085 = vmatmul.mubr.bf16.gmra.mrb[0].mxu0 %v997
        %v1086 = vpop.f32.mrb[0].mxu0
        %v1087 = vadd.f32 %v795, %v1086
        %v1088 = vpop.f32.mrb[0].mxu0
        %v1089 = vpop.f32.mrb[0].mxu0
        %v1090 = vadd.f32 %v798, %v1089
        %v1091 = vpop.f32.mrb[0].mxu0
        %1092 = vmatprep.mubr.bf16.mxu0 0
        %1093 = vmatmul.mubr.bf16.gmra.mrb[0].mxu0 %v1000
        %v1094 = vpop.f32.mrb[0].mxu0
        %v1095 = vadd.f32 %v803, %v1094
        %v1096 = vpop.f32.mrb[0].mxu0
        %v1097 = vpop.f32.mrb[0].mxu0
        %v1098 = vadd.f32 %v806, %v1097
        %v1099 = vpop.f32.mrb[0].mxu0
        %1100 = vmatprep.mubr.bf16.mxu0 0
        %1101 = vmatmul.mubr.bf16.gmra.mrb[0].mxu0 %v1003
        %v1102 = vpop.f32.mrb[0].mxu0
        %v1103 = vadd.f32 %v811, %v1102
        %v1104 = vpop.f32.mrb[0].mxu0
        %v1105 = vpop.f32.mrb[0].mxu0
        %v1106 = vadd.f32 %v814, %v1105
        %v1107 = vpop.f32.mrb[0].mxu0
        %1108 = vmatprep.mubr.bf16.mxu0 0
        %1109 = vmatmul.mubr.bf16.gmra.mrb[0].mxu0 %v1006
        %v1110 = vpop.f32.mrb[0].mxu0
        %v1111 = vadd.f32 %v819, %v1110
        %v1112 = vpop.f32.mrb[0].mxu0
        %v1113 = vpop.f32.mrb[0].mxu0
        %v1114 = vadd.f32 %v822, %v1113
        %v1115 = vpop.f32.mrb[0].mxu0
        %1116 = vmatprep.mubr.bf16.mxu0 0
        %1117 = vmatmul.mubr.bf16.gmra.mrb[0].mxu0 %v1009
        %v1118 = vpop.f32.mrb[0].mxu0
        %v1119 = vadd.f32 %v827, %v1118
        %v1120 = vpop.f32.mrb[0].mxu0
        %v1121 = vpop.f32.mrb[0].mxu0
        %v1122 = vadd.f32 %v830, %v1121
        %v1123 = vpop.f32.mrb[0].mxu0
        %1124 = vmatprep.mubr.bf16.mxu0 0
        %1125 = vmatmul.mubr.bf16.gmra.mrb[0].mxu0 %v1012
        %v1126 = vpop.f32.mrb[0].mxu0
        %v1127 = vadd.f32 %v835, %v1126
        %v1128 = vpop.f32.mrb[0].mxu0
        %v1129 = vpop.f32.mrb[0].mxu0
        %v1130 = vadd.f32 %v838, %v1129
        %v1131 = vpop.f32.mrb[0].mxu0
        %1132 = vmatprep.mubr.bf16.mxu0 0
        %1133 = vmatmul.mubr.bf16.gmra.mrb[0].mxu0 %v1015
        %v1134 = vpop.f32.mrb[0].mxu0
        %v1135 = vadd.f32 %v843, %v1134
        %v1136 = vpop.f32.mrb[0].mxu0
        %v1137 = vpop.f32.mrb[0].mxu0
        %v1138 = vadd.f32 %v846, %v1137
        %v1139 = vpop.f32.mrb[0].mxu0
        %1140 = vmatprep.mubr.bf16.mxu0 0
        %1141 = vmatmul.mubr.bf16.gmra.mrb[0].mxu0 %v1018
        %v1142 = vpop.f32.mrb[0].mxu0
        %v1143 = vadd.f32 %v851, %v1142
        %v1144 = vpop.f32.mrb[0].mxu0
        %v1145 = vpop.f32.mrb[0].mxu0
        %v1146 = vadd.f32 %v854, %v1145
        %v1147 = vpop.f32.mrb[0].mxu0
        %1148 = vmatprep.mubr.bf16.mxu0 0
        %1149 = vmatmul.mubr.bf16.gmra.mrb[0].mxu0 %v1021
        %v1150 = vpop.f32.mrb[0].mxu0
        %v1151 = vadd.f32 %v859, %v1150
        %v1152 = vpop.f32.mrb[0].mxu0
        %v1153 = vpop.f32.mrb[0].mxu0
        %v1154 = vadd.f32 %v862, %v1153
        %v1155 = vpop.f32.mrb[0].mxu0
        %1156 = vmatprep.mubr.bf16.mxu0 0
        %1157 = vmatmul.mubr.bf16.gmra.mrb[0].mxu0 %v1024
        %v1158 = vpop.f32.mrb[0].mxu0
        %v1159 = vadd.f32 %v867, %v1158
        %v1160 = vpop.f32.mrb[0].mxu0
        %v1161 = vpop.f32.mrb[0].mxu0
        %v1162 = vadd.f32 %v870, %v1161
        %v1163 = vpop.f32.mrb[0].mxu0
        %1164 = vmatprep.mubr.bf16.mxu0 0
        %1165 = vmatmul.mubr.bf16.gmra.mrb[0].mxu0 %v1027
        %v1166 = vpop.f32.mrb[0].mxu0
        %v1167 = vadd.f32 %v875, %v1166
        %v1168 = vpop.f32.mrb[0].mxu0
        %v1169 = vpop.f32.mrb[0].mxu0
        %v1170 = vadd.f32 %v878, %v1169
        %v1171 = vpop.f32.mrb[0].mxu0
        %1172 = vmatprep.mubr.bf16.mxu0 0
        %1173 = vmatmul.mubr.bf16.gmra.mrb[0].mxu0 %v1030
        %v1174 = vpop.f32.mrb[0].mxu0
        %v1175 = vadd.f32 %v883, %v1174
        %v1176 = vpop.f32.mrb[0].mxu0
        %v1177 = vpop.f32.mrb[0].mxu0
        %v1178 = vadd.f32 %v886, %v1177
        %v1179 = vpop.f32.mrb[0].mxu0
        %1180 = vmatprep.mubr.bf16.mxu0 0
        %1181 = vmatmul.mubr.bf16.gmra.mrb[0].mxu0 %v1033
        %v1182 = vpop.f32.mrb[0].mxu0
        %v1183 = vadd.f32 %v891, %v1182
        %v1184 = vpop.f32.mrb[0].mxu0
        %v1185 = vpop.f32.mrb[0].mxu0
        %v1186 = vadd.f32 %v894, %v1185
        %v1187 = vpop.f32.mrb[0].mxu0
        %1188 = vmatprep.mubr.bf16.mxu0 0
        %1189 = vmatmul.mubr.bf16.gmra.mrb[0].mxu0 %v1036
        %v1190 = vpop.f32.mrb[0].mxu0
        %v1191 = vadd.f32 %v899, %v1190
        %v1192 = vpop.f32.mrb[0].mxu0
        %v1193 = vpop.f32.mrb[0].mxu0
        %v1194 = vadd.f32 %v902, %v1193
        %v1195 = vpop.f32.mrb[0].mxu0
        %1196 = vmatprep.mubr.bf16.mxu0 0
        %1197 = vmatmul.mubr.bf16.gmra.mrb[0].mxu0 %v1039
        %v1198 = vpop.f32.mrb[0].mxu0
        %v1199 = vadd.f32 %v907, %v1198
        %v1200 = vpop.f32.mrb[0].mxu0
        %v1201 = vpop.f32.mrb[0].mxu0
        %v1202 = vadd.f32 %v910, %v1201
        %v1203 = vpop.f32.mrb[0].mxu0
        %1204 = vdwg.mxu0
        %v1205 = vld [vmem:[%s211] sm:$0xe]
        %v1206 = vld [vmem:[%s211 + $0xc] sm:$0xe]
        %v1207 = vld [vmem:[%s211 + $0x18] sm:$0xe]
        %v1208 = vld [vmem:[%s211 + $0x24] sm:$0xe]
        %v1209 = vld [vmem:[%s211 + $0x30] sm:$0xe]
        %v1210 = vld [vmem:[%s211 + $0x3c] sm:$0xe]
        %v1211 = vld [vmem:[%s211 + $0x48] sm:$0xe]
        %v1212 = vld [vmem:[%s211 + $0x54] sm:$0xe]
        %v1213 = vld [vmem:[%s211 + $0x60] sm:$0xe]
        %v1214 = vld [vmem:[%s211 + $0x6c] sm:$0xe]
        %v1215 = vld [vmem:[%s211 + $0x78] sm:$0xe]
        %v1216 = vld [vmem:[%s211 + $0x84] sm:$0xe]
        %v1217 = vld [vmem:[%s211 + $0x90] sm:$0xe]
        %v1218 = vld [vmem:[%s211 + $0x9c] sm:$0xe]
        %v1219 = vld [vmem:[%s211 + $0xa8] sm:$0xe]
        %v1220 = vld [vmem:[%s211 + $0xb4] sm:$0xe]
        %vm1253 = vcmask 1042432
        %vm1254 = vcmask 1046532
        %vm1255 = vmor %vm1253, %vm1254
        %v1256 = vrot.slane %v1205, 5
        %v1257 = vrot.slane %v1256, 4
        %v1258 = vrot.slane %v214, 5
        %v1259 = vsel %vm1255, %v1257, %v1258
        %v1260 = vrot.slane %v1258, 4
        %v1261 = vrot.slane %v246, 5
        %v1262 = vsel %vm1255, %v1260, %v1261
        %v1263 = vrot.slane %v1206, 5
        %v1264 = vrot.slane %v1263, 4
        %v1265 = vrot.slane %v216, 5
        %v1266 = vsel %vm1255, %v1264, %v1265
        %v1267 = vrot.slane %v1265, 4
        %v1268 = vrot.slane %v247, 5
        %v1269 = vsel %vm1255, %v1267, %v1268
        %v1270 = vrot.slane %v1207, 5
        %v1271 = vrot.slane %v1270, 4
        %v1272 = vrot.slane %v218, 5
        %v1273 = vsel %vm1255, %v1271, %v1272
        %v1274 = vrot.slane %v1272, 4
        %v1275 = vrot.slane %v248, 5
        %v1276 = vsel %vm1255, %v1274, %v1275
        %v1277 = vrot.slane %v1208, 5
        %v1278 = vrot.slane %v1277, 4
        %v1279 = vrot.slane %v220, 5
        %v1280 = vsel %vm1255, %v1278, %v1279
        %v1281 = vrot.slane %v1279, 4
        %v1282 = vrot.slane %v249, 5
        %v1283 = vsel %vm1255, %v1281, %v1282
        %v1284 = vrot.slane %v1209, 5
        %v1285 = vrot.slane %v1284, 4
        %v1286 = vrot.slane %v222, 5
        %v1287 = vsel %vm1255, %v1285, %v1286
        %v1288 = vrot.slane %v1286, 4
        %v1289 = vrot.slane %v250, 5
        %v1290 = vsel %vm1255, %v1288, %v1289
        %v1291 = vrot.slane %v1210, 5
        %v1292 = vrot.slane %v1291, 4
        %v1293 = vrot.slane %v224, 5
        %v1294 = vsel %vm1255, %v1292, %v1293
        %v1295 = vrot.slane %v1293, 4
        %v1296 = vrot.slane %v251, 5
        %v1297 = vsel %vm1255, %v1295, %v1296
        %v1298 = vrot.slane %v1211, 5
        %v1299 = vrot.slane %v1298, 4
        %v1300 = vrot.slane %v226, 5
        %v1301 = vsel %vm1255, %v1299, %v1300
        %v1302 = vrot.slane %v1300, 4
        %v1303 = vrot.slane %v252, 5
        %v1304 = vsel %vm1255, %v1302, %v1303
        %v1305 = vrot.slane %v1212, 5
        %v1306 = vrot.slane %v1305, 4
        %v1307 = vrot.slane %v228, 5
        %v1308 = vsel %vm1255, %v1306, %v1307
        %v1309 = vrot.slane %v1307, 4
        %v1310 = vrot.slane %v253, 5
        %v1311 = vsel %vm1255, %v1309, %v1310
        %v1312 = vrot.slane %v1213, 5
        %v1313 = vrot.slane %v1312, 4
        %v1314 = vrot.slane %v230, 5
        %v1315 = vsel %vm1255, %v1313, %v1314
        %v1316 = vrot.slane %v1314, 4
        %v1317 = vrot.slane %v254, 5
        %v1318 = vsel %vm1255, %v1316, %v1317
        %v1319 = vrot.slane %v1214, 5
        %v1320 = vrot.slane %v1319, 4
        %v1321 = vrot.slane %v232, 5
        %v1322 = vsel %vm1255, %v1320, %v1321
        %v1323 = vrot.slane %v1321, 4
        %v1324 = vrot.slane %v255, 5
        %v1325 = vsel %vm1255, %v1323, %v1324
        %v1326 = vrot.slane %v1215, 5
        %v1327 = vrot.slane %v1326, 4
        %v1328 = vrot.slane %v234, 5
        %v1329 = vsel %vm1255, %v1327, %v1328
        %v1330 = vrot.slane %v1328, 4
        %v1331 = vrot.slane %v256, 5
        %v1332 = vsel %vm1255, %v1330, %v1331
        %v1333 = vrot.slane %v1216, 5
        %v1334 = vrot.slane %v1333, 4
        %v1335 = vrot.slane %v236, 5
        %v1336 = vsel %vm1255, %v1334, %v1335
        %v1337 = vrot.slane %v1335, 4
        %v1338 = vrot.slane %v257, 5
        %v1339 = vsel %vm1255, %v1337, %v1338
        %v1340 = vrot.slane %v1217, 5
        %v1341 = vrot.slane %v1340, 4
        %v1342 = vrot.slane %v238, 5
        %v1343 = vsel %vm1255, %v1341, %v1342
        %v1344 = vrot.slane %v1342, 4
        %v1345 = vrot.slane %v258, 5
        %v1346 = vsel %vm1255, %v1344, %v1345
        %v1347 = vrot.slane %v1218, 5
        %v1348 = vrot.slane %v1347, 4
        %v1349 = vrot.slane %v240, 5
        %v1350 = vsel %vm1255, %v1348, %v1349
        %v1351 = vrot.slane %v1349, 4
        %v1352 = vrot.slane %v259, 5
        %v1353 = vsel %vm1255, %v1351, %v1352
        %v1354 = vrot.slane %v1219, 5
        %v1355 = vrot.slane %v1354, 4
        %v1356 = vrot.slane %v242, 5
        %v1357 = vsel %vm1255, %v1355, %v1356
        %v1358 = vrot.slane %v1356, 4
        %v1359 = vrot.slane %v260, 5
        %v1360 = vsel %vm1255, %v1358, %v1359
        %v1361 = vrot.slane %v1220, 5
        %v1362 = vrot.slane %v1361, 4
        %v1363 = vrot.slane %v244, 5
        %v1364 = vsel %vm1255, %v1362, %v1363
        %v1365 = vrot.slane %v1363, 4
        %v1366 = vrot.slane %v261, 5
        %v1367 = vsel %vm1255, %v1365, %v1366
        %s1368 = scalar_lea.vmem %s1, 4
        %v1369 = vld [vmem:[%s1368] sm:$0x3]
        %v1370 = vunpack.c.l.b16 %v1259
        %v1371 = vunpack.c.l.b16 %v1262
        %v1372 = vunpack.c.l.b16 %v1266
        %v1373 = vunpack.c.l.b16 %v1269
        %v1374 = vunpack.c.l.b16 %v1273
        %v1375 = vunpack.c.l.b16 %v1276
        %v1376 = vunpack.c.l.b16 %v1280
        %v1377 = vunpack.c.l.b16 %v1283
        %v1378 = vunpack.c.l.b16 %v1287
        %v1379 = vunpack.c.l.b16 %v1290
        %v1380 = vunpack.c.l.b16 %v1294
        %v1381 = vunpack.c.l.b16 %v1297
        %v1382 = vunpack.c.l.b16 %v1301
        %v1383 = vunpack.c.l.b16 %v1304
        %v1384 = vunpack.c.l.b16 %v1308
        %v1385 = vunpack.c.l.b16 %v1311
        %v1386 = vunpack.c.l.b16 %v1315
        %v1387 = vunpack.c.l.b16 %v1318
        %v1388 = vunpack.c.l.b16 %v1322
        %v1389 = vunpack.c.l.b16 %v1325
        %v1390 = vunpack.c.l.b16 %v1329
        %v1391 = vunpack.c.l.b16 %v1332
        %v1392 = vunpack.c.l.b16 %v1336
        %v1393 = vunpack.c.l.b16 %v1339
        %v1394 = vunpack.c.l.b16 %v1343
        %v1395 = vunpack.c.l.b16 %v1346
        %v1396 = vunpack.c.l.b16 %v1350
        %v1397 = vunpack.c.l.b16 %v1353
        %v1398 = vunpack.c.l.b16 %v1357
        %v1399 = vunpack.c.l.b16 %v1360
        %v1400 = vunpack.c.l.b16 %v1364
        %v1401 = vunpack.c.l.b16 %v1367
        %v1402 = vpack.c.b16 %v1371, %v1370
        %v1403 = vpack.c.b16 %v1373, %v1372
        %v1404 = vpack.c.b16 %v1375, %v1374
        %v1405 = vpack.c.b16 %v1377, %v1376
        %v1406 = vpack.c.b16 %v1379, %v1378
        %v1407 = vpack.c.b16 %v1381, %v1380
        %v1408 = vpack.c.b16 %v1383, %v1382
        %v1409 = vpack.c.b16 %v1385, %v1384
        %v1410 = vpack.c.b16 %v1387, %v1386
        %v1411 = vpack.c.b16 %v1389, %v1388
        %v1412 = vpack.c.b16 %v1391, %v1390
        %v1413 = vpack.c.b16 %v1393, %v1392
        %v1414 = vpack.c.b16 %v1395, %v1394
        %v1415 = vpack.c.b16 %v1397, %v1396
        %v1416 = vpack.c.b16 %v1399, %v1398
        %v1417 = vpack.c.b16 %v1401, %v1400
        %v1419 = vsel %vm699, %v1402, 0
        %v1422 = vsel %vm699, %v1403, 0
        %v1425 = vsel %vm699, %v1404, 0
        %v1428 = vsel %vm699, %v1405, 0
        %v1431 = vsel %vm699, %v1406, 0
        %v1434 = vsel %vm699, %v1407, 0
        %v1437 = vsel %vm699, %v1408, 0
        %v1440 = vsel %vm699, %v1409, 0
        %v1443 = vsel %vm699, %v1410, 0
        %v1446 = vsel %vm699, %v1411, 0
        %v1449 = vsel %vm699, %v1412, 0
        %v1452 = vsel %vm699, %v1413, 0
        %v1455 = vsel %vm699, %v1414, 0
        %v1458 = vsel %vm699, %v1415, 0
        %v1461 = vsel %vm699, %v1416, 0
        %v1464 = vsel %vm699, %v1417, 0
        %v1467 = vsel %vm748, %v1369, 0
        %1469 = vmatprep.subr.bf16.mxu0 0
        %1470 = vmatpush1.bf16.msra.mxu0 %v1467
        %1471 = vmatprep.subr.bf16.mxu0 0
        %1472 = vmatpush1.bf16.msra.mxu0 0
        %1473 = vmatprep.subr.bf16.mxu0 0
        %1474 = vmatpush1.bf16.msra.mxu0 0
        %1475 = vmatprep.subr.bf16.mxu0 0
        %1476 = vmatpush1.bf16.msra.mxu0 0
        %1477 = vmatprep.subr.bf16.mxu0 0
        %1478 = vmatpush1.bf16.msra.mxu0 0
        %1479 = vmatprep.subr.bf16.mxu0 0
        %1480 = vmatpush1.bf16.msra.mxu0 0
        %1481 = vmatprep.subr.bf16.mxu0 0
        %1482 = vmatpush1.bf16.msra.mxu0 0
        %1483 = vmatprep.subr.bf16.mxu0 0
        %1484 = vmatpush1.bf16.msra.mxu0 0
        %1485 = vmatprep.subr.bf16.mxu0 0
        %1486 = vmatpush1.bf16.msra.mxu0 0
        %1487 = vmatprep.subr.bf16.mxu0 0
        %1488 = vmatpush1.bf16.msra.mxu0 0
        %1489 = vmatprep.subr.bf16.mxu0 0
        %1490 = vmatpush1.bf16.msra.mxu0 0
        %1491 = vmatprep.subr.bf16.mxu0 0
        %1492 = vmatpush1.bf16.msra.mxu0 0
        %1493 = vmatprep.subr.bf16.mxu0 0
        %1494 = vmatpush1.bf16.msra.mxu0 0
        %1495 = vmatprep.subr.bf16.mxu0 0
        %1496 = vmatpush1.bf16.msra.mxu0 0
        %1497 = vmatprep.subr.bf16.mxu0 0
        %1498 = vmatpush1.bf16.msra.mxu0 0
        %1499 = vmatprep.subr.bf16.mxu0 0
        %1500 = vmatpush1.bf16.msra.mxu0 0
        %1501 = vmatprep.mubr.bf16.mxu0 0
        %1502 = vmatmul.mubr.bf16.gmra.mrb[0].mxu0 %v1419
        %v1503 = vpop.f32.mrb[0].mxu0
        %v1504 = vadd.f32 0.0, %v1503
        %v1505 = vpop.f32.mrb[0].mxu0
        %v1506 = vpop.f32.mrb[0].mxu0
        %v1507 = vadd.f32 0.0, %v1506
        %v1508 = vpop.f32.mrb[0].mxu0
        %1509 = vmatprep.mubr.bf16.mxu0 0
        %1510 = vmatmul.mubr.bf16.gmra.mrb[0].mxu0 %v1422
        %v1511 = vpop.f32.mrb[0].mxu0
        %v1512 = vadd.f32 0.0, %v1511
        %v1513 = vpop.f32.mrb[0].mxu0
        %v1514 = vpop.f32.mrb[0].mxu0
        %v1515 = vadd.f32 0.0, %v1514
        %v1516 = vpop.f32.mrb[0].mxu0
        %1517 = vmatprep.mubr.bf16.mxu0 0
        %1518 = vmatmul.mubr.bf16.gmra.mrb[0].mxu0 %v1425
        %v1519 = vpop.f32.mrb[0].mxu0
        %v1520 = vadd.f32 0.0, %v1519
        %v1521 = vpop.f32.mrb[0].mxu0
        %v1522 = vpop.f32.mrb[0].mxu0
        %v1523 = vadd.f32 0.0, %v1522
        %v1524 = vpop.f32.mrb[0].mxu0
        %1525 = vmatprep.mubr.bf16.mxu0 0
        %1526 = vmatmul.mubr.bf16.gmra.mrb[0].mxu0 %v1428
        %v1527 = vpop.f32.mrb[0].mxu0
        %v1528 = vadd.f32 0.0, %v1527
        %v1529 = vpop.f32.mrb[0].mxu0
        %v1530 = vpop.f32.mrb[0].mxu0
        %v1531 = vadd.f32 0.0, %v1530
        %v1532 = vpop.f32.mrb[0].mxu0
        %1533 = vmatprep.mubr.bf16.mxu0 0
        %1534 = vmatmul.mubr.bf16.gmra.mrb[0].mxu0 %v1431
        %v1535 = vpop.f32.mrb[0].mxu0
        %v1536 = vadd.f32 0.0, %v1535
        %v1537 = vpop.f32.mrb[0].mxu0
        %v1538 = vpop.f32.mrb[0].mxu0
        %v1539 = vadd.f32 0.0, %v1538
        %v1540 = vpop.f32.mrb[0].mxu0
        %1541 = vmatprep.mubr.bf16.mxu0 0
        %1542 = vmatmul.mubr.bf16.gmra.mrb[0].mxu0 %v1434
        %v1543 = vpop.f32.mrb[0].mxu0
        %v1544 = vadd.f32 0.0, %v1543
        %v1545 = vpop.f32.mrb[0].mxu0
        %v1546 = vpop.f32.mrb[0].mxu0
        %v1547 = vadd.f32 0.0, %v1546
        %v1548 = vpop.f32.mrb[0].mxu0
        %1549 = vmatprep.mubr.bf16.mxu0 0
        %1550 = vmatmul.mubr.bf16.gmra.mrb[0].mxu0 %v1437
        %v1551 = vpop.f32.mrb[0].mxu0
        %v1552 = vadd.f32 0.0, %v1551
        %v1553 = vpop.f32.mrb[0].mxu0
        %v1554 = vpop.f32.mrb[0].mxu0
        %v1555 = vadd.f32 0.0, %v1554
        %v1556 = vpop.f32.mrb[0].mxu0
        %1557 = vmatprep.mubr.bf16.mxu0 0
        %1558 = vmatmul.mubr.bf16.gmra.mrb[0].mxu0 %v1440
        %v1559 = vpop.f32.mrb[0].mxu0
        %v1560 = vadd.f32 0.0, %v1559
        %v1561 = vpop.f32.mrb[0].mxu0
        %v1562 = vpop.f32.mrb[0].mxu0
        %v1563 = vadd.f32 0.0, %v1562
        %v1564 = vpop.f32.mrb[0].mxu0
        %1565 = vmatprep.mubr.bf16.mxu0 0
        %1566 = vmatmul.mubr.bf16.gmra.mrb[0].mxu0 %v1443
        %v1567 = vpop.f32.mrb[0].mxu0
        %v1568 = vadd.f32 0.0, %v1567
        %v1569 = vpop.f32.mrb[0].mxu0
        %v1570 = vpop.f32.mrb[0].mxu0
        %v1571 = vadd.f32 0.0, %v1570
        %v1572 = vpop.f32.mrb[0].mxu0
        %1573 = vmatprep.mubr.bf16.mxu0 0
        %1574 = vmatmul.mubr.bf16.gmra.mrb[0].mxu0 %v1446
        %v1575 = vpop.f32.mrb[0].mxu0
        %v1576 = vadd.f32 0.0, %v1575
        %v1577 = vpop.f32.mrb[0].mxu0
        %v1578 = vpop.f32.mrb[0].mxu0
        %v1579 = vadd.f32 0.0, %v1578
        %v1580 = vpop.f32.mrb[0].mxu0
        %1581 = vmatprep.mubr.bf16.mxu0 0
        %1582 = vmatmul.mubr.bf16.gmra.mrb[0].mxu0 %v1449
        %v1583 = vpop.f32.mrb[0].mxu0
        %v1584 = vadd.f32 0.0, %v1583
        %v1585 = vpop.f32.mrb[0].mxu0
        %v1586 = vpop.f32.mrb[0].mxu0
        %v1587 = vadd.f32 0.0, %v1586
        %v1588 = vpop.f32.mrb[0].mxu0
        %1589 = vmatprep.mubr.bf16.mxu0 0
        %1590 = vmatmul.mubr.bf16.gmra.mrb[0].mxu0 %v1452
        %v1591 = vpop.f32.mrb[0].mxu0
        %v1592 = vadd.f32 0.0, %v1591
        %v1593 = vpop.f32.mrb[0].mxu0
        %v1594 = vpop.f32.mrb[0].mxu0
        %v1595 = vadd.f32 0.0, %v1594
        %v1596 = vpop.f32.mrb[0].mxu0
        %1597 = vmatprep.mubr.bf16.mxu0 0
        %1598 = vmatmul.mubr.bf16.gmra.mrb[0].mxu0 %v1455
        %v1599 = vpop.f32.mrb[0].mxu0
        %v1600 = vadd.f32 0.0, %v1599
        %v1601 = vpop.f32.mrb[0].mxu0
        %v1602 = vpop.f32.mrb[0].mxu0
        %v1603 = vadd.f32 0.0, %v1602
        %v1604 = vpop.f32.mrb[0].mxu0
        %1605 = vmatprep.mubr.bf16.mxu0 0
        %1606 = vmatmul.mubr.bf16.gmra.mrb[0].mxu0 %v1458
        %v1607 = vpop.f32.mrb[0].mxu0
        %v1608 = vadd.f32 0.0, %v1607
        %v1609 = vpop.f32.mrb[0].mxu0
        %v1610 = vpop.f32.mrb[0].mxu0
        %v1611 = vadd.f32 0.0, %v1610
        %v1612 = vpop.f32.mrb[0].mxu0
        %1613 = vmatprep.mubr.bf16.mxu0 0
        %1614 = vmatmul.mubr.bf16.gmra.mrb[0].mxu0 %v1461
        %v1615 = vpop.f32.mrb[0].mxu0
        %v1616 = vadd.f32 0.0, %v1615
        %v1617 = vpop.f32.mrb[0].mxu0
        %v1618 = vpop.f32.mrb[0].mxu0
        %v1619 = vadd.f32 0.0, %v1618
        %v1620 = vpop.f32.mrb[0].mxu0
        %1621 = vmatprep.mubr.bf16.mxu0 0
        %1622 = vmatmul.mubr.bf16.gmra.mrb[0].mxu0 %v1464
        %v1623 = vpop.f32.mrb[0].mxu0
        %v1624 = vadd.f32 0.0, %v1623
        %v1625 = vpop.f32.mrb[0].mxu0
        %v1626 = vpop.f32.mrb[0].mxu0
        %v1627 = vadd.f32 0.0, %v1626
        %v1628 = vpop.f32.mrb[0].mxu0
        %1629 = vdwg.mxu0
        %v1630 = vadd.f32 %v1079, %v1504
        %v1631 = vadd.f32 %v1082, %v1507
        %v1632 = vadd.f32 %v1087, %v1512
        %v1633 = vadd.f32 %v1090, %v1515
        %v1634 = vadd.f32 %v1095, %v1520
        %v1635 = vadd.f32 %v1098, %v1523
        %v1636 = vadd.f32 %v1103, %v1528
        %v1637 = vadd.f32 %v1106, %v1531
        %v1638 = vadd.f32 %v1111, %v1536
        %v1639 = vadd.f32 %v1114, %v1539
        %v1640 = vadd.f32 %v1119, %v1544
        %v1641 = vadd.f32 %v1122, %v1547
        %v1642 = vadd.f32 %v1127, %v1552
        %v1643 = vadd.f32 %v1130, %v1555
        %v1644 = vadd.f32 %v1135, %v1560
        %v1645 = vadd.f32 %v1138, %v1563
        %v1646 = vadd.f32 %v1143, %v1568
        %v1647 = vadd.f32 %v1146, %v1571
        %v1648 = vadd.f32 %v1151, %v1576
        %v1649 = vadd.f32 %v1154, %v1579
        %v1650 = vadd.f32 %v1159, %v1584
        %v1651 = vadd.f32 %v1162, %v1587
        %v1652 = vadd.f32 %v1167, %v1592
        %v1653 = vadd.f32 %v1170, %v1595
        %v1654 = vadd.f32 %v1175, %v1600
        %v1655 = vadd.f32 %v1178, %v1603
        %v1656 = vadd.f32 %v1183, %v1608
        %v1657 = vadd.f32 %v1186, %v1611
        %v1658 = vadd.f32 %v1191, %v1616
        %v1659 = vadd.f32 %v1194, %v1619
        %v1660 = vadd.f32 %v1199, %v1624
        %v1661 = vadd.f32 %v1202, %v1627
        %s1662 = scalar_lea.vmem %s211, 12
        %v1663 = vld [vmem:[%s1662] sm:$0xf]
        %v1664 = vld [vmem:[%s1662 + $0x4] sm:$0xf]
        %v1665 = vld [vmem:[%s1662 + $0xc] sm:$0xf]
        %v1666 = vld [vmem:[%s1662 + $0x10] sm:$0xf]
        %v1667 = vld [vmem:[%s1662 + $0x18] sm:$0xf]
        %v1668 = vld [vmem:[%s1662 + $0x1c] sm:$0xf]
        %v1669 = vld [vmem:[%s1662 + $0x24] sm:$0xf]
        %v1670 = vld [vmem:[%s1662 + $0x28] sm:$0xf]
        %v1671 = vld [vmem:[%s1662 + $0x30] sm:$0xf]
        %v1672 = vld [vmem:[%s1662 + $0x34] sm:$0xf]
        %v1673 = vld [vmem:[%s1662 + $0x3c] sm:$0xf]
        %v1674 = vld [vmem:[%s1662 + $0x40] sm:$0xf]
        %v1675 = vld [vmem:[%s1662 + $0x48] sm:$0xf]
        %v1676 = vld [vmem:[%s1662 + $0x4c] sm:$0xf]
        %v1677 = vld [vmem:[%s1662 + $0x54] sm:$0xf]
        %v1678 = vld [vmem:[%s1662 + $0x58] sm:$0xf]
        %v1679 = vld [vmem:[%s1662 + $0x60] sm:$0xf]
        %v1680 = vld [vmem:[%s1662 + $0x64] sm:$0xf]
        %v1681 = vld [vmem:[%s1662 + $0x6c] sm:$0xf]
        %v1682 = vld [vmem:[%s1662 + $0x70] sm:$0xf]
        %v1683 = vld [vmem:[%s1662 + $0x78] sm:$0xf]
        %v1684 = vld [vmem:[%s1662 + $0x7c] sm:$0xf]
        %v1685 = vld [vmem:[%s1662 + $0x84] sm:$0xf]
        %v1686 = vld [vmem:[%s1662 + $0x88] sm:$0xf]
        %v1687 = vld [vmem:[%s1662 + $0x90] sm:$0xf]
        %v1688 = vld [vmem:[%s1662 + $0x94] sm:$0xf]
        %v1689 = vld [vmem:[%s1662 + $0x9c] sm:$0xf]
        %v1690 = vld [vmem:[%s1662 + $0xa0] sm:$0xf]
        %v1691 = vld [vmem:[%s1662 + $0xa8] sm:$0xf]
        %v1692 = vld [vmem:[%s1662 + $0xac] sm:$0xf]
        %v1693 = vld [vmem:[%s1662 + $0xb4] sm:$0xf]
        %v1694 = vld [vmem:[%s1662 + $0xb8] sm:$0xf]
        %s1695 = scalar_lea.vmem %s1, 6
        %v1696 = vld [vmem:[%s1695] sm:$0x3]
        %v1729 = vunpack.c.l.b16 %v1663
        %v1730 = vunpack.c.l.b16 %v1664
        %v1731 = vunpack.c.l.b16 %v1665
        %v1732 = vunpack.c.l.b16 %v1666
        %v1733 = vunpack.c.l.b16 %v1667
        %v1734 = vunpack.c.l.b16 %v1668
        %v1735 = vunpack.c.l.b16 %v1669
        %v1736 = vunpack.c.l.b16 %v1670
        %v1737 = vunpack.c.l.b16 %v1671
        %v1738 = vunpack.c.l.b16 %v1672
        %v1739 = vunpack.c.l.b16 %v1673
        %v1740 = vunpack.c.l.b16 %v1674
        %v1741 = vunpack.c.l.b16 %v1675
        %v1742 = vunpack.c.l.b16 %v1676
        %v1743 = vunpack.c.l.b16 %v1677
        %v1744 = vunpack.c.l.b16 %v1678
        %v1745 = vunpack.c.l.b16 %v1679
        %v1746 = vunpack.c.l.b16 %v1680
        %v1747 = vunpack.c.l.b16 %v1681
        %v1748 = vunpack.c.l.b16 %v1682
        %v1749 = vunpack.c.l.b16 %v1683
        %v1750 = vunpack.c.l.b16 %v1684
        %v1751 = vunpack.c.l.b16 %v1685
        %v1752 = vunpack.c.l.b16 %v1686
        %v1753 = vunpack.c.l.b16 %v1687
        %v1754 = vunpack.c.l.b16 %v1688
        %v1755 = vunpack.c.l.b16 %v1689
        %v1756 = vunpack.c.l.b16 %v1690
        %v1757 = vunpack.c.l.b16 %v1691
        %v1758 = vunpack.c.l.b16 %v1692
        %v1759 = vunpack.c.l.b16 %v1693
        %v1760 = vunpack.c.l.b16 %v1694
        %v1761 = vpack.c.b16 %v1730, %v1729
        %v1762 = vpack.c.b16 %v1732, %v1731
        %v1763 = vpack.c.b16 %v1734, %v1733
        %v1764 = vpack.c.b16 %v1736, %v1735
        %v1765 = vpack.c.b16 %v1738, %v1737
        %v1766 = vpack.c.b16 %v1740, %v1739
        %v1767 = vpack.c.b16 %v1742, %v1741
        %v1768 = vpack.c.b16 %v1744, %v1743
        %v1769 = vpack.c.b16 %v1746, %v1745
        %v1770 = vpack.c.b16 %v1748, %v1747
        %v1771 = vpack.c.b16 %v1750, %v1749
        %v1772 = vpack.c.b16 %v1752, %v1751
        %v1773 = vpack.c.b16 %v1754, %v1753
        %v1774 = vpack.c.b16 %v1756, %v1755
        %v1775 = vpack.c.b16 %v1758, %v1757
        %v1776 = vpack.c.b16 %v1760, %v1759
        %v1778 = vsel %vm699, %v1761, 0
        %v1781 = vsel %vm699, %v1762, 0
        %v1784 = vsel %vm699, %v1763, 0
        %v1787 = vsel %vm699, %v1764, 0
        %v1790 = vsel %vm699, %v1765, 0
        %v1793 = vsel %vm699, %v1766, 0
        %v1796 = vsel %vm699, %v1767, 0
        %v1799 = vsel %vm699, %v1768, 0
        %v1802 = vsel %vm699, %v1769, 0
        %v1805 = vsel %vm699, %v1770, 0
        %v1808 = vsel %vm699, %v1771, 0
        %v1811 = vsel %vm699, %v1772, 0
        %v1814 = vsel %vm699, %v1773, 0
        %v1817 = vsel %vm699, %v1774, 0
        %v1820 = vsel %vm699, %v1775, 0
        %v1823 = vsel %vm699, %v1776, 0
        %v1826 = vsel %vm748, %v1696, 0
        %1828 = vmatprep.subr.bf16.mxu0 0
        %1829 = vmatpush1.bf16.msra.mxu0 %v1826
        %1830 = vmatprep.subr.bf16.mxu0 0
        %1831 = vmatpush1.bf16.msra.mxu0 0
        %1832 = vmatprep.subr.bf16.mxu0 0
        %1833 = vmatpush1.bf16.msra.mxu0 0
        %1834 = vmatprep.subr.bf16.mxu0 0
        %1835 = vmatpush1.bf16.msra.mxu0 0
        %1836 = vmatprep.subr.bf16.mxu0 0
        %1837 = vmatpush1.bf16.msra.mxu0 0
        %1838 = vmatprep.subr.bf16.mxu0 0
        %1839 = vmatpush1.bf16.msra.mxu0 0
        %1840 = vmatprep.subr.bf16.mxu0 0
        %1841 = vmatpush1.bf16.msra.mxu0 0
        %1842 = vmatprep.subr.bf16.mxu0 0
        %1843 = vmatpush1.bf16.msra.mxu0 0
        %1844 = vmatprep.subr.bf16.mxu0 0
        %1845 = vmatpush1.bf16.msra.mxu0 0
        %1846 = vmatprep.subr.bf16.mxu0 0
        %1847 = vmatpush1.bf16.msra.mxu0 0
        %1848 = vmatprep.subr.bf16.mxu0 0
        %1849 = vmatpush1.bf16.msra.mxu0 0
        %1850 = vmatprep.subr.bf16.mxu0 0
        %1851 = vmatpush1.bf16.msra.mxu0 0
        %1852 = vmatprep.subr.bf16.mxu0 0
        %1853 = vmatpush1.bf16.msra.mxu0 0
        %1854 = vmatprep.subr.bf16.mxu0 0
        %1855 = vmatpush1.bf16.msra.mxu0 0
        %1856 = vmatprep.subr.bf16.mxu0 0
        %1857 = vmatpush1.bf16.msra.mxu0 0
        %1858 = vmatprep.subr.bf16.mxu0 0
        %1859 = vmatpush1.bf16.msra.mxu0 0
        %1860 = vmatprep.mubr.bf16.mxu0 0
        %1861 = vmatmul.mubr.bf16.gmra.mrb[0].mxu0 %v1778
        %v1862 = vpop.f32.mrb[0].mxu0
        %v1863 = vadd.f32 0.0, %v1862
        %v1864 = vpop.f32.mrb[0].mxu0
        %v1865 = vpop.f32.mrb[0].mxu0
        %v1866 = vadd.f32 0.0, %v1865
        %v1867 = vpop.f32.mrb[0].mxu0
        %1868 = vmatprep.mubr.bf16.mxu0 0
        %1869 = vmatmul.mubr.bf16.gmra.mrb[0].mxu0 %v1781
        %v1870 = vpop.f32.mrb[0].mxu0
        %v1871 = vadd.f32 0.0, %v1870
        %v1872 = vpop.f32.mrb[0].mxu0
        %v1873 = vpop.f32.mrb[0].mxu0
        %v1874 = vadd.f32 0.0, %v1873
        %v1875 = vpop.f32.mrb[0].mxu0
        %1876 = vmatprep.mubr.bf16.mxu0 0
        %1877 = vmatmul.mubr.bf16.gmra.mrb[0].mxu0 %v1784
        %v1878 = vpop.f32.mrb[0].mxu0
        %v1879 = vadd.f32 0.0, %v1878
        %v1880 = vpop.f32.mrb[0].mxu0
        %v1881 = vpop.f32.mrb[0].mxu0
        %v1882 = vadd.f32 0.0, %v1881
        %v1883 = vpop.f32.mrb[0].mxu0
        %1884 = vmatprep.mubr.bf16.mxu0 0
        %1885 = vmatmul.mubr.bf16.gmra.mrb[0].mxu0 %v1787
        %v1886 = vpop.f32.mrb[0].mxu0
        %v1887 = vadd.f32 0.0, %v1886
        %v1888 = vpop.f32.mrb[0].mxu0
        %v1889 = vpop.f32.mrb[0].mxu0
        %v1890 = vadd.f32 0.0, %v1889
        %v1891 = vpop.f32.mrb[0].mxu0
        %1892 = vmatprep.mubr.bf16.mxu0 0
        %1893 = vmatmul.mubr.bf16.gmra.mrb[0].mxu0 %v1790
        %v1894 = vpop.f32.mrb[0].mxu0
        %v1895 = vadd.f32 0.0, %v1894
        %v1896 = vpop.f32.mrb[0].mxu0
        %v1897 = vpop.f32.mrb[0].mxu0
        %v1898 = vadd.f32 0.0, %v1897
        %v1899 = vpop.f32.mrb[0].mxu0
        %1900 = vmatprep.mubr.bf16.mxu0 0
        %1901 = vmatmul.mubr.bf16.gmra.mrb[0].mxu0 %v1793
        %v1902 = vpop.f32.mrb[0].mxu0
        %v1903 = vadd.f32 0.0, %v1902
        %v1904 = vpop.f32.mrb[0].mxu0
        %v1905 = vpop.f32.mrb[0].mxu0
        %v1906 = vadd.f32 0.0, %v1905
        %v1907 = vpop.f32.mrb[0].mxu0
        %1908 = vmatprep.mubr.bf16.mxu0 0
        %1909 = vmatmul.mubr.bf16.gmra.mrb[0].mxu0 %v1796
        %v1910 = vpop.f32.mrb[0].mxu0
        %v1911 = vadd.f32 0.0, %v1910
        %v1912 = vpop.f32.mrb[0].mxu0
        %v1913 = vpop.f32.mrb[0].mxu0
        %v1914 = vadd.f32 0.0, %v1913
        %v1915 = vpop.f32.mrb[0].mxu0
        %1916 = vmatprep.mubr.bf16.mxu0 0
        %1917 = vmatmul.mubr.bf16.gmra.mrb[0].mxu0 %v1799
        %v1918 = vpop.f32.mrb[0].mxu0
        %v1919 = vadd.f32 0.0, %v1918
        %v1920 = vpop.f32.mrb[0].mxu0
        %v1921 = vpop.f32.mrb[0].mxu0
        %v1922 = vadd.f32 0.0, %v1921
        %v1923 = vpop.f32.mrb[0].mxu0
        %1924 = vmatprep.mubr.bf16.mxu0 0
        %1925 = vmatmul.mubr.bf16.gmra.mrb[0].mxu0 %v1802
        %v1926 = vpop.f32.mrb[0].mxu0
        %v1927 = vadd.f32 0.0, %v1926
        %v1928 = vpop.f32.mrb[0].mxu0
        %v1929 = vpop.f32.mrb[0].mxu0
        %v1930 = vadd.f32 0.0, %v1929
        %v1931 = vpop.f32.mrb[0].mxu0
        %1932 = vmatprep.mubr.bf16.mxu0 0
        %1933 = vmatmul.mubr.bf16.gmra.mrb[0].mxu0 %v1805
        %v1934 = vpop.f32.mrb[0].mxu0
        %v1935 = vadd.f32 0.0, %v1934
        %v1936 = vpop.f32.mrb[0].mxu0
        %v1937 = vpop.f32.mrb[0].mxu0
        %v1938 = vadd.f32 0.0, %v1937
        %v1939 = vpop.f32.mrb[0].mxu0
        %1940 = vmatprep.mubr.bf16.mxu0 0
        %1941 = vmatmul.mubr.bf16.gmra.mrb[0].mxu0 %v1808
        %v1942 = vpop.f32.mrb[0].mxu0
        %v1943 = vadd.f32 0.0, %v1942
        %v1944 = vpop.f32.mrb[0].mxu0
        %v1945 = vpop.f32.mrb[0].mxu0
        %v1946 = vadd.f32 0.0, %v1945
        %v1947 = vpop.f32.mrb[0].mxu0
        %1948 = vmatprep.mubr.bf16.mxu0 0
        %1949 = vmatmul.mubr.bf16.gmra.mrb[0].mxu0 %v1811
        %v1950 = vpop.f32.mrb[0].mxu0
        %v1951 = vadd.f32 0.0, %v1950
        %v1952 = vpop.f32.mrb[0].mxu0
        %v1953 = vpop.f32.mrb[0].mxu0
        %v1954 = vadd.f32 0.0, %v1953
        %v1955 = vpop.f32.mrb[0].mxu0
        %1956 = vmatprep.mubr.bf16.mxu0 0
        %1957 = vmatmul.mubr.bf16.gmra.mrb[0].mxu0 %v1814
        %v1958 = vpop.f32.mrb[0].mxu0
        %v1959 = vadd.f32 0.0, %v1958
        %v1960 = vpop.f32.mrb[0].mxu0
        %v1961 = vpop.f32.mrb[0].mxu0
        %v1962 = vadd.f32 0.0, %v1961
        %v1963 = vpop.f32.mrb[0].mxu0
        %1964 = vmatprep.mubr.bf16.mxu0 0
        %1965 = vmatmul.mubr.bf16.gmra.mrb[0].mxu0 %v1817
        %v1966 = vpop.f32.mrb[0].mxu0
        %v1967 = vadd.f32 0.0, %v1966
        %v1968 = vpop.f32.mrb[0].mxu0
        %v1969 = vpop.f32.mrb[0].mxu0
        %v1970 = vadd.f32 0.0, %v1969
        %v1971 = vpop.f32.mrb[0].mxu0
        %1972 = vmatprep.mubr.bf16.mxu0 0
        %1973 = vmatmul.mubr.bf16.gmra.mrb[0].mxu0 %v1820
        %v1974 = vpop.f32.mrb[0].mxu0
        %v1975 = vadd.f32 0.0, %v1974
        %v1976 = vpop.f32.mrb[0].mxu0
        %v1977 = vpop.f32.mrb[0].mxu0
        %v1978 = vadd.f32 0.0, %v1977
        %v1979 = vpop.f32.mrb[0].mxu0
        %1980 = vmatprep.mubr.bf16.mxu0 0
        %1981 = vmatmul.mubr.bf16.gmra.mrb[0].mxu0 %v1823
        %v1982 = vpop.f32.mrb[0].mxu0
        %v1983 = vadd.f32 0.0, %v1982
        %v1984 = vpop.f32.mrb[0].mxu0
        %v1985 = vpop.f32.mrb[0].mxu0
        %v1986 = vadd.f32 0.0, %v1985
        %v1987 = vpop.f32.mrb[0].mxu0
        %1988 = vdwg.mxu0
        %v1989 = vadd.f32 %v1630, %v1863
        %v1990 = vadd.f32 %v1631, %v1866
        %v1991 = vadd.f32 %v1632, %v1871
        %v1992 = vadd.f32 %v1633, %v1874
        %v1993 = vadd.f32 %v1634, %v1879
        %v1994 = vadd.f32 %v1635, %v1882
        %v1995 = vadd.f32 %v1636, %v1887
        %v1996 = vadd.f32 %v1637, %v1890
        %v1997 = vadd.f32 %v1638, %v1895
        %v1998 = vadd.f32 %v1639, %v1898
        %v1999 = vadd.f32 %v1640, %v1903
        %v2000 = vadd.f32 %v1641, %v1906
        %v2001 = vadd.f32 %v1642, %v1911
        %v2002 = vadd.f32 %v1643, %v1914
        %v2003 = vadd.f32 %v1644, %v1919
        %v2004 = vadd.f32 %v1645, %v1922
        %v2005 = vadd.f32 %v1646, %v1927
        %v2006 = vadd.f32 %v1647, %v1930
        %v2007 = vadd.f32 %v1648, %v1935
        %v2008 = vadd.f32 %v1649, %v1938
        %v2009 = vadd.f32 %v1650, %v1943
        %v2010 = vadd.f32 %v1651, %v1946
        %v2011 = vadd.f32 %v1652, %v1951
        %v2012 = vadd.f32 %v1653, %v1954
        %v2013 = vadd.f32 %v1654, %v1959
        %v2014 = vadd.f32 %v1655, %v1962
        %v2015 = vadd.f32 %v1656, %v1967
        %v2016 = vadd.f32 %v1657, %v1970
        %v2017 = vadd.f32 %v1658, %v1975
        %v2018 = vadd.f32 %v1659, %v1978
        %v2019 = vadd.f32 %v1660, %v1983
        %v2020 = vadd.f32 %v1661, %v1986
        %v2021 = vld [vmem:[%s1662] sm:$0xf]
        %v2022 = vld [vmem:[%s1662 + $0x4] sm:$0xf]
        %v2023 = vld [vmem:[%s1662 + $0x8] sm:$0x1]
        %v2024 = vld [vmem:[%s1662 + $0xc] sm:$0xf]
        %v2025 = vld [vmem:[%s1662 + $0x10] sm:$0xf]
        %v2026 = vld [vmem:[%s1662 + $0x14] sm:$0x1]
        %v2027 = vld [vmem:[%s1662 + $0x18] sm:$0xf]
        %v2028 = vld [vmem:[%s1662 + $0x1c] sm:$0xf]
        %v2029 = vld [vmem:[%s1662 + $0x20] sm:$0x1]
        %v2030 = vld [vmem:[%s1662 + $0x24] sm:$0xf]
        %v2031 = vld [vmem:[%s1662 + $0x28] sm:$0xf]
        %v2032 = vld [vmem:[%s1662 + $0x2c] sm:$0x1]
        %v2033 = vld [vmem:[%s1662 + $0x30] sm:$0xf]
        %v2034 = vld [vmem:[%s1662 + $0x34] sm:$0xf]
        %v2035 = vld [vmem:[%s1662 + $0x38] sm:$0x1]
        %v2036 = vld [vmem:[%s1662 + $0x3c] sm:$0xf]
        %v2037 = vld [vmem:[%s1662 + $0x40] sm:$0xf]
        %v2038 = vld [vmem:[%s1662 + $0x44] sm:$0x1]
        %v2039 = vld [vmem:[%s1662 + $0x48] sm:$0xf]
        %v2040 = vld [vmem:[%s1662 + $0x4c] sm:$0xf]
        %v2041 = vld [vmem:[%s1662 + $0x50] sm:$0x1]
        %v2042 = vld [vmem:[%s1662 + $0x54] sm:$0xf]
        %v2043 = vld [vmem:[%s1662 + $0x58] sm:$0xf]
        %v2044 = vld [vmem:[%s1662 + $0x5c] sm:$0x1]
        %v2045 = vld [vmem:[%s1662 + $0x60] sm:$0xf]
        %v2046 = vld [vmem:[%s1662 + $0x64] sm:$0xf]
        %v2047 = vld [vmem:[%s1662 + $0x68] sm:$0x1]
        %v2048 = vld [vmem:[%s1662 + $0x6c] sm:$0xf]
        %v2049 = vld [vmem:[%s1662 + $0x70] sm:$0xf]
        %v2050 = vld [vmem:[%s1662 + $0x74] sm:$0x1]
        %v2051 = vld [vmem:[%s1662 + $0x78] sm:$0xf]
        %v2052 = vld [vmem:[%s1662 + $0x7c] sm:$0xf]
        %v2053 = vld [vmem:[%s1662 + $0x80] sm:$0x1]
        %v2054 = vld [vmem:[%s1662 + $0x84] sm:$0xf]
        %v2055 = vld [vmem:[%s1662 + $0x88] sm:$0xf]
        %v2056 = vld [vmem:[%s1662 + $0x8c] sm:$0x1]
        %v2057 = vld [vmem:[%s1662 + $0x90] sm:$0xf]
        %v2058 = vld [vmem:[%s1662 + $0x94] sm:$0xf]
        %v2059 = vld [vmem:[%s1662 + $0x98] sm:$0x1]
        %v2060 = vld [vmem:[%s1662 + $0x9c] sm:$0xf]
        %v2061 = vld [vmem:[%s1662 + $0xa0] sm:$0xf]
        %v2062 = vld [vmem:[%s1662 + $0xa4] sm:$0x1]
        %v2063 = vld [vmem:[%s1662 + $0xa8] sm:$0xf]
        %v2064 = vld [vmem:[%s1662 + $0xac] sm:$0xf]
        %v2065 = vld [vmem:[%s1662 + $0xb0] sm:$0x1]
        %v2066 = vld [vmem:[%s1662 + $0xb4] sm:$0xf]
        %v2067 = vld [vmem:[%s1662 + $0xb8] sm:$0xf]
        %v2068 = vld [vmem:[%s1662 + $0xbc] sm:$0x1]
        %v2070 = vshrl.u32 %v2021, 16
        %v2072 = vrot.slane %v2070, 4
        %v2073 = vshll.u32 %v2021, 16
        %v2075 = vrot.slane %v2073, 5
        %v2076 = vor.u32 %v2072, %v2075
        %v2077 = vrot.slane %v2076, 4
        %v2079 = vshll.u32 %v2022, 16
        %v2081 = vrot.slane %v2079, 5
        %v2082 = vsel %vm264, %v2077, %v2081
        %v2083 = vshrl.u32 %v2022, 16
        %v2085 = vrot.slane %v2083, 4
        %v2086 = vor.u32 %v2085, %v2081
        %v2087 = vrot.slane %v2086, 4
        %v2089 = vshll.u32 %v2023, 16
        %v2091 = vrot.slane %v2089, 5
        %v2092 = vsel %vm264, %v2087, %v2091
        %v2094 = vshrl.u32 %v2024, 16
        %v2096 = vrot.slane %v2094, 4
        %v2097 = vshll.u32 %v2024, 16
        %v2099 = vrot.slane %v2097, 5
        %v2100 = vor.u32 %v2096, %v2099
        %v2101 = vrot.slane %v2100, 4
        %v2103 = vshll.u32 %v2025, 16
        %v2105 = vrot.slane %v2103, 5
        %v2106 = vsel %vm264, %v2101, %v2105
        %v2107 = vshrl.u32 %v2025, 16
        %v2109 = vrot.slane %v2107, 4
        %v2110 = vor.u32 %v2109, %v2105
        %v2111 = vrot.slane %v2110, 4
        %v2113 = vshll.u32 %v2026, 16
        %v2115 = vrot.slane %v2113, 5
        %v2116 = vsel %vm264, %v2111, %v2115
        %v2118 = vshrl.u32 %v2027, 16
        %v2120 = vrot.slane %v2118, 4
        %v2121 = vshll.u32 %v2027, 16
        %v2123 = vrot.slane %v2121, 5
        %v2124 = vor.u32 %v2120, %v2123
        %v2125 = vrot.slane %v2124, 4
        %v2127 = vshll.u32 %v2028, 16
        %v2129 = vrot.slane %v2127, 5
        %v2130 = vsel %vm264, %v2125, %v2129
        %v2131 = vshrl.u32 %v2028, 16
        %v2133 = vrot.slane %v2131, 4
        %v2134 = vor.u32 %v2133, %v2129
        %v2135 = vrot.slane %v2134, 4
        %v2137 = vshll.u32 %v2029, 16
        %v2139 = vrot.slane %v2137, 5
        %v2140 = vsel %vm264, %v2135, %v2139
        %v2142 = vshrl.u32 %v2030, 16
        %v2144 = vrot.slane %v2142, 4
        %v2145 = vshll.u32 %v2030, 16
        %v2147 = vrot.slane %v2145, 5
        %v2148 = vor.u32 %v2144, %v2147
        %v2149 = vrot.slane %v2148, 4
        %v2151 = vshll.u32 %v2031, 16
        %v2153 = vrot.slane %v2151, 5
        %v2154 = vsel %vm264, %v2149, %v2153
        %v2155 = vshrl.u32 %v2031, 16
        %v2157 = vrot.slane %v2155, 4
        %v2158 = vor.u32 %v2157, %v2153
        %v2159 = vrot.slane %v2158, 4
        %v2161 = vshll.u32 %v2032, 16
        %v2163 = vrot.slane %v2161, 5
        %v2164 = vsel %vm264, %v2159, %v2163
        %v2166 = vshrl.u32 %v2033, 16
        %v2168 = vrot.slane %v2166, 4
        %v2169 = vshll.u32 %v2033, 16
        %v2171 = vrot.slane %v2169, 5
        %v2172 = vor.u32 %v2168, %v2171
        %v2173 = vrot.slane %v2172, 4
        %v2175 = vshll.u32 %v2034, 16
        %v2177 = vrot.slane %v2175, 5
        %v2178 = vsel %vm264, %v2173, %v2177
        %v2179 = vshrl.u32 %v2034, 16
        %v2181 = vrot.slane %v2179, 4
        %v2182 = vor.u32 %v2181, %v2177
        %v2183 = vrot.slane %v2182, 4
        %v2185 = vshll.u32 %v2035, 16
        %v2187 = vrot.slane %v2185, 5
        %v2188 = vsel %vm264, %v2183, %v2187
        %v2190 = vshrl.u32 %v2036, 16
        %v2192 = vrot.slane %v2190, 4
        %v2193 = vshll.u32 %v2036, 16
        %v2195 = vrot.slane %v2193, 5
        %v2196 = vor.u32 %v2192, %v2195
        %v2197 = vrot.slane %v2196, 4
        %v2199 = vshll.u32 %v2037, 16
        %v2201 = vrot.slane %v2199, 5
        %v2202 = vsel %vm264, %v2197, %v2201
        %v2203 = vshrl.u32 %v2037, 16
        %v2205 = vrot.slane %v2203, 4
        %v2206 = vor.u32 %v2205, %v2201
        %v2207 = vrot.slane %v2206, 4
        %v2209 = vshll.u32 %v2038, 16
        %v2211 = vrot.slane %v2209, 5
        %v2212 = vsel %vm264, %v2207, %v2211
        %v2214 = vshrl.u32 %v2039, 16
        %v2216 = vrot.slane %v2214, 4
        %v2217 = vshll.u32 %v2039, 16
        %v2219 = vrot.slane %v2217, 5
        %v2220 = vor.u32 %v2216, %v2219
        %v2221 = vrot.slane %v2220, 4
        %v2223 = vshll.u32 %v2040, 16
        %v2225 = vrot.slane %v2223, 5
        %v2226 = vsel %vm264, %v2221, %v2225
        %v2227 = vshrl.u32 %v2040, 16
        %v2229 = vrot.slane %v2227, 4
        %v2230 = vor.u32 %v2229, %v2225
        %v2231 = vrot.slane %v2230, 4
        %v2233 = vshll.u32 %v2041, 16
        %v2235 = vrot.slane %v2233, 5
        %v2236 = vsel %vm264, %v2231, %v2235
        %v2238 = vshrl.u32 %v2042, 16
        %v2240 = vrot.slane %v2238, 4
        %v2241 = vshll.u32 %v2042, 16
        %v2243 = vrot.slane %v2241, 5
        %v2244 = vor.u32 %v2240, %v2243
        %v2245 = vrot.slane %v2244, 4
        %v2247 = vshll.u32 %v2043, 16
        %v2249 = vrot.slane %v2247, 5
        %v2250 = vsel %vm264, %v2245, %v2249
        %v2251 = vshrl.u32 %v2043, 16
        %v2253 = vrot.slane %v2251, 4
        %v2254 = vor.u32 %v2253, %v2249
        %v2255 = vrot.slane %v2254, 4
        %v2257 = vshll.u32 %v2044, 16
        %v2259 = vrot.slane %v2257, 5
        %v2260 = vsel %vm264, %v2255, %v2259
        %v2262 = vshrl.u32 %v2045, 16
        %v2264 = vrot.slane %v2262, 4
        %v2265 = vshll.u32 %v2045, 16
        %v2267 = vrot.slane %v2265, 5
        %v2268 = vor.u32 %v2264, %v2267
        %v2269 = vrot.slane %v2268, 4
        %v2271 = vshll.u32 %v2046, 16
        %v2273 = vrot.slane %v2271, 5
        %v2274 = vsel %vm264, %v2269, %v2273
        %v2275 = vshrl.u32 %v2046, 16
        %v2277 = vrot.slane %v2275, 4
        %v2278 = vor.u32 %v2277, %v2273
        %v2279 = vrot.slane %v2278, 4
        %v2281 = vshll.u32 %v2047, 16
        %v2283 = vrot.slane %v2281, 5
        %v2284 = vsel %vm264, %v2279, %v2283
        %v2286 = vshrl.u32 %v2048, 16
        %v2288 = vrot.slane %v2286, 4
        %v2289 = vshll.u32 %v2048, 16
        %v2291 = vrot.slane %v2289, 5
        %v2292 = vor.u32 %v2288, %v2291
        %v2293 = vrot.slane %v2292, 4
        %v2295 = vshll.u32 %v2049, 16
        %v2297 = vrot.slane %v2295, 5
        %v2298 = vsel %vm264, %v2293, %v2297
        %v2299 = vshrl.u32 %v2049, 16
        %v2301 = vrot.slane %v2299, 4
        %v2302 = vor.u32 %v2301, %v2297
        %v2303 = vrot.slane %v2302, 4
        %v2305 = vshll.u32 %v2050, 16
        %v2307 = vrot.slane %v2305, 5
        %v2308 = vsel %vm264, %v2303, %v2307
        %v2310 = vshrl.u32 %v2051, 16
        %v2312 = vrot.slane %v2310, 4
        %v2313 = vshll.u32 %v2051, 16
        %v2315 = vrot.slane %v2313, 5
        %v2316 = vor.u32 %v2312, %v2315
        %v2317 = vrot.slane %v2316, 4
        %v2319 = vshll.u32 %v2052, 16
        %v2321 = vrot.slane %v2319, 5
        %v2322 = vsel %vm264, %v2317, %v2321
        %v2323 = vshrl.u32 %v2052, 16
        %v2325 = vrot.slane %v2323, 4
        %v2326 = vor.u32 %v2325, %v2321
        %v2327 = vrot.slane %v2326, 4
        %v2329 = vshll.u32 %v2053, 16
        %v2331 = vrot.slane %v2329, 5
        %v2332 = vsel %vm264, %v2327, %v2331
        %v2334 = vshrl.u32 %v2054, 16
        %v2336 = vrot.slane %v2334, 4
        %v2337 = vshll.u32 %v2054, 16
        %v2339 = vrot.slane %v2337, 5
        %v2340 = vor.u32 %v2336, %v2339
        %v2341 = vrot.slane %v2340, 4
        %v2343 = vshll.u32 %v2055, 16
        %v2345 = vrot.slane %v2343, 5
        %v2346 = vsel %vm264, %v2341, %v2345
        %v2347 = vshrl.u32 %v2055, 16
        %v2349 = vrot.slane %v2347, 4
        %v2350 = vor.u32 %v2349, %v2345
        %v2351 = vrot.slane %v2350, 4
        %v2353 = vshll.u32 %v2056, 16
        %v2355 = vrot.slane %v2353, 5
        %v2356 = vsel %vm264, %v2351, %v2355
        %v2358 = vshrl.u32 %v2057, 16
        %v2360 = vrot.slane %v2358, 4
        %v2361 = vshll.u32 %v2057, 16
        %v2363 = vrot.slane %v2361, 5
        %v2364 = vor.u32 %v2360, %v2363
        %v2365 = vrot.slane %v2364, 4
        %v2367 = vshll.u32 %v2058, 16
        %v2369 = vrot.slane %v2367, 5
        %v2370 = vsel %vm264, %v2365, %v2369
        %v2371 = vshrl.u32 %v2058, 16
        %v2373 = vrot.slane %v2371, 4
        %v2374 = vor.u32 %v2373, %v2369
        %v2375 = vrot.slane %v2374, 4
        %v2377 = vshll.u32 %v2059, 16
        %v2379 = vrot.slane %v2377, 5
        %v2380 = vsel %vm264, %v2375, %v2379
        %v2382 = vshrl.u32 %v2060, 16
        %v2384 = vrot.slane %v2382, 4
        %v2385 = vshll.u32 %v2060, 16
        %v2387 = vrot.slane %v2385, 5
        %v2388 = vor.u32 %v2384, %v2387
        %v2389 = vrot.slane %v2388, 4
        %v2391 = vshll.u32 %v2061, 16
        %v2393 = vrot.slane %v2391, 5
        %v2394 = vsel %vm264, %v2389, %v2393
        %v2395 = vshrl.u32 %v2061, 16
        %v2397 = vrot.slane %v2395, 4
        %v2398 = vor.u32 %v2397, %v2393
        %v2399 = vrot.slane %v2398, 4
        %v2401 = vshll.u32 %v2062, 16
        %v2403 = vrot.slane %v2401, 5
        %v2404 = vsel %vm264, %v2399, %v2403
        %v2406 = vshrl.u32 %v2063, 16
        %v2408 = vrot.slane %v2406, 4
        %v2409 = vshll.u32 %v2063, 16
        %v2411 = vrot.slane %v2409, 5
        %v2412 = vor.u32 %v2408, %v2411
        %v2413 = vrot.slane %v2412, 4
        %v2415 = vshll.u32 %v2064, 16
        %v2417 = vrot.slane %v2415, 5
        %v2418 = vsel %vm264, %v2413, %v2417
        %v2419 = vshrl.u32 %v2064, 16
        %v2421 = vrot.slane %v2419, 4
        %v2422 = vor.u32 %v2421, %v2417
        %v2423 = vrot.slane %v2422, 4
        %v2425 = vshll.u32 %v2065, 16
        %v2427 = vrot.slane %v2425, 5
        %v2428 = vsel %vm264, %v2423, %v2427
        %v2430 = vshrl.u32 %v2066, 16
        %v2432 = vrot.slane %v2430, 4
        %v2433 = vshll.u32 %v2066, 16
        %v2435 = vrot.slane %v2433, 5
        %v2436 = vor.u32 %v2432, %v2435
        %v2437 = vrot.slane %v2436, 4
        %v2439 = vshll.u32 %v2067, 16
        %v2441 = vrot.slane %v2439, 5
        %v2442 = vsel %vm264, %v2437, %v2441
        %v2443 = vshrl.u32 %v2067, 16
        %v2445 = vrot.slane %v2443, 4
        %v2446 = vor.u32 %v2445, %v2441
        %v2447 = vrot.slane %v2446, 4
        %v2449 = vshll.u32 %v2068, 16
        %v2451 = vrot.slane %v2449, 5
        %v2452 = vsel %vm264, %v2447, %v2451
        %s2453 = scalar_lea.vmem %s1, 8
        %v2454 = vld [vmem:[%s2453] sm:$0x3]
        %v2455 = vunpack.c.l.b16 %v2082
        %v2456 = vunpack.c.l.b16 %v2092
        %v2457 = vunpack.c.l.b16 %v2106
        %v2458 = vunpack.c.l.b16 %v2116
        %v2459 = vunpack.c.l.b16 %v2130
        %v2460 = vunpack.c.l.b16 %v2140
        %v2461 = vunpack.c.l.b16 %v2154
        %v2462 = vunpack.c.l.b16 %v2164
        %v2463 = vunpack.c.l.b16 %v2178
        %v2464 = vunpack.c.l.b16 %v2188
        %v2465 = vunpack.c.l.b16 %v2202
        %v2466 = vunpack.c.l.b16 %v2212
        %v2467 = vunpack.c.l.b16 %v2226
        %v2468 = vunpack.c.l.b16 %v2236
        %v2469 = vunpack.c.l.b16 %v2250
        %v2470 = vunpack.c.l.b16 %v2260
        %v2471 = vunpack.c.l.b16 %v2274
        %v2472 = vunpack.c.l.b16 %v2284
        %v2473 = vunpack.c.l.b16 %v2298
        %v2474 = vunpack.c.l.b16 %v2308
        %v2475 = vunpack.c.l.b16 %v2322
        %v2476 = vunpack.c.l.b16 %v2332
        %v2477 = vunpack.c.l.b16 %v2346
        %v2478 = vunpack.c.l.b16 %v2356
        %v2479 = vunpack.c.l.b16 %v2370
        %v2480 = vunpack.c.l.b16 %v2380
        %v2481 = vunpack.c.l.b16 %v2394
        %v2482 = vunpack.c.l.b16 %v2404
        %v2483 = vunpack.c.l.b16 %v2418
        %v2484 = vunpack.c.l.b16 %v2428
        %v2485 = vunpack.c.l.b16 %v2442
        %v2486 = vunpack.c.l.b16 %v2452
        %v2487 = vpack.c.b16 %v2456, %v2455
        %v2488 = vpack.c.b16 %v2458, %v2457
        %v2489 = vpack.c.b16 %v2460, %v2459
        %v2490 = vpack.c.b16 %v2462, %v2461
        %v2491 = vpack.c.b16 %v2464, %v2463
        %v2492 = vpack.c.b16 %v2466, %v2465
        %v2493 = vpack.c.b16 %v2468, %v2467
        %v2494 = vpack.c.b16 %v2470, %v2469
        %v2495 = vpack.c.b16 %v2472, %v2471
        %v2496 = vpack.c.b16 %v2474, %v2473
        %v2497 = vpack.c.b16 %v2476, %v2475
        %v2498 = vpack.c.b16 %v2478, %v2477
        %v2499 = vpack.c.b16 %v2480, %v2479
        %v2500 = vpack.c.b16 %v2482, %v2481
        %v2501 = vpack.c.b16 %v2484, %v2483
        %v2502 = vpack.c.b16 %v2486, %v2485
        %v2504 = vsel %vm699, %v2487, 0
        %v2507 = vsel %vm699, %v2488, 0
        %v2510 = vsel %vm699, %v2489, 0
        %v2513 = vsel %vm699, %v2490, 0
        %v2516 = vsel %vm699, %v2491, 0
        %v2519 = vsel %vm699, %v2492, 0
        %v2522 = vsel %vm699, %v2493, 0
        %v2525 = vsel %vm699, %v2494, 0
        %v2528 = vsel %vm699, %v2495, 0
        %v2531 = vsel %vm699, %v2496, 0
        %v2534 = vsel %vm699, %v2497, 0
        %v2537 = vsel %vm699, %v2498, 0
        %v2540 = vsel %vm699, %v2499, 0
        %v2543 = vsel %vm699, %v2500, 0
        %v2546 = vsel %vm699, %v2501, 0
        %v2549 = vsel %vm699, %v2502, 0
        %v2552 = vsel %vm748, %v2454, 0
        %2554 = vmatprep.subr.bf16.mxu0 0
        %2555 = vmatpush1.bf16.msra.mxu0 %v2552
        %2556 = vmatprep.subr.bf16.mxu0 0
        %2557 = vmatpush1.bf16.msra.mxu0 0
        %2558 = vmatprep.subr.bf16.mxu0 0
        %2559 = vmatpush1.bf16.msra.mxu0 0
        %2560 = vmatprep.subr.bf16.mxu0 0
        %2561 = vmatpush1.bf16.msra.mxu0 0
        %2562 = vmatprep.subr.bf16.mxu0 0
        %2563 = vmatpush1.bf16.msra.mxu0 0
        %2564 = vmatprep.subr.bf16.mxu0 0
        %2565 = vmatpush1.bf16.msra.mxu0 0
        %2566 = vmatprep.subr.bf16.mxu0 0
        %2567 = vmatpush1.bf16.msra.mxu0 0
        %2568 = vmatprep.subr.bf16.mxu0 0
        %2569 = vmatpush1.bf16.msra.mxu0 0
        %2570 = vmatprep.subr.bf16.mxu0 0
        %2571 = vmatpush1.bf16.msra.mxu0 0
        %2572 = vmatprep.subr.bf16.mxu0 0
        %2573 = vmatpush1.bf16.msra.mxu0 0
        %2574 = vmatprep.subr.bf16.mxu0 0
        %2575 = vmatpush1.bf16.msra.mxu0 0
        %2576 = vmatprep.subr.bf16.mxu0 0
        %2577 = vmatpush1.bf16.msra.mxu0 0
        %2578 = vmatprep.subr.bf16.mxu0 0
        %2579 = vmatpush1.bf16.msra.mxu0 0
        %2580 = vmatprep.subr.bf16.mxu0 0
        %2581 = vmatpush1.bf16.msra.mxu0 0
        %2582 = vmatprep.subr.bf16.mxu0 0
        %2583 = vmatpush1.bf16.msra.mxu0 0
        %2584 = vmatprep.subr.bf16.mxu0 0
        %2585 = vmatpush1.bf16.msra.mxu0 0
        %2586 = vmatprep.mubr.bf16.mxu0 0
        %2587 = vmatmul.mubr.bf16.gmra.mrb[0].mxu0 %v2504
        %v2588 = vpop.f32.mrb[0].mxu0
        %v2589 = vadd.f32 0.0, %v2588
        %v2590 = vpop.f32.mrb[0].mxu0
        %v2591 = vpop.f32.mrb[0].mxu0
        %v2592 = vadd.f32 0.0, %v2591
        %v2593 = vpop.f32.mrb[0].mxu0
        %2594 = vmatprep.mubr.bf16.mxu0 0
        %2595 = vmatmul.mubr.bf16.gmra.mrb[0].mxu0 %v2507
        %v2596 = vpop.f32.mrb[0].mxu0
        %v2597 = vadd.f32 0.0, %v2596
        %v2598 = vpop.f32.mrb[0].mxu0
        %v2599 = vpop.f32.mrb[0].mxu0
        %v2600 = vadd.f32 0.0, %v2599
        %v2601 = vpop.f32.mrb[0].mxu0
        %2602 = vmatprep.mubr.bf16.mxu0 0
        %2603 = vmatmul.mubr.bf16.gmra.mrb[0].mxu0 %v2510
        %v2604 = vpop.f32.mrb[0].mxu0
        %v2605 = vadd.f32 0.0, %v2604
        %v2606 = vpop.f32.mrb[0].mxu0
        %v2607 = vpop.f32.mrb[0].mxu0
        %v2608 = vadd.f32 0.0, %v2607
        %v2609 = vpop.f32.mrb[0].mxu0
        %2610 = vmatprep.mubr.bf16.mxu0 0
        %2611 = vmatmul.mubr.bf16.gmra.mrb[0].mxu0 %v2513
        %v2612 = vpop.f32.mrb[0].mxu0
        %v2613 = vadd.f32 0.0, %v2612
        %v2614 = vpop.f32.mrb[0].mxu0
        %v2615 = vpop.f32.mrb[0].mxu0
        %v2616 = vadd.f32 0.0, %v2615
        %v2617 = vpop.f32.mrb[0].mxu0
        %2618 = vmatprep.mubr.bf16.mxu0 0
        %2619 = vmatmul.mubr.bf16.gmra.mrb[0].mxu0 %v2516
        %v2620 = vpop.f32.mrb[0].mxu0
        %v2621 = vadd.f32 0.0, %v2620
        %v2622 = vpop.f32.mrb[0].mxu0
        %v2623 = vpop.f32.mrb[0].mxu0
        %v2624 = vadd.f32 0.0, %v2623
        %v2625 = vpop.f32.mrb[0].mxu0
        %2626 = vmatprep.mubr.bf16.mxu0 0
        %2627 = vmatmul.mubr.bf16.gmra.mrb[0].mxu0 %v2519
        %v2628 = vpop.f32.mrb[0].mxu0
        %v2629 = vadd.f32 0.0, %v2628
        %v2630 = vpop.f32.mrb[0].mxu0
        %v2631 = vpop.f32.mrb[0].mxu0
        %v2632 = vadd.f32 0.0, %v2631
        %v2633 = vpop.f32.mrb[0].mxu0
        %2634 = vmatprep.mubr.bf16.mxu0 0
        %2635 = vmatmul.mubr.bf16.gmra.mrb[0].mxu0 %v2522
        %v2636 = vpop.f32.mrb[0].mxu0
        %v2637 = vadd.f32 0.0, %v2636
        %v2638 = vpop.f32.mrb[0].mxu0
        %v2639 = vpop.f32.mrb[0].mxu0
        %v2640 = vadd.f32 0.0, %v2639
        %v2641 = vpop.f32.mrb[0].mxu0
        %2642 = vmatprep.mubr.bf16.mxu0 0
        %2643 = vmatmul.mubr.bf16.gmra.mrb[0].mxu0 %v2525
        %v2644 = vpop.f32.mrb[0].mxu0
        %v2645 = vadd.f32 0.0, %v2644
        %v2646 = vpop.f32.mrb[0].mxu0
        %v2647 = vpop.f32.mrb[0].mxu0
        %v2648 = vadd.f32 0.0, %v2647
        %v2649 = vpop.f32.mrb[0].mxu0
        %2650 = vmatprep.mubr.bf16.mxu0 0
        %2651 = vmatmul.mubr.bf16.gmra.mrb[0].mxu0 %v2528
        %v2652 = vpop.f32.mrb[0].mxu0
        %v2653 = vadd.f32 0.0, %v2652
        %v2654 = vpop.f32.mrb[0].mxu0
        %v2655 = vpop.f32.mrb[0].mxu0
        %v2656 = vadd.f32 0.0, %v2655
        %v2657 = vpop.f32.mrb[0].mxu0
        %2658 = vmatprep.mubr.bf16.mxu0 0
        %2659 = vmatmul.mubr.bf16.gmra.mrb[0].mxu0 %v2531
        %v2660 = vpop.f32.mrb[0].mxu0
        %v2661 = vadd.f32 0.0, %v2660
        %v2662 = vpop.f32.mrb[0].mxu0
        %v2663 = vpop.f32.mrb[0].mxu0
        %v2664 = vadd.f32 0.0, %v2663
        %v2665 = vpop.f32.mrb[0].mxu0
        %2666 = vmatprep.mubr.bf16.mxu0 0
        %2667 = vmatmul.mubr.bf16.gmra.mrb[0].mxu0 %v2534
        %v2668 = vpop.f32.mrb[0].mxu0
        %v2669 = vadd.f32 0.0, %v2668
        %v2670 = vpop.f32.mrb[0].mxu0
        %v2671 = vpop.f32.mrb[0].mxu0
        %v2672 = vadd.f32 0.0, %v2671
        %v2673 = vpop.f32.mrb[0].mxu0
        %2674 = vmatprep.mubr.bf16.mxu0 0
        %2675 = vmatmul.mubr.bf16.gmra.mrb[0].mxu0 %v2537
        %v2676 = vpop.f32.mrb[0].mxu0
        %v2677 = vadd.f32 0.0, %v2676
        %v2678 = vpop.f32.mrb[0].mxu0
        %v2679 = vpop.f32.mrb[0].mxu0
        %v2680 = vadd.f32 0.0, %v2679
        %v2681 = vpop.f32.mrb[0].mxu0
        %2682 = vmatprep.mubr.bf16.mxu0 0
        %2683 = vmatmul.mubr.bf16.gmra.mrb[0].mxu0 %v2540
        %v2684 = vpop.f32.mrb[0].mxu0
        %v2685 = vadd.f32 0.0, %v2684
        %v2686 = vpop.f32.mrb[0].mxu0
        %v2687 = vpop.f32.mrb[0].mxu0
        %v2688 = vadd.f32 0.0, %v2687
        %v2689 = vpop.f32.mrb[0].mxu0
        %2690 = vmatprep.mubr.bf16.mxu0 0
        %2691 = vmatmul.mubr.bf16.gmra.mrb[0].mxu0 %v2543
        %v2692 = vpop.f32.mrb[0].mxu0
        %v2693 = vadd.f32 0.0, %v2692
        %v2694 = vpop.f32.mrb[0].mxu0
        %v2695 = vpop.f32.mrb[0].mxu0
        %v2696 = vadd.f32 0.0, %v2695
        %v2697 = vpop.f32.mrb[0].mxu0
        %2698 = vmatprep.mubr.bf16.mxu0 0
        %2699 = vmatmul.mubr.bf16.gmra.mrb[0].mxu0 %v2546
        %v2700 = vpop.f32.mrb[0].mxu0
        %v2701 = vadd.f32 0.0, %v2700
        %v2702 = vpop.f32.mrb[0].mxu0
        %v2703 = vpop.f32.mrb[0].mxu0
        %v2704 = vadd.f32 0.0, %v2703
        %v2705 = vpop.f32.mrb[0].mxu0
        %2706 = vmatprep.mubr.bf16.mxu0 0
        %2707 = vmatmul.mubr.bf16.gmra.mrb[0].mxu0 %v2549
        %v2708 = vpop.f32.mrb[0].mxu0
        %v2709 = vadd.f32 0.0, %v2708
        %v2710 = vpop.f32.mrb[0].mxu0
        %v2711 = vpop.f32.mrb[0].mxu0
        %v2712 = vadd.f32 0.0, %v2711
        %v2713 = vpop.f32.mrb[0].mxu0
        %2714 = vdwg.mxu0
        %v2715 = vadd.f32 %v1989, %v2589
        %v2716 = vadd.f32 %v1990, %v2592
        %v2717 = vadd.f32 %v1991, %v2597
        %v2718 = vadd.f32 %v1992, %v2600
        %v2719 = vadd.f32 %v1993, %v2605
        %v2720 = vadd.f32 %v1994, %v2608
        %v2721 = vadd.f32 %v1995, %v2613
        %v2722 = vadd.f32 %v1996, %v2616
        %v2723 = vadd.f32 %v1997, %v2621
        %v2724 = vadd.f32 %v1998, %v2624
        %v2725 = vadd.f32 %v1999, %v2629
        %v2726 = vadd.f32 %v2000, %v2632
        %v2727 = vadd.f32 %v2001, %v2637
        %v2728 = vadd.f32 %v2002, %v2640
        %v2729 = vadd.f32 %v2003, %v2645
        %v2730 = vadd.f32 %v2004, %v2648
        %v2731 = vadd.f32 %v2005, %v2653
        %v2732 = vadd.f32 %v2006, %v2656
        %v2733 = vadd.f32 %v2007, %v2661
        %v2734 = vadd.f32 %v2008, %v2664
        %v2735 = vadd.f32 %v2009, %v2669
        %v2736 = vadd.f32 %v2010, %v2672
        %v2737 = vadd.f32 %v2011, %v2677
        %v2738 = vadd.f32 %v2012, %v2680
        %v2739 = vadd.f32 %v2013, %v2685
        %v2740 = vadd.f32 %v2014, %v2688
        %v2741 = vadd.f32 %v2015, %v2693
        %v2742 = vadd.f32 %v2016, %v2696
        %v2743 = vadd.f32 %v2017, %v2701
        %v2744 = vadd.f32 %v2018, %v2704
        %v2745 = vadd.f32 %v2019, %v2709
        %v2746 = vadd.f32 %v2020, %v2712
        %v2747 = vld [vmem:[%s1662] sm:$0xe]
        %v2748 = vld [vmem:[%s1662 + $0xc] sm:$0xe]
        %v2749 = vld [vmem:[%s1662 + $0x18] sm:$0xe]
        %v2750 = vld [vmem:[%s1662 + $0x24] sm:$0xe]
        %v2751 = vld [vmem:[%s1662 + $0x30] sm:$0xe]
        %v2752 = vld [vmem:[%s1662 + $0x3c] sm:$0xe]
        %v2753 = vld [vmem:[%s1662 + $0x48] sm:$0xe]
        %v2754 = vld [vmem:[%s1662 + $0x54] sm:$0xe]
        %v2755 = vld [vmem:[%s1662 + $0x60] sm:$0xe]
        %v2756 = vld [vmem:[%s1662 + $0x6c] sm:$0xe]
        %v2757 = vld [vmem:[%s1662 + $0x78] sm:$0xe]
        %v2758 = vld [vmem:[%s1662 + $0x84] sm:$0xe]
        %v2759 = vld [vmem:[%s1662 + $0x90] sm:$0xe]
        %v2760 = vld [vmem:[%s1662 + $0x9c] sm:$0xe]
        %v2761 = vld [vmem:[%s1662 + $0xa8] sm:$0xe]
        %v2762 = vld [vmem:[%s1662 + $0xb4] sm:$0xe]
        %v2811 = vrot.slane %v2747, 5
        %v2812 = vrot.slane %v2811, 4
        %v2813 = vrot.slane %v2022, 5
        %v2814 = vsel %vm1255, %v2812, %v2813
        %v2815 = vrot.slane %v2813, 4
        %v2816 = vrot.slane %v2023, 5
        %v2817 = vsel %vm1255, %v2815, %v2816
        %v2818 = vrot.slane %v2748, 5
        %v2819 = vrot.slane %v2818, 4
        %v2820 = vrot.slane %v2025, 5
        %v2821 = vsel %vm1255, %v2819, %v2820
        %v2822 = vrot.slane %v2820, 4
        %v2823 = vrot.slane %v2026, 5
        %v2824 = vsel %vm1255, %v2822, %v2823
        %v2825 = vrot.slane %v2749, 5
        %v2826 = vrot.slane %v2825, 4
        %v2827 = vrot.slane %v2028, 5
        %v2828 = vsel %vm1255, %v2826, %v2827
        %v2829 = vrot.slane %v2827, 4
        %v2830 = vrot.slane %v2029, 5
        %v2831 = vsel %vm1255, %v2829, %v2830
        %v2832 = vrot.slane %v2750, 5
        %v2833 = vrot.slane %v2832, 4
        %v2834 = vrot.slane %v2031, 5
        %v2835 = vsel %vm1255, %v2833, %v2834
        %v2836 = vrot.slane %v2834, 4
        %v2837 = vrot.slane %v2032, 5
        %v2838 = vsel %vm1255, %v2836, %v2837
        %v2839 = vrot.slane %v2751, 5
        %v2840 = vrot.slane %v2839, 4
        %v2841 = vrot.slane %v2034, 5
        %v2842 = vsel %vm1255, %v2840, %v2841
        %v2843 = vrot.slane %v2841, 4
        %v2844 = vrot.slane %v2035, 5
        %v2845 = vsel %vm1255, %v2843, %v2844
        %v2846 = vrot.slane %v2752, 5
        %v2847 = vrot.slane %v2846, 4
        %v2848 = vrot.slane %v2037, 5
        %v2849 = vsel %vm1255, %v2847, %v2848
        %v2850 = vrot.slane %v2848, 4
        %v2851 = vrot.slane %v2038, 5
        %v2852 = vsel %vm1255, %v2850, %v2851
        %v2853 = vrot.slane %v2753, 5
        %v2854 = vrot.slane %v2853, 4
        %v2855 = vrot.slane %v2040, 5
        %v2856 = vsel %vm1255, %v2854, %v2855
        %v2857 = vrot.slane %v2855, 4
        %v2858 = vrot.slane %v2041, 5
        %v2859 = vsel %vm1255, %v2857, %v2858
        %v2860 = vrot.slane %v2754, 5
        %v2861 = vrot.slane %v2860, 4
        %v2862 = vrot.slane %v2043, 5
        %v2863 = vsel %vm1255, %v2861, %v2862
        %v2864 = vrot.slane %v2862, 4
        %v2865 = vrot.slane %v2044, 5
        %v2866 = vsel %vm1255, %v2864, %v2865
        %v2867 = vrot.slane %v2755, 5
        %v2868 = vrot.slane %v2867, 4
        %v2869 = vrot.slane %v2046, 5
        %v2870 = vsel %vm1255, %v2868, %v2869
        %v2871 = vrot.slane %v2869, 4
        %v2872 = vrot.slane %v2047, 5
        %v2873 = vsel %vm1255, %v2871, %v2872
        %v2874 = vrot.slane %v2756, 5
        %v2875 = vrot.slane %v2874, 4
        %v2876 = vrot.slane %v2049, 5
        %v2877 = vsel %vm1255, %v2875, %v2876
        %v2878 = vrot.slane %v2876, 4
        %v2879 = vrot.slane %v2050, 5
        %v2880 = vsel %vm1255, %v2878, %v2879
        %v2881 = vrot.slane %v2757, 5
        %v2882 = vrot.slane %v2881, 4
        %v2883 = vrot.slane %v2052, 5
        %v2884 = vsel %vm1255, %v2882, %v2883
        %v2885 = vrot.slane %v2883, 4
        %v2886 = vrot.slane %v2053, 5
        %v2887 = vsel %vm1255, %v2885, %v2886
        %v2888 = vrot.slane %v2758, 5
        %v2889 = vrot.slane %v2888, 4
        %v2890 = vrot.slane %v2055, 5
        %v2891 = vsel %vm1255, %v2889, %v2890
        %v2892 = vrot.slane %v2890, 4
        %v2893 = vrot.slane %v2056, 5
        %v2894 = vsel %vm1255, %v2892, %v2893
        %v2895 = vrot.slane %v2759, 5
        %v2896 = vrot.slane %v2895, 4
        %v2897 = vrot.slane %v2058, 5
        %v2898 = vsel %vm1255, %v2896, %v2897
        %v2899 = vrot.slane %v2897, 4
        %v2900 = vrot.slane %v2059, 5
        %v2901 = vsel %vm1255, %v2899, %v2900
        %v2902 = vrot.slane %v2760, 5
        %v2903 = vrot.slane %v2902, 4
        %v2904 = vrot.slane %v2061, 5
        %v2905 = vsel %vm1255, %v2903, %v2904
        %v2906 = vrot.slane %v2904, 4
        %v2907 = vrot.slane %v2062, 5
        %v2908 = vsel %vm1255, %v2906, %v2907
        %v2909 = vrot.slane %v2761, 5
        %v2910 = vrot.slane %v2909, 4
        %v2911 = vrot.slane %v2064, 5
        %v2912 = vsel %vm1255, %v2910, %v2911
        %v2913 = vrot.slane %v2911, 4
        %v2914 = vrot.slane %v2065, 5
        %v2915 = vsel %vm1255, %v2913, %v2914
        %v2916 = vrot.slane %v2762, 5
        %v2917 = vrot.slane %v2916, 4
        %v2918 = vrot.slane %v2067, 5
        %v2919 = vsel %vm1255, %v2917, %v2918
        %v2920 = vrot.slane %v2918, 4
        %v2921 = vrot.slane %v2068, 5
        %v2922 = vsel %vm1255, %v2920, %v2921
        %s2923 = scalar_lea.vmem %s1, 10
        %v2924 = vld [vmem:[%s2923] sm:$0x3]
        %v2925 = vunpack.c.l.b16 %v2814
        %v2926 = vunpack.c.l.b16 %v2817
        %v2927 = vunpack.c.l.b16 %v2821
        %v2928 = vunpack.c.l.b16 %v2824
        %v2929 = vunpack.c.l.b16 %v2828
        %v2930 = vunpack.c.l.b16 %v2831
        %v2931 = vunpack.c.l.b16 %v2835
        %v2932 = vunpack.c.l.b16 %v2838
        %v2933 = vunpack.c.l.b16 %v2842
        %v2934 = vunpack.c.l.b16 %v2845
        %v2935 = vunpack.c.l.b16 %v2849
        %v2936 = vunpack.c.l.b16 %v2852
        %v2937 = vunpack.c.l.b16 %v2856
        %v2938 = vunpack.c.l.b16 %v2859
        %v2939 = vunpack.c.l.b16 %v2863
        %v2940 = vunpack.c.l.b16 %v2866
        %v2941 = vunpack.c.l.b16 %v2870
        %v2942 = vunpack.c.l.b16 %v2873
        %v2943 = vunpack.c.l.b16 %v2877
        %v2944 = vunpack.c.l.b16 %v2880
        %v2945 = vunpack.c.l.b16 %v2884
        %v2946 = vunpack.c.l.b16 %v2887
        %v2947 = vunpack.c.l.b16 %v2891
        %v2948 = vunpack.c.l.b16 %v2894
        %v2949 = vunpack.c.l.b16 %v2898
        %v2950 = vunpack.c.l.b16 %v2901
        %v2951 = vunpack.c.l.b16 %v2905
        %v2952 = vunpack.c.l.b16 %v2908
        %v2953 = vunpack.c.l.b16 %v2912
        %v2954 = vunpack.c.l.b16 %v2915
        %v2955 = vunpack.c.l.b16 %v2919
        %v2956 = vunpack.c.l.b16 %v2922
        %v2957 = vpack.c.b16 %v2926, %v2925
        %v2958 = vpack.c.b16 %v2928, %v2927
        %v2959 = vpack.c.b16 %v2930, %v2929
        %v2960 = vpack.c.b16 %v2932, %v2931
        %v2961 = vpack.c.b16 %v2934, %v2933
        %v2962 = vpack.c.b16 %v2936, %v2935
        %v2963 = vpack.c.b16 %v2938, %v2937
        %v2964 = vpack.c.b16 %v2940, %v2939
        %v2965 = vpack.c.b16 %v2942, %v2941
        %v2966 = vpack.c.b16 %v2944, %v2943
        %v2967 = vpack.c.b16 %v2946, %v2945
        %v2968 = vpack.c.b16 %v2948, %v2947
        %v2969 = vpack.c.b16 %v2950, %v2949
        %v2970 = vpack.c.b16 %v2952, %v2951
        %v2971 = vpack.c.b16 %v2954, %v2953
        %v2972 = vpack.c.b16 %v2956, %v2955
        %v2974 = vsel %vm699, %v2957, 0
        %v2977 = vsel %vm699, %v2958, 0
        %v2980 = vsel %vm699, %v2959, 0
        %v2983 = vsel %vm699, %v2960, 0
        %v2986 = vsel %vm699, %v2961, 0
        %v2989 = vsel %vm699, %v2962, 0
        %v2992 = vsel %vm699, %v2963, 0
        %v2995 = vsel %vm699, %v2964, 0
        %v2998 = vsel %vm699, %v2965, 0
        %v3001 = vsel %vm699, %v2966, 0
        %v3004 = vsel %vm699, %v2967, 0
        %v3007 = vsel %vm699, %v2968, 0
        %v3010 = vsel %vm699, %v2969, 0
        %v3013 = vsel %vm699, %v2970, 0
        %v3016 = vsel %vm699, %v2971, 0
        %v3019 = vsel %vm699, %v2972, 0
        %v3022 = vsel %vm748, %v2924, 0
        %3024 = vmatprep.subr.bf16.mxu0 0
        %3025 = vmatpush1.bf16.msra.mxu0 %v3022
        %3026 = vmatprep.subr.bf16.mxu0 0
        %3027 = vmatpush1.bf16.msra.mxu0 0
        %3028 = vmatprep.subr.bf16.mxu0 0
        %3029 = vmatpush1.bf16.msra.mxu0 0
        %3030 = vmatprep.subr.bf16.mxu0 0
        %3031 = vmatpush1.bf16.msra.mxu0 0
        %3032 = vmatprep.subr.bf16.mxu0 0
        %3033 = vmatpush1.bf16.msra.mxu0 0
        %3034 = vmatprep.subr.bf16.mxu0 0
        %3035 = vmatpush1.bf16.msra.mxu0 0
        %3036 = vmatprep.subr.bf16.mxu0 0
        %3037 = vmatpush1.bf16.msra.mxu0 0
        %3038 = vmatprep.subr.bf16.mxu0 0
        %3039 = vmatpush1.bf16.msra.mxu0 0
        %3040 = vmatprep.subr.bf16.mxu0 0
        %3041 = vmatpush1.bf16.msra.mxu0 0
        %3042 = vmatprep.subr.bf16.mxu0 0
        %3043 = vmatpush1.bf16.msra.mxu0 0
        %3044 = vmatprep.subr.bf16.mxu0 0
        %3045 = vmatpush1.bf16.msra.mxu0 0
        %3046 = vmatprep.subr.bf16.mxu0 0
        %3047 = vmatpush1.bf16.msra.mxu0 0
        %3048 = vmatprep.subr.bf16.mxu0 0
        %3049 = vmatpush1.bf16.msra.mxu0 0
        %3050 = vmatprep.subr.bf16.mxu0 0
        %3051 = vmatpush1.bf16.msra.mxu0 0
        %3052 = vmatprep.subr.bf16.mxu0 0
        %3053 = vmatpush1.bf16.msra.mxu0 0
        %3054 = vmatprep.subr.bf16.mxu0 0
        %3055 = vmatpush1.bf16.msra.mxu0 0
        %3056 = vmatprep.mubr.bf16.mxu0 0
        %3057 = vmatmul.mubr.bf16.gmra.mrb[0].mxu0 %v2974
        %v3058 = vpop.f32.mrb[0].mxu0
        %v3059 = vadd.f32 0.0, %v3058
        %v3060 = vpop.f32.mrb[0].mxu0
        %v3061 = vpop.f32.mrb[0].mxu0
        %v3062 = vadd.f32 0.0, %v3061
        %v3063 = vpop.f32.mrb[0].mxu0
        %3064 = vmatprep.mubr.bf16.mxu0 0
        %3065 = vmatmul.mubr.bf16.gmra.mrb[0].mxu0 %v2977
        %v3066 = vpop.f32.mrb[0].mxu0
        %v3067 = vadd.f32 0.0, %v3066
        %v3068 = vpop.f32.mrb[0].mxu0
        %v3069 = vpop.f32.mrb[0].mxu0
        %v3070 = vadd.f32 0.0, %v3069
        %v3071 = vpop.f32.mrb[0].mxu0
        %3072 = vmatprep.mubr.bf16.mxu0 0
        %3073 = vmatmul.mubr.bf16.gmra.mrb[0].mxu0 %v2980
        %v3074 = vpop.f32.mrb[0].mxu0
        %v3075 = vadd.f32 0.0, %v3074
        %v3076 = vpop.f32.mrb[0].mxu0
        %v3077 = vpop.f32.mrb[0].mxu0
        %v3078 = vadd.f32 0.0, %v3077
        %v3079 = vpop.f32.mrb[0].mxu0
        %3080 = vmatprep.mubr.bf16.mxu0 0
        %3081 = vmatmul.mubr.bf16.gmra.mrb[0].mxu0 %v2983
        %v3082 = vpop.f32.mrb[0].mxu0
        %v3083 = vadd.f32 0.0, %v3082
        %v3084 = vpop.f32.mrb[0].mxu0
        %v3085 = vpop.f32.mrb[0].mxu0
        %v3086 = vadd.f32 0.0, %v3085
        %v3087 = vpop.f32.mrb[0].mxu0
        %3088 = vmatprep.mubr.bf16.mxu0 0
        %3089 = vmatmul.mubr.bf16.gmra.mrb[0].mxu0 %v2986
        %v3090 = vpop.f32.mrb[0].mxu0
        %v3091 = vadd.f32 0.0, %v3090
        %v3092 = vpop.f32.mrb[0].mxu0
        %v3093 = vpop.f32.mrb[0].mxu0
        %v3094 = vadd.f32 0.0, %v3093
        %v3095 = vpop.f32.mrb[0].mxu0
        %3096 = vmatprep.mubr.bf16.mxu0 0
        %3097 = vmatmul.mubr.bf16.gmra.mrb[0].mxu0 %v2989
        %v3098 = vpop.f32.mrb[0].mxu0
        %v3099 = vadd.f32 0.0, %v3098
        %v3100 = vpop.f32.mrb[0].mxu0
        %v3101 = vpop.f32.mrb[0].mxu0
        %v3102 = vadd.f32 0.0, %v3101
        %v3103 = vpop.f32.mrb[0].mxu0
        %3104 = vmatprep.mubr.bf16.mxu0 0
        %3105 = vmatmul.mubr.bf16.gmra.mrb[0].mxu0 %v2992
        %v3106 = vpop.f32.mrb[0].mxu0
        %v3107 = vadd.f32 0.0, %v3106
        %v3108 = vpop.f32.mrb[0].mxu0
        %v3109 = vpop.f32.mrb[0].mxu0
        %v3110 = vadd.f32 0.0, %v3109
        %v3111 = vpop.f32.mrb[0].mxu0
        %3112 = vmatprep.mubr.bf16.mxu0 0
        %3113 = vmatmul.mubr.bf16.gmra.mrb[0].mxu0 %v2995
        %v3114 = vpop.f32.mrb[0].mxu0
        %v3115 = vadd.f32 0.0, %v3114
        %v3116 = vpop.f32.mrb[0].mxu0
        %v3117 = vpop.f32.mrb[0].mxu0
        %v3118 = vadd.f32 0.0, %v3117
        %v3119 = vpop.f32.mrb[0].mxu0
        %3120 = vmatprep.mubr.bf16.mxu0 0
        %3121 = vmatmul.mubr.bf16.gmra.mrb[0].mxu0 %v2998
        %v3122 = vpop.f32.mrb[0].mxu0
        %v3123 = vadd.f32 0.0, %v3122
        %v3124 = vpop.f32.mrb[0].mxu0
        %v3125 = vpop.f32.mrb[0].mxu0
        %v3126 = vadd.f32 0.0, %v3125
        %v3127 = vpop.f32.mrb[0].mxu0
        %3128 = vmatprep.mubr.bf16.mxu0 0
        %3129 = vmatmul.mubr.bf16.gmra.mrb[0].mxu0 %v3001
        %v3130 = vpop.f32.mrb[0].mxu0
        %v3131 = vadd.f32 0.0, %v3130
        %v3132 = vpop.f32.mrb[0].mxu0
        %v3133 = vpop.f32.mrb[0].mxu0
        %v3134 = vadd.f32 0.0, %v3133
        %v3135 = vpop.f32.mrb[0].mxu0
        %3136 = vmatprep.mubr.bf16.mxu0 0
        %3137 = vmatmul.mubr.bf16.gmra.mrb[0].mxu0 %v3004
        %v3138 = vpop.f32.mrb[0].mxu0
        %v3139 = vadd.f32 0.0, %v3138
        %v3140 = vpop.f32.mrb[0].mxu0
        %v3141 = vpop.f32.mrb[0].mxu0
        %v3142 = vadd.f32 0.0, %v3141
        %v3143 = vpop.f32.mrb[0].mxu0
        %3144 = vmatprep.mubr.bf16.mxu0 0
        %3145 = vmatmul.mubr.bf16.gmra.mrb[0].mxu0 %v3007
        %v3146 = vpop.f32.mrb[0].mxu0
        %v3147 = vadd.f32 0.0, %v3146
        %v3148 = vpop.f32.mrb[0].mxu0
        %v3149 = vpop.f32.mrb[0].mxu0
        %v3150 = vadd.f32 0.0, %v3149
        %v3151 = vpop.f32.mrb[0].mxu0
        %3152 = vmatprep.mubr.bf16.mxu0 0
        %3153 = vmatmul.mubr.bf16.gmra.mrb[0].mxu0 %v3010
        %v3154 = vpop.f32.mrb[0].mxu0
        %v3155 = vadd.f32 0.0, %v3154
        %v3156 = vpop.f32.mrb[0].mxu0
        %v3157 = vpop.f32.mrb[0].mxu0
        %v3158 = vadd.f32 0.0, %v3157
        %v3159 = vpop.f32.mrb[0].mxu0
        %3160 = vmatprep.mubr.bf16.mxu0 0
        %3161 = vmatmul.mubr.bf16.gmra.mrb[0].mxu0 %v3013
        %v3162 = vpop.f32.mrb[0].mxu0
        %v3163 = vadd.f32 0.0, %v3162
        %v3164 = vpop.f32.mrb[0].mxu0
        %v3165 = vpop.f32.mrb[0].mxu0
        %v3166 = vadd.f32 0.0, %v3165
        %v3167 = vpop.f32.mrb[0].mxu0
        %3168 = vmatprep.mubr.bf16.mxu0 0
        %3169 = vmatmul.mubr.bf16.gmra.mrb[0].mxu0 %v3016
        %v3170 = vpop.f32.mrb[0].mxu0
        %v3171 = vadd.f32 0.0, %v3170
        %v3172 = vpop.f32.mrb[0].mxu0
        %v3173 = vpop.f32.mrb[0].mxu0
        %v3174 = vadd.f32 0.0, %v3173
        %v3175 = vpop.f32.mrb[0].mxu0
        %3176 = vmatprep.mubr.bf16.mxu0 0
        %3177 = vmatmul.mubr.bf16.gmra.mrb[0].mxu0 %v3019
        %v3178 = vpop.f32.mrb[0].mxu0
        %v3179 = vadd.f32 0.0, %v3178
        %v3180 = vpop.f32.mrb[0].mxu0
        %v3181 = vpop.f32.mrb[0].mxu0
        %v3182 = vadd.f32 0.0, %v3181
        %v3183 = vpop.f32.mrb[0].mxu0
        %3184 = vdwg.mxu0
        %v3185 = vadd.f32 %v2715, %v3059
        %v3186 = vadd.f32 %v2716, %v3062
        %v3187 = vadd.f32 %v2717, %v3067
        %v3188 = vadd.f32 %v2718, %v3070
        %v3189 = vadd.f32 %v2719, %v3075
        %v3190 = vadd.f32 %v2720, %v3078
        %v3191 = vadd.f32 %v2721, %v3083
        %v3192 = vadd.f32 %v2722, %v3086
        %v3193 = vadd.f32 %v2723, %v3091
        %v3194 = vadd.f32 %v2724, %v3094
        %v3195 = vadd.f32 %v2725, %v3099
        %v3196 = vadd.f32 %v2726, %v3102
        %v3197 = vadd.f32 %v2727, %v3107
        %v3198 = vadd.f32 %v2728, %v3110
        %v3199 = vadd.f32 %v2729, %v3115
        %v3200 = vadd.f32 %v2730, %v3118
        %v3201 = vadd.f32 %v2731, %v3123
        %v3202 = vadd.f32 %v2732, %v3126
        %v3203 = vadd.f32 %v2733, %v3131
        %v3204 = vadd.f32 %v2734, %v3134
        %v3205 = vadd.f32 %v2735, %v3139
        %v3206 = vadd.f32 %v2736, %v3142
        %v3207 = vadd.f32 %v2737, %v3147
        %v3208 = vadd.f32 %v2738, %v3150
        %v3209 = vadd.f32 %v2739, %v3155
        %v3210 = vadd.f32 %v2740, %v3158
        %v3211 = vadd.f32 %v2741, %v3163
        %v3212 = vadd.f32 %v2742, %v3166
        %v3213 = vadd.f32 %v2743, %v3171
        %v3214 = vadd.f32 %v2744, %v3174
        %v3215 = vadd.f32 %v2745, %v3179
        %v3216 = vadd.f32 %v2746, %v3182
        %s3217 = scalar_lea.vmem %s211, 24
        %v3218 = vld [vmem:[%s3217] sm:$0xf]
        %v3219 = vld [vmem:[%s3217 + $0x4] sm:$0xf]
        %v3220 = vld [vmem:[%s3217 + $0xc] sm:$0xf]
        %v3221 = vld [vmem:[%s3217 + $0x10] sm:$0xf]
        %v3222 = vld [vmem:[%s3217 + $0x18] sm:$0xf]
        %v3223 = vld [vmem:[%s3217 + $0x1c] sm:$0xf]
        %v3224 = vld [vmem:[%s3217 + $0x24] sm:$0xf]
        %v3225 = vld [vmem:[%s3217 + $0x28] sm:$0xf]
        %v3226 = vld [vmem:[%s3217 + $0x30] sm:$0xf]
        %v3227 = vld [vmem:[%s3217 + $0x34] sm:$0xf]
        %v3228 = vld [vmem:[%s3217 + $0x3c] sm:$0xf]
        %v3229 = vld [vmem:[%s3217 + $0x40] sm:$0xf]
        %v3230 = vld [vmem:[%s3217 + $0x48] sm:$0xf]
        %v3231 = vld [vmem:[%s3217 + $0x4c] sm:$0xf]
        %v3232 = vld [vmem:[%s3217 + $0x54] sm:$0xf]
        %v3233 = vld [vmem:[%s3217 + $0x58] sm:$0xf]
        %v3234 = vld [vmem:[%s3217 + $0x60] sm:$0xf]
        %v3235 = vld [vmem:[%s3217 + $0x64] sm:$0xf]
        %v3236 = vld [vmem:[%s3217 + $0x6c] sm:$0xf]
        %v3237 = vld [vmem:[%s3217 + $0x70] sm:$0xf]
        %v3238 = vld [vmem:[%s3217 + $0x78] sm:$0xf]
        %v3239 = vld [vmem:[%s3217 + $0x7c] sm:$0xf]
        %v3240 = vld [vmem:[%s3217 + $0x84] sm:$0xf]
        %v3241 = vld [vmem:[%s3217 + $0x88] sm:$0xf]
        %v3242 = vld [vmem:[%s3217 + $0x90] sm:$0xf]
        %v3243 = vld [vmem:[%s3217 + $0x94] sm:$0xf]
        %v3244 = vld [vmem:[%s3217 + $0x9c] sm:$0xf]
        %v3245 = vld [vmem:[%s3217 + $0xa0] sm:$0xf]
        %v3246 = vld [vmem:[%s3217 + $0xa8] sm:$0xf]
        %v3247 = vld [vmem:[%s3217 + $0xac] sm:$0xf]
        %v3248 = vld [vmem:[%s3217 + $0xb4] sm:$0xf]
        %v3249 = vld [vmem:[%s3217 + $0xb8] sm:$0xf]
        %s3250 = scalar_lea.vmem %s1, 12
        %v3251 = vld [vmem:[%s3250] sm:$0x3]
        %v3284 = vunpack.c.l.b16 %v3218
        %v3285 = vunpack.c.l.b16 %v3219
        %v3286 = vunpack.c.l.b16 %v3220
        %v3287 = vunpack.c.l.b16 %v3221
        %v3288 = vunpack.c.l.b16 %v3222
        %v3289 = vunpack.c.l.b16 %v3223
        %v3290 = vunpack.c.l.b16 %v3224
        %v3291 = vunpack.c.l.b16 %v3225
        %v3292 = vunpack.c.l.b16 %v3226
        %v3293 = vunpack.c.l.b16 %v3227
        %v3294 = vunpack.c.l.b16 %v3228
        %v3295 = vunpack.c.l.b16 %v3229
        %v3296 = vunpack.c.l.b16 %v3230
        %v3297 = vunpack.c.l.b16 %v3231
        %v3298 = vunpack.c.l.b16 %v3232
        %v3299 = vunpack.c.l.b16 %v3233
        %v3300 = vunpack.c.l.b16 %v3234
        %v3301 = vunpack.c.l.b16 %v3235
        %v3302 = vunpack.c.l.b16 %v3236
        %v3303 = vunpack.c.l.b16 %v3237
        %v3304 = vunpack.c.l.b16 %v3238
        %v3305 = vunpack.c.l.b16 %v3239
        %v3306 = vunpack.c.l.b16 %v3240
        %v3307 = vunpack.c.l.b16 %v3241
        %v3308 = vunpack.c.l.b16 %v3242
        %v3309 = vunpack.c.l.b16 %v3243
        %v3310 = vunpack.c.l.b16 %v3244
        %v3311 = vunpack.c.l.b16 %v3245
        %v3312 = vunpack.c.l.b16 %v3246
        %v3313 = vunpack.c.l.b16 %v3247
        %v3314 = vunpack.c.l.b16 %v3248
        %v3315 = vunpack.c.l.b16 %v3249
        %v3316 = vpack.c.b16 %v3285, %v3284
        %v3317 = vpack.c.b16 %v3287, %v3286
        %v3318 = vpack.c.b16 %v3289, %v3288
        %v3319 = vpack.c.b16 %v3291, %v3290
        %v3320 = vpack.c.b16 %v3293, %v3292
        %v3321 = vpack.c.b16 %v3295, %v3294
        %v3322 = vpack.c.b16 %v3297, %v3296
        %v3323 = vpack.c.b16 %v3299, %v3298
        %v3324 = vpack.c.b16 %v3301, %v3300
        %v3325 = vpack.c.b16 %v3303, %v3302
        %v3326 = vpack.c.b16 %v3305, %v3304
        %v3327 = vpack.c.b16 %v3307, %v3306
        %v3328 = vpack.c.b16 %v3309, %v3308
        %v3329 = vpack.c.b16 %v3311, %v3310
        %v3330 = vpack.c.b16 %v3313, %v3312
        %v3331 = vpack.c.b16 %v3315, %v3314
        %v3333 = vsel %vm699, %v3316, 0
        %v3336 = vsel %vm699, %v3317, 0
        %v3339 = vsel %vm699, %v3318, 0
        %v3342 = vsel %vm699, %v3319, 0
        %v3345 = vsel %vm699, %v3320, 0
        %v3348 = vsel %vm699, %v3321, 0
        %v3351 = vsel %vm699, %v3322, 0
        %v3354 = vsel %vm699, %v3323, 0
        %v3357 = vsel %vm699, %v3324, 0
        %v3360 = vsel %vm699, %v3325, 0
        %v3363 = vsel %vm699, %v3326, 0
        %v3366 = vsel %vm699, %v3327, 0
        %v3369 = vsel %vm699, %v3328, 0
        %v3372 = vsel %vm699, %v3329, 0
        %v3375 = vsel %vm699, %v3330, 0
        %v3378 = vsel %vm699, %v3331, 0
        %v3381 = vsel %vm748, %v3251, 0
        %3383 = vmatprep.subr.bf16.mxu0 0
        %3384 = vmatpush1.bf16.msra.mxu0 %v3381
        %3385 = vmatprep.subr.bf16.mxu0 0
        %3386 = vmatpush1.bf16.msra.mxu0 0
        %3387 = vmatprep.subr.bf16.mxu0 0
        %3388 = vmatpush1.bf16.msra.mxu0 0
        %3389 = vmatprep.subr.bf16.mxu0 0
        %3390 = vmatpush1.bf16.msra.mxu0 0
        %3391 = vmatprep.subr.bf16.mxu0 0
        %3392 = vmatpush1.bf16.msra.mxu0 0
        %3393 = vmatprep.subr.bf16.mxu0 0
        %3394 = vmatpush1.bf16.msra.mxu0 0
        %3395 = vmatprep.subr.bf16.mxu0 0
        %3396 = vmatpush1.bf16.msra.mxu0 0
        %3397 = vmatprep.subr.bf16.mxu0 0
        %3398 = vmatpush1.bf16.msra.mxu0 0
        %3399 = vmatprep.subr.bf16.mxu0 0
        %3400 = vmatpush1.bf16.msra.mxu0 0
        %3401 = vmatprep.subr.bf16.mxu0 0
        %3402 = vmatpush1.bf16.msra.mxu0 0
        %3403 = vmatprep.subr.bf16.mxu0 0
        %3404 = vmatpush1.bf16.msra.mxu0 0
        %3405 = vmatprep.subr.bf16.mxu0 0
        %3406 = vmatpush1.bf16.msra.mxu0 0
        %3407 = vmatprep.subr.bf16.mxu0 0
        %3408 = vmatpush1.bf16.msra.mxu0 0
        %3409 = vmatprep.subr.bf16.mxu0 0
        %3410 = vmatpush1.bf16.msra.mxu0 0
        %3411 = vmatprep.subr.bf16.mxu0 0
        %3412 = vmatpush1.bf16.msra.mxu0 0
        %3413 = vmatprep.subr.bf16.mxu0 0
        %3414 = vmatpush1.bf16.msra.mxu0 0
        %3415 = vmatprep.mubr.bf16.mxu0 0
        %3416 = vmatmul.mubr.bf16.gmra.mrb[0].mxu0 %v3333
        %v3417 = vpop.f32.mrb[0].mxu0
        %v3418 = vadd.f32 0.0, %v3417
        %v3419 = vpop.f32.mrb[0].mxu0
        %v3420 = vpop.f32.mrb[0].mxu0
        %v3421 = vadd.f32 0.0, %v3420
        %v3422 = vpop.f32.mrb[0].mxu0
        %3423 = vmatprep.mubr.bf16.mxu0 0
        %3424 = vmatmul.mubr.bf16.gmra.mrb[0].mxu0 %v3336
        %v3425 = vpop.f32.mrb[0].mxu0
        %v3426 = vadd.f32 0.0, %v3425
        %v3427 = vpop.f32.mrb[0].mxu0
        %v3428 = vpop.f32.mrb[0].mxu0
        %v3429 = vadd.f32 0.0, %v3428
        %v3430 = vpop.f32.mrb[0].mxu0
        %3431 = vmatprep.mubr.bf16.mxu0 0
        %3432 = vmatmul.mubr.bf16.gmra.mrb[0].mxu0 %v3339
        %v3433 = vpop.f32.mrb[0].mxu0
        %v3434 = vadd.f32 0.0, %v3433
        %v3435 = vpop.f32.mrb[0].mxu0
        %v3436 = vpop.f32.mrb[0].mxu0
        %v3437 = vadd.f32 0.0, %v3436
        %v3438 = vpop.f32.mrb[0].mxu0
        %3439 = vmatprep.mubr.bf16.mxu0 0
        %3440 = vmatmul.mubr.bf16.gmra.mrb[0].mxu0 %v3342
        %v3441 = vpop.f32.mrb[0].mxu0
        %v3442 = vadd.f32 0.0, %v3441
        %v3443 = vpop.f32.mrb[0].mxu0
        %v3444 = vpop.f32.mrb[0].mxu0
        %v3445 = vadd.f32 0.0, %v3444
        %v3446 = vpop.f32.mrb[0].mxu0
        %3447 = vmatprep.mubr.bf16.mxu0 0
        %3448 = vmatmul.mubr.bf16.gmra.mrb[0].mxu0 %v3345
        %v3449 = vpop.f32.mrb[0].mxu0
        %v3450 = vadd.f32 0.0, %v3449
        %v3451 = vpop.f32.mrb[0].mxu0
        %v3452 = vpop.f32.mrb[0].mxu0
        %v3453 = vadd.f32 0.0, %v3452
        %v3454 = vpop.f32.mrb[0].mxu0
        %3455 = vmatprep.mubr.bf16.mxu0 0
        %3456 = vmatmul.mubr.bf16.gmra.mrb[0].mxu0 %v3348
        %v3457 = vpop.f32.mrb[0].mxu0
        %v3458 = vadd.f32 0.0, %v3457
        %v3459 = vpop.f32.mrb[0].mxu0
        %v3460 = vpop.f32.mrb[0].mxu0
        %v3461 = vadd.f32 0.0, %v3460
        %v3462 = vpop.f32.mrb[0].mxu0
        %3463 = vmatprep.mubr.bf16.mxu0 0
        %3464 = vmatmul.mubr.bf16.gmra.mrb[0].mxu0 %v3351
        %v3465 = vpop.f32.mrb[0].mxu0
        %v3466 = vadd.f32 0.0, %v3465
        %v3467 = vpop.f32.mrb[0].mxu0
        %v3468 = vpop.f32.mrb[0].mxu0
        %v3469 = vadd.f32 0.0, %v3468
        %v3470 = vpop.f32.mrb[0].mxu0
        %3471 = vmatprep.mubr.bf16.mxu0 0
        %3472 = vmatmul.mubr.bf16.gmra.mrb[0].mxu0 %v3354
        %v3473 = vpop.f32.mrb[0].mxu0
        %v3474 = vadd.f32 0.0, %v3473
        %v3475 = vpop.f32.mrb[0].mxu0
        %v3476 = vpop.f32.mrb[0].mxu0
        %v3477 = vadd.f32 0.0, %v3476
        %v3478 = vpop.f32.mrb[0].mxu0
        %3479 = vmatprep.mubr.bf16.mxu0 0
        %3480 = vmatmul.mubr.bf16.gmra.mrb[0].mxu0 %v3357
        %v3481 = vpop.f32.mrb[0].mxu0
        %v3482 = vadd.f32 0.0, %v3481
        %v3483 = vpop.f32.mrb[0].mxu0
        %v3484 = vpop.f32.mrb[0].mxu0
        %v3485 = vadd.f32 0.0, %v3484
        %v3486 = vpop.f32.mrb[0].mxu0
        %3487 = vmatprep.mubr.bf16.mxu0 0
        %3488 = vmatmul.mubr.bf16.gmra.mrb[0].mxu0 %v3360
        %v3489 = vpop.f32.mrb[0].mxu0
        %v3490 = vadd.f32 0.0, %v3489
        %v3491 = vpop.f32.mrb[0].mxu0
        %v3492 = vpop.f32.mrb[0].mxu0
        %v3493 = vadd.f32 0.0, %v3492
        %v3494 = vpop.f32.mrb[0].mxu0
        %3495 = vmatprep.mubr.bf16.mxu0 0
        %3496 = vmatmul.mubr.bf16.gmra.mrb[0].mxu0 %v3363
        %v3497 = vpop.f32.mrb[0].mxu0
        %v3498 = vadd.f32 0.0, %v3497
        %v3499 = vpop.f32.mrb[0].mxu0
        %v3500 = vpop.f32.mrb[0].mxu0
        %v3501 = vadd.f32 0.0, %v3500
        %v3502 = vpop.f32.mrb[0].mxu0
        %3503 = vmatprep.mubr.bf16.mxu0 0
        %3504 = vmatmul.mubr.bf16.gmra.mrb[0].mxu0 %v3366
        %v3505 = vpop.f32.mrb[0].mxu0
        %v3506 = vadd.f32 0.0, %v3505
        %v3507 = vpop.f32.mrb[0].mxu0
        %v3508 = vpop.f32.mrb[0].mxu0
        %v3509 = vadd.f32 0.0, %v3508
        %v3510 = vpop.f32.mrb[0].mxu0
        %3511 = vmatprep.mubr.bf16.mxu0 0
        %3512 = vmatmul.mubr.bf16.gmra.mrb[0].mxu0 %v3369
        %v3513 = vpop.f32.mrb[0].mxu0
        %v3514 = vadd.f32 0.0, %v3513
        %v3515 = vpop.f32.mrb[0].mxu0
        %v3516 = vpop.f32.mrb[0].mxu0
        %v3517 = vadd.f32 0.0, %v3516
        %v3518 = vpop.f32.mrb[0].mxu0
        %3519 = vmatprep.mubr.bf16.mxu0 0
        %3520 = vmatmul.mubr.bf16.gmra.mrb[0].mxu0 %v3372
        %v3521 = vpop.f32.mrb[0].mxu0
        %v3522 = vadd.f32 0.0, %v3521
        %v3523 = vpop.f32.mrb[0].mxu0
        %v3524 = vpop.f32.mrb[0].mxu0
        %v3525 = vadd.f32 0.0, %v3524
        %v3526 = vpop.f32.mrb[0].mxu0
        %3527 = vmatprep.mubr.bf16.mxu0 0
        %3528 = vmatmul.mubr.bf16.gmra.mrb[0].mxu0 %v3375
        %v3529 = vpop.f32.mrb[0].mxu0
        %v3530 = vadd.f32 0.0, %v3529
        %v3531 = vpop.f32.mrb[0].mxu0
        %v3532 = vpop.f32.mrb[0].mxu0
        %v3533 = vadd.f32 0.0, %v3532
        %v3534 = vpop.f32.mrb[0].mxu0
        %3535 = vmatprep.mubr.bf16.mxu0 0
        %3536 = vmatmul.mubr.bf16.gmra.mrb[0].mxu0 %v3378
        %v3537 = vpop.f32.mrb[0].mxu0
        %v3538 = vadd.f32 0.0, %v3537
        %v3539 = vpop.f32.mrb[0].mxu0
        %v3540 = vpop.f32.mrb[0].mxu0
        %v3541 = vadd.f32 0.0, %v3540
        %v3542 = vpop.f32.mrb[0].mxu0
        %3543 = vdwg.mxu0
        %v3544 = vadd.f32 %v3185, %v3418
        %v3545 = vadd.f32 %v3186, %v3421
        %v3546 = vadd.f32 %v3187, %v3426
        %v3547 = vadd.f32 %v3188, %v3429
        %v3548 = vadd.f32 %v3189, %v3434
        %v3549 = vadd.f32 %v3190, %v3437
        %v3550 = vadd.f32 %v3191, %v3442
        %v3551 = vadd.f32 %v3192, %v3445
        %v3552 = vadd.f32 %v3193, %v3450
        %v3553 = vadd.f32 %v3194, %v3453
        %v3554 = vadd.f32 %v3195, %v3458
        %v3555 = vadd.f32 %v3196, %v3461
        %v3556 = vadd.f32 %v3197, %v3466
        %v3557 = vadd.f32 %v3198, %v3469
        %v3558 = vadd.f32 %v3199, %v3474
        %v3559 = vadd.f32 %v3200, %v3477
        %v3560 = vadd.f32 %v3201, %v3482
        %v3561 = vadd.f32 %v3202, %v3485
        %v3562 = vadd.f32 %v3203, %v3490
        %v3563 = vadd.f32 %v3204, %v3493
        %v3564 = vadd.f32 %v3205, %v3498
        %v3565 = vadd.f32 %v3206, %v3501
        %v3566 = vadd.f32 %v3207, %v3506
        %v3567 = vadd.f32 %v3208, %v3509
        %v3568 = vadd.f32 %v3209, %v3514
        %v3569 = vadd.f32 %v3210, %v3517
        %v3570 = vadd.f32 %v3211, %v3522
        %v3571 = vadd.f32 %v3212, %v3525
        %v3572 = vadd.f32 %v3213, %v3530
        %v3573 = vadd.f32 %v3214, %v3533
        %v3574 = vadd.f32 %v3215, %v3538
        %v3575 = vadd.f32 %v3216, %v3541
        %v3576 = vld [vmem:[%s3217] sm:$0xf]
        %v3577 = vld [vmem:[%s3217 + $0x4] sm:$0xf]
        %v3578 = vld [vmem:[%s3217 + $0x8] sm:$0x1]
        %v3579 = vld [vmem:[%s3217 + $0xc] sm:$0xf]
        %v3580 = vld [vmem:[%s3217 + $0x10] sm:$0xf]
        %v3581 = vld [vmem:[%s3217 + $0x14] sm:$0x1]
        %v3582 = vld [vmem:[%s3217 + $0x18] sm:$0xf]
        %v3583 = vld [vmem:[%s3217 + $0x1c] sm:$0xf]
        %v3584 = vld [vmem:[%s3217 + $0x20] sm:$0x1]
        %v3585 = vld [vmem:[%s3217 + $0x24] sm:$0xf]
        %v3586 = vld [vmem:[%s3217 + $0x28] sm:$0xf]
        %v3587 = vld [vmem:[%s3217 + $0x2c] sm:$0x1]
        %v3588 = vld [vmem:[%s3217 + $0x30] sm:$0xf]
        %v3589 = vld [vmem:[%s3217 + $0x34] sm:$0xf]
        %v3590 = vld [vmem:[%s3217 + $0x38] sm:$0x1]
        %v3591 = vld [vmem:[%s3217 + $0x3c] sm:$0xf]
        %v3592 = vld [vmem:[%s3217 + $0x40] sm:$0xf]
        %v3593 = vld [vmem:[%s3217 + $0x44] sm:$0x1]
        %v3594 = vld [vmem:[%s3217 + $0x48] sm:$0xf]
        %v3595 = vld [vmem:[%s3217 + $0x4c] sm:$0xf]
        %v3596 = vld [vmem:[%s3217 + $0x50] sm:$0x1]
        %v3597 = vld [vmem:[%s3217 + $0x54] sm:$0xf]
        %v3598 = vld [vmem:[%s3217 + $0x58] sm:$0xf]
        %v3599 = vld [vmem:[%s3217 + $0x5c] sm:$0x1]
        %v3600 = vld [vmem:[%s3217 + $0x60] sm:$0xf]
        %v3601 = vld [vmem:[%s3217 + $0x64] sm:$0xf]
        %v3602 = vld [vmem:[%s3217 + $0x68] sm:$0x1]
        %v3603 = vld [vmem:[%s3217 + $0x6c] sm:$0xf]
        %v3604 = vld [vmem:[%s3217 + $0x70] sm:$0xf]
        %v3605 = vld [vmem:[%s3217 + $0x74] sm:$0x1]
        %v3606 = vld [vmem:[%s3217 + $0x78] sm:$0xf]
        %v3607 = vld [vmem:[%s3217 + $0x7c] sm:$0xf]
        %v3608 = vld [vmem:[%s3217 + $0x80] sm:$0x1]
        %v3609 = vld [vmem:[%s3217 + $0x84] sm:$0xf]
        %v3610 = vld [vmem:[%s3217 + $0x88] sm:$0xf]
        %v3611 = vld [vmem:[%s3217 + $0x8c] sm:$0x1]
        %v3612 = vld [vmem:[%s3217 + $0x90] sm:$0xf]
        %v3613 = vld [vmem:[%s3217 + $0x94] sm:$0xf]
        %v3614 = vld [vmem:[%s3217 + $0x98] sm:$0x1]
        %v3615 = vld [vmem:[%s3217 + $0x9c] sm:$0xf]
        %v3616 = vld [vmem:[%s3217 + $0xa0] sm:$0xf]
        %v3617 = vld [vmem:[%s3217 + $0xa4] sm:$0x1]
        %v3618 = vld [vmem:[%s3217 + $0xa8] sm:$0xf]
        %v3619 = vld [vmem:[%s3217 + $0xac] sm:$0xf]
        %v3620 = vld [vmem:[%s3217 + $0xb0] sm:$0x1]
        %v3621 = vld [vmem:[%s3217 + $0xb4] sm:$0xf]
        %v3622 = vld [vmem:[%s3217 + $0xb8] sm:$0xf]
        %v3623 = vld [vmem:[%s3217 + $0xbc] sm:$0x1]
        %v3625 = vshrl.u32 %v3576, 16
        %v3627 = vrot.slane %v3625, 4
        %v3628 = vshll.u32 %v3576, 16
        %v3630 = vrot.slane %v3628, 5
        %v3631 = vor.u32 %v3627, %v3630
        %v3632 = vrot.slane %v3631, 4
        %v3634 = vshll.u32 %v3577, 16
        %v3636 = vrot.slane %v3634, 5
        %v3637 = vsel %vm264, %v3632, %v3636
        %v3638 = vshrl.u32 %v3577, 16
        %v3640 = vrot.slane %v3638, 4
        %v3641 = vor.u32 %v3640, %v3636
        %v3642 = vrot.slane %v3641, 4
        %v3644 = vshll.u32 %v3578, 16
        %v3646 = vrot.slane %v3644, 5
        %v3647 = vsel %vm264, %v3642, %v3646
        %v3649 = vshrl.u32 %v3579, 16
        %v3651 = vrot.slane %v3649, 4
        %v3652 = vshll.u32 %v3579, 16
        %v3654 = vrot.slane %v3652, 5
        %v3655 = vor.u32 %v3651, %v3654
        %v3656 = vrot.slane %v3655, 4
        %v3658 = vshll.u32 %v3580, 16
        %v3660 = vrot.slane %v3658, 5
        %v3661 = vsel %vm264, %v3656, %v3660
        %v3662 = vshrl.u32 %v3580, 16
        %v3664 = vrot.slane %v3662, 4
        %v3665 = vor.u32 %v3664, %v3660
        %v3666 = vrot.slane %v3665, 4
        %v3668 = vshll.u32 %v3581, 16
        %v3670 = vrot.slane %v3668, 5
        %v3671 = vsel %vm264, %v3666, %v3670
        %v3673 = vshrl.u32 %v3582, 16
        %v3675 = vrot.slane %v3673, 4
        %v3676 = vshll.u32 %v3582, 16
        %v3678 = vrot.slane %v3676, 5
        %v3679 = vor.u32 %v3675, %v3678
        %v3680 = vrot.slane %v3679, 4
        %v3682 = vshll.u32 %v3583, 16
        %v3684 = vrot.slane %v3682, 5
        %v3685 = vsel %vm264, %v3680, %v3684
        %v3686 = vshrl.u32 %v3583, 16
        %v3688 = vrot.slane %v3686, 4
        %v3689 = vor.u32 %v3688, %v3684
        %v3690 = vrot.slane %v3689, 4
        %v3692 = vshll.u32 %v3584, 16
        %v3694 = vrot.slane %v3692, 5
        %v3695 = vsel %vm264, %v3690, %v3694
        %v3697 = vshrl.u32 %v3585, 16
        %v3699 = vrot.slane %v3697, 4
        %v3700 = vshll.u32 %v3585, 16
        %v3702 = vrot.slane %v3700, 5
        %v3703 = vor.u32 %v3699, %v3702
        %v3704 = vrot.slane %v3703, 4
        %v3706 = vshll.u32 %v3586, 16
        %v3708 = vrot.slane %v3706, 5
        %v3709 = vsel %vm264, %v3704, %v3708
        %v3710 = vshrl.u32 %v3586, 16
        %v3712 = vrot.slane %v3710, 4
        %v3713 = vor.u32 %v3712, %v3708
        %v3714 = vrot.slane %v3713, 4
        %v3716 = vshll.u32 %v3587, 16
        %v3718 = vrot.slane %v3716, 5
        %v3719 = vsel %vm264, %v3714, %v3718
        %v3721 = vshrl.u32 %v3588, 16
        %v3723 = vrot.slane %v3721, 4
        %v3724 = vshll.u32 %v3588, 16
        %v3726 = vrot.slane %v3724, 5
        %v3727 = vor.u32 %v3723, %v3726
        %v3728 = vrot.slane %v3727, 4
        %v3730 = vshll.u32 %v3589, 16
        %v3732 = vrot.slane %v3730, 5
        %v3733 = vsel %vm264, %v3728, %v3732
        %v3734 = vshrl.u32 %v3589, 16
        %v3736 = vrot.slane %v3734, 4
        %v3737 = vor.u32 %v3736, %v3732
        %v3738 = vrot.slane %v3737, 4
        %v3740 = vshll.u32 %v3590, 16
        %v3742 = vrot.slane %v3740, 5
        %v3743 = vsel %vm264, %v3738, %v3742
        %v3745 = vshrl.u32 %v3591, 16
        %v3747 = vrot.slane %v3745, 4
        %v3748 = vshll.u32 %v3591, 16
        %v3750 = vrot.slane %v3748, 5
        %v3751 = vor.u32 %v3747, %v3750
        %v3752 = vrot.slane %v3751, 4
        %v3754 = vshll.u32 %v3592, 16
        %v3756 = vrot.slane %v3754, 5
        %v3757 = vsel %vm264, %v3752, %v3756
        %v3758 = vshrl.u32 %v3592, 16
        %v3760 = vrot.slane %v3758, 4
        %v3761 = vor.u32 %v3760, %v3756
        %v3762 = vrot.slane %v3761, 4
        %v3764 = vshll.u32 %v3593, 16
        %v3766 = vrot.slane %v3764, 5
        %v3767 = vsel %vm264, %v3762, %v3766
        %v3769 = vshrl.u32 %v3594, 16
        %v3771 = vrot.slane %v3769, 4
        %v3772 = vshll.u32 %v3594, 16
        %v3774 = vrot.slane %v3772, 5
        %v3775 = vor.u32 %v3771, %v3774
        %v3776 = vrot.slane %v3775, 4
        %v3778 = vshll.u32 %v3595, 16
        %v3780 = vrot.slane %v3778, 5
        %v3781 = vsel %vm264, %v3776, %v3780
        %v3782 = vshrl.u32 %v3595, 16
        %v3784 = vrot.slane %v3782, 4
        %v3785 = vor.u32 %v3784, %v3780
        %v3786 = vrot.slane %v3785, 4
        %v3788 = vshll.u32 %v3596, 16
        %v3790 = vrot.slane %v3788, 5
        %v3791 = vsel %vm264, %v3786, %v3790
        %v3793 = vshrl.u32 %v3597, 16
        %v3795 = vrot.slane %v3793, 4
        %v3796 = vshll.u32 %v3597, 16
        %v3798 = vrot.slane %v3796, 5
        %v3799 = vor.u32 %v3795, %v3798
        %v3800 = vrot.slane %v3799, 4
        %v3802 = vshll.u32 %v3598, 16
        %v3804 = vrot.slane %v3802, 5
        %v3805 = vsel %vm264, %v3800, %v3804
        %v3806 = vshrl.u32 %v3598, 16
        %v3808 = vrot.slane %v3806, 4
        %v3809 = vor.u32 %v3808, %v3804
        %v3810 = vrot.slane %v3809, 4
        %v3812 = vshll.u32 %v3599, 16
        %v3814 = vrot.slane %v3812, 5
        %v3815 = vsel %vm264, %v3810, %v3814
        %v3817 = vshrl.u32 %v3600, 16
        %v3819 = vrot.slane %v3817, 4
        %v3820 = vshll.u32 %v3600, 16
        %v3822 = vrot.slane %v3820, 5
        %v3823 = vor.u32 %v3819, %v3822
        %v3824 = vrot.slane %v3823, 4
        %v3826 = vshll.u32 %v3601, 16
        %v3828 = vrot.slane %v3826, 5
        %v3829 = vsel %vm264, %v3824, %v3828
        %v3830 = vshrl.u32 %v3601, 16
        %v3832 = vrot.slane %v3830, 4
        %v3833 = vor.u32 %v3832, %v3828
        %v3834 = vrot.slane %v3833, 4
        %v3836 = vshll.u32 %v3602, 16
        %v3838 = vrot.slane %v3836, 5
        %v3839 = vsel %vm264, %v3834, %v3838
        %v3841 = vshrl.u32 %v3603, 16
        %v3843 = vrot.slane %v3841, 4
        %v3844 = vshll.u32 %v3603, 16
        %v3846 = vrot.slane %v3844, 5
        %v3847 = vor.u32 %v3843, %v3846
        %v3848 = vrot.slane %v3847, 4
        %v3850 = vshll.u32 %v3604, 16
        %v3852 = vrot.slane %v3850, 5
        %v3853 = vsel %vm264, %v3848, %v3852
        %v3854 = vshrl.u32 %v3604, 16
        %v3856 = vrot.slane %v3854, 4
        %v3857 = vor.u32 %v3856, %v3852
        %v3858 = vrot.slane %v3857, 4
        %v3860 = vshll.u32 %v3605, 16
        %v3862 = vrot.slane %v3860, 5
        %v3863 = vsel %vm264, %v3858, %v3862
        %v3865 = vshrl.u32 %v3606, 16
        %v3867 = vrot.slane %v3865, 4
        %v3868 = vshll.u32 %v3606, 16
        %v3870 = vrot.slane %v3868, 5
        %v3871 = vor.u32 %v3867, %v3870
        %v3872 = vrot.slane %v3871, 4
        %v3874 = vshll.u32 %v3607, 16
        %v3876 = vrot.slane %v3874, 5
        %v3877 = vsel %vm264, %v3872, %v3876
        %v3878 = vshrl.u32 %v3607, 16
        %v3880 = vrot.slane %v3878, 4
        %v3881 = vor.u32 %v3880, %v3876
        %v3882 = vrot.slane %v3881, 4
        %v3884 = vshll.u32 %v3608, 16
        %v3886 = vrot.slane %v3884, 5
        %v3887 = vsel %vm264, %v3882, %v3886
        %v3889 = vshrl.u32 %v3609, 16
        %v3891 = vrot.slane %v3889, 4
        %v3892 = vshll.u32 %v3609, 16
        %v3894 = vrot.slane %v3892, 5
        %v3895 = vor.u32 %v3891, %v3894
        %v3896 = vrot.slane %v3895, 4
        %v3898 = vshll.u32 %v3610, 16
        %v3900 = vrot.slane %v3898, 5
        %v3901 = vsel %vm264, %v3896, %v3900
        %v3902 = vshrl.u32 %v3610, 16
        %v3904 = vrot.slane %v3902, 4
        %v3905 = vor.u32 %v3904, %v3900
        %v3906 = vrot.slane %v3905, 4
        %v3908 = vshll.u32 %v3611, 16
        %v3910 = vrot.slane %v3908, 5
        %v3911 = vsel %vm264, %v3906, %v3910
        %v3913 = vshrl.u32 %v3612, 16
        %v3915 = vrot.slane %v3913, 4
        %v3916 = vshll.u32 %v3612, 16
        %v3918 = vrot.slane %v3916, 5
        %v3919 = vor.u32 %v3915, %v3918
        %v3920 = vrot.slane %v3919, 4
        %v3922 = vshll.u32 %v3613, 16
        %v3924 = vrot.slane %v3922, 5
        %v3925 = vsel %vm264, %v3920, %v3924
        %v3926 = vshrl.u32 %v3613, 16
        %v3928 = vrot.slane %v3926, 4
        %v3929 = vor.u32 %v3928, %v3924
        %v3930 = vrot.slane %v3929, 4
        %v3932 = vshll.u32 %v3614, 16
        %v3934 = vrot.slane %v3932, 5
        %v3935 = vsel %vm264, %v3930, %v3934
        %v3937 = vshrl.u32 %v3615, 16
        %v3939 = vrot.slane %v3937, 4
        %v3940 = vshll.u32 %v3615, 16
        %v3942 = vrot.slane %v3940, 5
        %v3943 = vor.u32 %v3939, %v3942
        %v3944 = vrot.slane %v3943, 4
        %v3946 = vshll.u32 %v3616, 16
        %v3948 = vrot.slane %v3946, 5
        %v3949 = vsel %vm264, %v3944, %v3948
        %v3950 = vshrl.u32 %v3616, 16
        %v3952 = vrot.slane %v3950, 4
        %v3953 = vor.u32 %v3952, %v3948
        %v3954 = vrot.slane %v3953, 4
        %v3956 = vshll.u32 %v3617, 16
        %v3958 = vrot.slane %v3956, 5
        %v3959 = vsel %vm264, %v3954, %v3958
        %v3961 = vshrl.u32 %v3618, 16
        %v3963 = vrot.slane %v3961, 4
        %v3964 = vshll.u32 %v3618, 16
        %v3966 = vrot.slane %v3964, 5
        %v3967 = vor.u32 %v3963, %v3966
        %v3968 = vrot.slane %v3967, 4
        %v3970 = vshll.u32 %v3619, 16
        %v3972 = vrot.slane %v3970, 5
        %v3973 = vsel %vm264, %v3968, %v3972
        %v3974 = vshrl.u32 %v3619, 16
        %v3976 = vrot.slane %v3974, 4
        %v3977 = vor.u32 %v3976, %v3972
        %v3978 = vrot.slane %v3977, 4
        %v3980 = vshll.u32 %v3620, 16
        %v3982 = vrot.slane %v3980, 5
        %v3983 = vsel %vm264, %v3978, %v3982
        %v3985 = vshrl.u32 %v3621, 16
        %v3987 = vrot.slane %v3985, 4
        %v3988 = vshll.u32 %v3621, 16
        %v3990 = vrot.slane %v3988, 5
        %v3991 = vor.u32 %v3987, %v3990
        %v3992 = vrot.slane %v3991, 4
        %v3994 = vshll.u32 %v3622, 16
        %v3996 = vrot.slane %v3994, 5
        %v3997 = vsel %vm264, %v3992, %v3996
        %v3998 = vshrl.u32 %v3622, 16
        %v4000 = vrot.slane %v3998, 4
        %v4001 = vor.u32 %v4000, %v3996
        %v4002 = vrot.slane %v4001, 4
        %v4004 = vshll.u32 %v3623, 16
        %v4006 = vrot.slane %v4004, 5
        %v4007 = vsel %vm264, %v4002, %v4006
        %s4008 = scalar_lea.vmem %s1, 14
        %v4009 = vld [vmem:[%s4008] sm:$0x3]
        %v4010 = vunpack.c.l.b16 %v3637
        %v4011 = vunpack.c.l.b16 %v3647
        %v4012 = vunpack.c.l.b16 %v3661
        %v4013 = vunpack.c.l.b16 %v3671
        %v4014 = vunpack.c.l.b16 %v3685
        %v4015 = vunpack.c.l.b16 %v3695
        %v4016 = vunpack.c.l.b16 %v3709
        %v4017 = vunpack.c.l.b16 %v3719
        %v4018 = vunpack.c.l.b16 %v3733
        %v4019 = vunpack.c.l.b16 %v3743
        %v4020 = vunpack.c.l.b16 %v3757
        %v4021 = vunpack.c.l.b16 %v3767
        %v4022 = vunpack.c.l.b16 %v3781
        %v4023 = vunpack.c.l.b16 %v3791
        %v4024 = vunpack.c.l.b16 %v3805
        %v4025 = vunpack.c.l.b16 %v3815
        %v4026 = vunpack.c.l.b16 %v3829
        %v4027 = vunpack.c.l.b16 %v3839
        %v4028 = vunpack.c.l.b16 %v3853
        %v4029 = vunpack.c.l.b16 %v3863
        %v4030 = vunpack.c.l.b16 %v3877
        %v4031 = vunpack.c.l.b16 %v3887
        %v4032 = vunpack.c.l.b16 %v3901
        %v4033 = vunpack.c.l.b16 %v3911
        %v4034 = vunpack.c.l.b16 %v3925
        %v4035 = vunpack.c.l.b16 %v3935
        %v4036 = vunpack.c.l.b16 %v3949
        %v4037 = vunpack.c.l.b16 %v3959
        %v4038 = vunpack.c.l.b16 %v3973
        %v4039 = vunpack.c.l.b16 %v3983
        %v4040 = vunpack.c.l.b16 %v3997
        %v4041 = vunpack.c.l.b16 %v4007
        %v4042 = vpack.c.b16 %v4011, %v4010
        %v4043 = vpack.c.b16 %v4013, %v4012
        %v4044 = vpack.c.b16 %v4015, %v4014
        %v4045 = vpack.c.b16 %v4017, %v4016
        %v4046 = vpack.c.b16 %v4019, %v4018
        %v4047 = vpack.c.b16 %v4021, %v4020
        %v4048 = vpack.c.b16 %v4023, %v4022
        %v4049 = vpack.c.b16 %v4025, %v4024
        %v4050 = vpack.c.b16 %v4027, %v4026
        %v4051 = vpack.c.b16 %v4029, %v4028
        %v4052 = vpack.c.b16 %v4031, %v4030
        %v4053 = vpack.c.b16 %v4033, %v4032
        %v4054 = vpack.c.b16 %v4035, %v4034
        %v4055 = vpack.c.b16 %v4037, %v4036
        %v4056 = vpack.c.b16 %v4039, %v4038
        %v4057 = vpack.c.b16 %v4041, %v4040
        %v4059 = vsel %vm699, %v4042, 0
        %v4062 = vsel %vm699, %v4043, 0
        %v4065 = vsel %vm699, %v4044, 0
        %v4068 = vsel %vm699, %v4045, 0
        %v4071 = vsel %vm699, %v4046, 0
        %v4074 = vsel %vm699, %v4047, 0
        %v4077 = vsel %vm699, %v4048, 0
        %v4080 = vsel %vm699, %v4049, 0
        %v4083 = vsel %vm699, %v4050, 0
        %v4086 = vsel %vm699, %v4051, 0
        %v4089 = vsel %vm699, %v4052, 0
        %v4092 = vsel %vm699, %v4053, 0
        %v4095 = vsel %vm699, %v4054, 0
        %v4098 = vsel %vm699, %v4055, 0
        %v4101 = vsel %vm699, %v4056, 0
        %v4104 = vsel %vm699, %v4057, 0
        %v4107 = vsel %vm748, %v4009, 0
        %4109 = vmatprep.subr.bf16.mxu0 0
        %4110 = vmatpush1.bf16.msra.mxu0 %v4107
        %4111 = vmatprep.subr.bf16.mxu0 0
        %4112 = vmatpush1.bf16.msra.mxu0 0
        %4113 = vmatprep.subr.bf16.mxu0 0
        %4114 = vmatpush1.bf16.msra.mxu0 0
        %4115 = vmatprep.subr.bf16.mxu0 0
        %4116 = vmatpush1.bf16.msra.mxu0 0
        %4117 = vmatprep.subr.bf16.mxu0 0
        %4118 = vmatpush1.bf16.msra.mxu0 0
        %4119 = vmatprep.subr.bf16.mxu0 0
        %4120 = vmatpush1.bf16.msra.mxu0 0
        %4121 = vmatprep.subr.bf16.mxu0 0
        %4122 = vmatpush1.bf16.msra.mxu0 0
        %4123 = vmatprep.subr.bf16.mxu0 0
        %4124 = vmatpush1.bf16.msra.mxu0 0
        %4125 = vmatprep.subr.bf16.mxu0 0
        %4126 = vmatpush1.bf16.msra.mxu0 0
        %4127 = vmatprep.subr.bf16.mxu0 0
        %4128 = vmatpush1.bf16.msra.mxu0 0
        %4129 = vmatprep.subr.bf16.mxu0 0
        %4130 = vmatpush1.bf16.msra.mxu0 0
        %4131 = vmatprep.subr.bf16.mxu0 0
        %4132 = vmatpush1.bf16.msra.mxu0 0
        %4133 = vmatprep.subr.bf16.mxu0 0
        %4134 = vmatpush1.bf16.msra.mxu0 0
        %4135 = vmatprep.subr.bf16.mxu0 0
        %4136 = vmatpush1.bf16.msra.mxu0 0
        %4137 = vmatprep.subr.bf16.mxu0 0
        %4138 = vmatpush1.bf16.msra.mxu0 0
        %4139 = vmatprep.subr.bf16.mxu0 0
        %4140 = vmatpush1.bf16.msra.mxu0 0
        %4141 = vmatprep.mubr.bf16.mxu0 0
        %4142 = vmatmul.mubr.bf16.gmra.mrb[0].mxu0 %v4059
        %v4143 = vpop.f32.mrb[0].mxu0
        %v4144 = vadd.f32 0.0, %v4143
        %v4145 = vpop.f32.mrb[0].mxu0
        %v4146 = vpop.f32.mrb[0].mxu0
        %v4147 = vadd.f32 0.0, %v4146
        %v4148 = vpop.f32.mrb[0].mxu0
        %4149 = vmatprep.mubr.bf16.mxu0 0
        %4150 = vmatmul.mubr.bf16.gmra.mrb[0].mxu0 %v4062
        %v4151 = vpop.f32.mrb[0].mxu0
        %v4152 = vadd.f32 0.0, %v4151
        %v4153 = vpop.f32.mrb[0].mxu0
        %v4154 = vpop.f32.mrb[0].mxu0
        %v4155 = vadd.f32 0.0, %v4154
        %v4156 = vpop.f32.mrb[0].mxu0
        %4157 = vmatprep.mubr.bf16.mxu0 0
        %4158 = vmatmul.mubr.bf16.gmra.mrb[0].mxu0 %v4065
        %v4159 = vpop.f32.mrb[0].mxu0
        %v4160 = vadd.f32 0.0, %v4159
        %v4161 = vpop.f32.mrb[0].mxu0
        %v4162 = vpop.f32.mrb[0].mxu0
        %v4163 = vadd.f32 0.0, %v4162
        %v4164 = vpop.f32.mrb[0].mxu0
        %4165 = vmatprep.mubr.bf16.mxu0 0
        %4166 = vmatmul.mubr.bf16.gmra.mrb[0].mxu0 %v4068
        %v4167 = vpop.f32.mrb[0].mxu0
        %v4168 = vadd.f32 0.0, %v4167
        %v4169 = vpop.f32.mrb[0].mxu0
        %v4170 = vpop.f32.mrb[0].mxu0
        %v4171 = vadd.f32 0.0, %v4170
        %v4172 = vpop.f32.mrb[0].mxu0
        %4173 = vmatprep.mubr.bf16.mxu0 0
        %4174 = vmatmul.mubr.bf16.gmra.mrb[0].mxu0 %v4071
        %v4175 = vpop.f32.mrb[0].mxu0
        %v4176 = vadd.f32 0.0, %v4175
        %v4177 = vpop.f32.mrb[0].mxu0
        %v4178 = vpop.f32.mrb[0].mxu0
        %v4179 = vadd.f32 0.0, %v4178
        %v4180 = vpop.f32.mrb[0].mxu0
        %4181 = vmatprep.mubr.bf16.mxu0 0
        %4182 = vmatmul.mubr.bf16.gmra.mrb[0].mxu0 %v4074
        %v4183 = vpop.f32.mrb[0].mxu0
        %v4184 = vadd.f32 0.0, %v4183
        %v4185 = vpop.f32.mrb[0].mxu0
        %v4186 = vpop.f32.mrb[0].mxu0
        %v4187 = vadd.f32 0.0, %v4186
        %v4188 = vpop.f32.mrb[0].mxu0
        %4189 = vmatprep.mubr.bf16.mxu0 0
        %4190 = vmatmul.mubr.bf16.gmra.mrb[0].mxu0 %v4077
        %v4191 = vpop.f32.mrb[0].mxu0
        %v4192 = vadd.f32 0.0, %v4191
        %v4193 = vpop.f32.mrb[0].mxu0
        %v4194 = vpop.f32.mrb[0].mxu0
        %v4195 = vadd.f32 0.0, %v4194
        %v4196 = vpop.f32.mrb[0].mxu0
        %4197 = vmatprep.mubr.bf16.mxu0 0
        %4198 = vmatmul.mubr.bf16.gmra.mrb[0].mxu0 %v4080
        %v4199 = vpop.f32.mrb[0].mxu0
        %v4200 = vadd.f32 0.0, %v4199
        %v4201 = vpop.f32.mrb[0].mxu0
        %v4202 = vpop.f32.mrb[0].mxu0
        %v4203 = vadd.f32 0.0, %v4202
        %v4204 = vpop.f32.mrb[0].mxu0
        %4205 = vmatprep.mubr.bf16.mxu0 0
        %4206 = vmatmul.mubr.bf16.gmra.mrb[0].mxu0 %v4083
        %v4207 = vpop.f32.mrb[0].mxu0
        %v4208 = vadd.f32 0.0, %v4207
        %v4209 = vpop.f32.mrb[0].mxu0
        %v4210 = vpop.f32.mrb[0].mxu0
        %v4211 = vadd.f32 0.0, %v4210
        %v4212 = vpop.f32.mrb[0].mxu0
        %4213 = vmatprep.mubr.bf16.mxu0 0
        %4214 = vmatmul.mubr.bf16.gmra.mrb[0].mxu0 %v4086
        %v4215 = vpop.f32.mrb[0].mxu0
        %v4216 = vadd.f32 0.0, %v4215
        %v4217 = vpop.f32.mrb[0].mxu0
        %v4218 = vpop.f32.mrb[0].mxu0
        %v4219 = vadd.f32 0.0, %v4218
        %v4220 = vpop.f32.mrb[0].mxu0
        %4221 = vmatprep.mubr.bf16.mxu0 0
        %4222 = vmatmul.mubr.bf16.gmra.mrb[0].mxu0 %v4089
        %v4223 = vpop.f32.mrb[0].mxu0
        %v4224 = vadd.f32 0.0, %v4223
        %v4225 = vpop.f32.mrb[0].mxu0
        %v4226 = vpop.f32.mrb[0].mxu0
        %v4227 = vadd.f32 0.0, %v4226
        %v4228 = vpop.f32.mrb[0].mxu0
        %4229 = vmatprep.mubr.bf16.mxu0 0
        %4230 = vmatmul.mubr.bf16.gmra.mrb[0].mxu0 %v4092
        %v4231 = vpop.f32.mrb[0].mxu0
        %v4232 = vadd.f32 0.0, %v4231
        %v4233 = vpop.f32.mrb[0].mxu0
        %v4234 = vpop.f32.mrb[0].mxu0
        %v4235 = vadd.f32 0.0, %v4234
        %v4236 = vpop.f32.mrb[0].mxu0
        %4237 = vmatprep.mubr.bf16.mxu0 0
        %4238 = vmatmul.mubr.bf16.gmra.mrb[0].mxu0 %v4095
        %v4239 = vpop.f32.mrb[0].mxu0
        %v4240 = vadd.f32 0.0, %v4239
        %v4241 = vpop.f32.mrb[0].mxu0
        %v4242 = vpop.f32.mrb[0].mxu0
        %v4243 = vadd.f32 0.0, %v4242
        %v4244 = vpop.f32.mrb[0].mxu0
        %4245 = vmatprep.mubr.bf16.mxu0 0
        %4246 = vmatmul.mubr.bf16.gmra.mrb[0].mxu0 %v4098
        %v4247 = vpop.f32.mrb[0].mxu0
        %v4248 = vadd.f32 0.0, %v4247
        %v4249 = vpop.f32.mrb[0].mxu0
        %v4250 = vpop.f32.mrb[0].mxu0
        %v4251 = vadd.f32 0.0, %v4250
        %v4252 = vpop.f32.mrb[0].mxu0
        %4253 = vmatprep.mubr.bf16.mxu0 0
        %4254 = vmatmul.mubr.bf16.gmra.mrb[0].mxu0 %v4101
        %v4255 = vpop.f32.mrb[0].mxu0
        %v4256 = vadd.f32 0.0, %v4255
        %v4257 = vpop.f32.mrb[0].mxu0
        %v4258 = vpop.f32.mrb[0].mxu0
        %v4259 = vadd.f32 0.0, %v4258
        %v4260 = vpop.f32.mrb[0].mxu0
        %4261 = vmatprep.mubr.bf16.mxu0 0
        %4262 = vmatmul.mubr.bf16.gmra.mrb[0].mxu0 %v4104
        %v4263 = vpop.f32.mrb[0].mxu0
        %v4264 = vadd.f32 0.0, %v4263
        %v4265 = vpop.f32.mrb[0].mxu0
        %v4266 = vpop.f32.mrb[0].mxu0
        %v4267 = vadd.f32 0.0, %v4266
        %v4268 = vpop.f32.mrb[0].mxu0
        %4269 = vdwg.mxu0
        %v4270 = vadd.f32 %v3544, %v4144
        %v4271 = vadd.f32 %v3545, %v4147
        %v4272 = vadd.f32 %v3546, %v4152
        %v4273 = vadd.f32 %v3547, %v4155
        %v4274 = vadd.f32 %v3548, %v4160
        %v4275 = vadd.f32 %v3549, %v4163
        %v4276 = vadd.f32 %v3550, %v4168
        %v4277 = vadd.f32 %v3551, %v4171
        %v4278 = vadd.f32 %v3552, %v4176
        %v4279 = vadd.f32 %v3553, %v4179
        %v4280 = vadd.f32 %v3554, %v4184
        %v4281 = vadd.f32 %v3555, %v4187
        %v4282 = vadd.f32 %v3556, %v4192
        %v4283 = vadd.f32 %v3557, %v4195
        %v4284 = vadd.f32 %v3558, %v4200
        %v4285 = vadd.f32 %v3559, %v4203
        %v4286 = vadd.f32 %v3560, %v4208
        %v4287 = vadd.f32 %v3561, %v4211
        %v4288 = vadd.f32 %v3562, %v4216
        %v4289 = vadd.f32 %v3563, %v4219
        %v4290 = vadd.f32 %v3564, %v4224
        %v4291 = vadd.f32 %v3565, %v4227
        %v4292 = vadd.f32 %v3566, %v4232
        %v4293 = vadd.f32 %v3567, %v4235
        %v4294 = vadd.f32 %v3568, %v4240
        %v4295 = vadd.f32 %v3569, %v4243
        %v4296 = vadd.f32 %v3570, %v4248
        %v4297 = vadd.f32 %v3571, %v4251
        %v4298 = vadd.f32 %v3572, %v4256
        %v4299 = vadd.f32 %v3573, %v4259
        %v4300 = vadd.f32 %v3574, %v4264
        %v4301 = vadd.f32 %v3575, %v4267
        %v4302 = vld [vmem:[%s3217] sm:$0xe]
        %v4303 = vld [vmem:[%s3217 + $0xc] sm:$0xe]
        %v4304 = vld [vmem:[%s3217 + $0x18] sm:$0xe]
        %v4305 = vld [vmem:[%s3217 + $0x24] sm:$0xe]
        %v4306 = vld [vmem:[%s3217 + $0x30] sm:$0xe]
        %v4307 = vld [vmem:[%s3217 + $0x3c] sm:$0xe]
        %v4308 = vld [vmem:[%s3217 + $0x48] sm:$0xe]
        %v4309 = vld [vmem:[%s3217 + $0x54] sm:$0xe]
        %v4310 = vld [vmem:[%s3217 + $0x60] sm:$0xe]
        %v4311 = vld [vmem:[%s3217 + $0x6c] sm:$0xe]
        %v4312 = vld [vmem:[%s3217 + $0x78] sm:$0xe]
        %v4313 = vld [vmem:[%s3217 + $0x84] sm:$0xe]
        %v4314 = vld [vmem:[%s3217 + $0x90] sm:$0xe]
        %v4315 = vld [vmem:[%s3217 + $0x9c] sm:$0xe]
        %v4316 = vld [vmem:[%s3217 + $0xa8] sm:$0xe]
        %v4317 = vld [vmem:[%s3217 + $0xb4] sm:$0xe]
        %v4366 = vrot.slane %v4302, 5
        %v4367 = vrot.slane %v4366, 4
        %v4368 = vrot.slane %v3577, 5
        %v4369 = vsel %vm1255, %v4367, %v4368
        %v4370 = vrot.slane %v4368, 4
        %v4371 = vrot.slane %v3578, 5
        %v4372 = vsel %vm1255, %v4370, %v4371
        %v4373 = vrot.slane %v4303, 5
        %v4374 = vrot.slane %v4373, 4
        %v4375 = vrot.slane %v3580, 5
        %v4376 = vsel %vm1255, %v4374, %v4375
        %v4377 = vrot.slane %v4375, 4
        %v4378 = vrot.slane %v3581, 5
        %v4379 = vsel %vm1255, %v4377, %v4378
        %v4380 = vrot.slane %v4304, 5
        %v4381 = vrot.slane %v4380, 4
        %v4382 = vrot.slane %v3583, 5
        %v4383 = vsel %vm1255, %v4381, %v4382
        %v4384 = vrot.slane %v4382, 4
        %v4385 = vrot.slane %v3584, 5
        %v4386 = vsel %vm1255, %v4384, %v4385
        %v4387 = vrot.slane %v4305, 5
        %v4388 = vrot.slane %v4387, 4
        %v4389 = vrot.slane %v3586, 5
        %v4390 = vsel %vm1255, %v4388, %v4389
        %v4391 = vrot.slane %v4389, 4
        %v4392 = vrot.slane %v3587, 5
        %v4393 = vsel %vm1255, %v4391, %v4392
        %v4394 = vrot.slane %v4306, 5
        %v4395 = vrot.slane %v4394, 4
        %v4396 = vrot.slane %v3589, 5
        %v4397 = vsel %vm1255, %v4395, %v4396
        %v4398 = vrot.slane %v4396, 4
        %v4399 = vrot.slane %v3590, 5
        %v4400 = vsel %vm1255, %v4398, %v4399
        %v4401 = vrot.slane %v4307, 5
        %v4402 = vrot.slane %v4401, 4
        %v4403 = vrot.slane %v3592, 5
        %v4404 = vsel %vm1255, %v4402, %v4403
        %v4405 = vrot.slane %v4403, 4
        %v4406 = vrot.slane %v3593, 5
        %v4407 = vsel %vm1255, %v4405, %v4406
        %v4408 = vrot.slane %v4308, 5
        %v4409 = vrot.slane %v4408, 4
        %v4410 = vrot.slane %v3595, 5
        %v4411 = vsel %vm1255, %v4409, %v4410
        %v4412 = vrot.slane %v4410, 4
        %v4413 = vrot.slane %v3596, 5
        %v4414 = vsel %vm1255, %v4412, %v4413
        %v4415 = vrot.slane %v4309, 5
        %v4416 = vrot.slane %v4415, 4
        %v4417 = vrot.slane %v3598, 5
        %v4418 = vsel %vm1255, %v4416, %v4417
        %v4419 = vrot.slane %v4417, 4
        %v4420 = vrot.slane %v3599, 5
        %v4421 = vsel %vm1255, %v4419, %v4420
        %v4422 = vrot.slane %v4310, 5
        %v4423 = vrot.slane %v4422, 4
        %v4424 = vrot.slane %v3601, 5
        %v4425 = vsel %vm1255, %v4423, %v4424
        %v4426 = vrot.slane %v4424, 4
        %v4427 = vrot.slane %v3602, 5
        %v4428 = vsel %vm1255, %v4426, %v4427
        %v4429 = vrot.slane %v4311, 5
        %v4430 = vrot.slane %v4429, 4
        %v4431 = vrot.slane %v3604, 5
        %v4432 = vsel %vm1255, %v4430, %v4431
        %v4433 = vrot.slane %v4431, 4
        %v4434 = vrot.slane %v3605, 5
        %v4435 = vsel %vm1255, %v4433, %v4434
        %v4436 = vrot.slane %v4312, 5
        %v4437 = vrot.slane %v4436, 4
        %v4438 = vrot.slane %v3607, 5
        %v4439 = vsel %vm1255, %v4437, %v4438
        %v4440 = vrot.slane %v4438, 4
        %v4441 = vrot.slane %v3608, 5
        %v4442 = vsel %vm1255, %v4440, %v4441
        %v4443 = vrot.slane %v4313, 5
        %v4444 = vrot.slane %v4443, 4
        %v4445 = vrot.slane %v3610, 5
        %v4446 = vsel %vm1255, %v4444, %v4445
        %v4447 = vrot.slane %v4445, 4
        %v4448 = vrot.slane %v3611, 5
        %v4449 = vsel %vm1255, %v4447, %v4448
        %v4450 = vrot.slane %v4314, 5
        %v4451 = vrot.slane %v4450, 4
        %v4452 = vrot.slane %v3613, 5
        %v4453 = vsel %vm1255, %v4451, %v4452
        %v4454 = vrot.slane %v4452, 4
        %v4455 = vrot.slane %v3614, 5
        %v4456 = vsel %vm1255, %v4454, %v4455
        %v4457 = vrot.slane %v4315, 5
        %v4458 = vrot.slane %v4457, 4
        %v4459 = vrot.slane %v3616, 5
        %v4460 = vsel %vm1255, %v4458, %v4459
        %v4461 = vrot.slane %v4459, 4
        %v4462 = vrot.slane %v3617, 5
        %v4463 = vsel %vm1255, %v4461, %v4462
        %v4464 = vrot.slane %v4316, 5
        %v4465 = vrot.slane %v4464, 4
        %v4466 = vrot.slane %v3619, 5
        %v4467 = vsel %vm1255, %v4465, %v4466
        %v4468 = vrot.slane %v4466, 4
        %v4469 = vrot.slane %v3620, 5
        %v4470 = vsel %vm1255, %v4468, %v4469
        %v4471 = vrot.slane %v4317, 5
        %v4472 = vrot.slane %v4471, 4
        %v4473 = vrot.slane %v3622, 5
        %v4474 = vsel %vm1255, %v4472, %v4473
        %v4475 = vrot.slane %v4473, 4
        %v4476 = vrot.slane %v3623, 5
        %v4477 = vsel %vm1255, %v4475, %v4476
        %s4478 = scalar_lea.vmem %s1, 16
        %v4479 = vld [vmem:[%s4478] sm:$0x3]
        %v4480 = vunpack.c.l.b16 %v4369
        %v4481 = vunpack.c.l.b16 %v4372
        %v4482 = vunpack.c.l.b16 %v4376
        %v4483 = vunpack.c.l.b16 %v4379
        %v4484 = vunpack.c.l.b16 %v4383
        %v4485 = vunpack.c.l.b16 %v4386
        %v4486 = vunpack.c.l.b16 %v4390
        %v4487 = vunpack.c.l.b16 %v4393
        %v4488 = vunpack.c.l.b16 %v4397
        %v4489 = vunpack.c.l.b16 %v4400
        %v4490 = vunpack.c.l.b16 %v4404
        %v4491 = vunpack.c.l.b16 %v4407
        %v4492 = vunpack.c.l.b16 %v4411
        %v4493 = vunpack.c.l.b16 %v4414
        %v4494 = vunpack.c.l.b16 %v4418
        %v4495 = vunpack.c.l.b16 %v4421
        %v4496 = vunpack.c.l.b16 %v4425
        %v4497 = vunpack.c.l.b16 %v4428
        %v4498 = vunpack.c.l.b16 %v4432
        %v4499 = vunpack.c.l.b16 %v4435
        %v4500 = vunpack.c.l.b16 %v4439
        %v4501 = vunpack.c.l.b16 %v4442
        %v4502 = vunpack.c.l.b16 %v4446
        %v4503 = vunpack.c.l.b16 %v4449
        %v4504 = vunpack.c.l.b16 %v4453
        %v4505 = vunpack.c.l.b16 %v4456
        %v4506 = vunpack.c.l.b16 %v4460
        %v4507 = vunpack.c.l.b16 %v4463
        %v4508 = vunpack.c.l.b16 %v4467
        %v4509 = vunpack.c.l.b16 %v4470
        %v4510 = vunpack.c.l.b16 %v4474
        %v4511 = vunpack.c.l.b16 %v4477
        %v4512 = vpack.c.b16 %v4481, %v4480
        %v4513 = vpack.c.b16 %v4483, %v4482
        %v4514 = vpack.c.b16 %v4485, %v4484
        %v4515 = vpack.c.b16 %v4487, %v4486
        %v4516 = vpack.c.b16 %v4489, %v4488
        %v4517 = vpack.c.b16 %v4491, %v4490
        %v4518 = vpack.c.b16 %v4493, %v4492
        %v4519 = vpack.c.b16 %v4495, %v4494
        %v4520 = vpack.c.b16 %v4497, %v4496
        %v4521 = vpack.c.b16 %v4499, %v4498
        %v4522 = vpack.c.b16 %v4501, %v4500
        %v4523 = vpack.c.b16 %v4503, %v4502
        %v4524 = vpack.c.b16 %v4505, %v4504
        %v4525 = vpack.c.b16 %v4507, %v4506
        %v4526 = vpack.c.b16 %v4509, %v4508
        %v4527 = vpack.c.b16 %v4511, %v4510
        %v4529 = vsel %vm699, %v4512, 0
        %v4532 = vsel %vm699, %v4513, 0
        %v4535 = vsel %vm699, %v4514, 0
        %v4538 = vsel %vm699, %v4515, 0
        %v4541 = vsel %vm699, %v4516, 0
        %v4544 = vsel %vm699, %v4517, 0
        %v4547 = vsel %vm699, %v4518, 0
        %v4550 = vsel %vm699, %v4519, 0
        %v4553 = vsel %vm699, %v4520, 0
        %v4556 = vsel %vm699, %v4521, 0
        %v4559 = vsel %vm699, %v4522, 0
        %v4562 = vsel %vm699, %v4523, 0
        %v4565 = vsel %vm699, %v4524, 0
        %v4568 = vsel %vm699, %v4525, 0
        %v4571 = vsel %vm699, %v4526, 0
        %v4574 = vsel %vm699, %v4527, 0
        %v4577 = vsel %vm748, %v4479, 0
        %4579 = vmatprep.subr.bf16.mxu0 0
        %4580 = vmatpush1.bf16.msra.mxu0 %v4577
        %4581 = vmatprep.subr.bf16.mxu0 0
        %4582 = vmatpush1.bf16.msra.mxu0 0
        %4583 = vmatprep.subr.bf16.mxu0 0
        %4584 = vmatpush1.bf16.msra.mxu0 0
        %4585 = vmatprep.subr.bf16.mxu0 0
        %4586 = vmatpush1.bf16.msra.mxu0 0
        %4587 = vmatprep.subr.bf16.mxu0 0
        %4588 = vmatpush1.bf16.msra.mxu0 0
        %4589 = vmatprep.subr.bf16.mxu0 0
        %4590 = vmatpush1.bf16.msra.mxu0 0
        %4591 = vmatprep.subr.bf16.mxu0 0
        %4592 = vmatpush1.bf16.msra.mxu0 0
        %4593 = vmatprep.subr.bf16.mxu0 0
        %4594 = vmatpush1.bf16.msra.mxu0 0
        %4595 = vmatprep.subr.bf16.mxu0 0
        %4596 = vmatpush1.bf16.msra.mxu0 0
        %4597 = vmatprep.subr.bf16.mxu0 0
        %4598 = vmatpush1.bf16.msra.mxu0 0
        %4599 = vmatprep.subr.bf16.mxu0 0
        %4600 = vmatpush1.bf16.msra.mxu0 0
        %4601 = vmatprep.subr.bf16.mxu0 0
        %4602 = vmatpush1.bf16.msra.mxu0 0
        %4603 = vmatprep.subr.bf16.mxu0 0
        %4604 = vmatpush1.bf16.msra.mxu0 0
        %4605 = vmatprep.subr.bf16.mxu0 0
        %4606 = vmatpush1.bf16.msra.mxu0 0
        %4607 = vmatprep.subr.bf16.mxu0 0
        %4608 = vmatpush1.bf16.msra.mxu0 0
        %4609 = vmatprep.subr.bf16.mxu0 0
        %4610 = vmatpush1.bf16.msra.mxu0 0
        %4611 = vmatprep.mubr.bf16.mxu0 0
        %4612 = vmatmul.mubr.bf16.gmra.mrb[0].mxu0 %v4529
        %v4613 = vpop.f32.mrb[0].mxu0
        %v4614 = vadd.f32 0.0, %v4613
        %v4615 = vpop.f32.mrb[0].mxu0
        %v4616 = vpop.f32.mrb[0].mxu0
        %v4617 = vadd.f32 0.0, %v4616
        %v4618 = vpop.f32.mrb[0].mxu0
        %4619 = vmatprep.mubr.bf16.mxu0 0
        %4620 = vmatmul.mubr.bf16.gmra.mrb[0].mxu0 %v4532
        %v4621 = vpop.f32.mrb[0].mxu0
        %v4622 = vadd.f32 0.0, %v4621
        %v4623 = vpop.f32.mrb[0].mxu0
        %v4624 = vpop.f32.mrb[0].mxu0
        %v4625 = vadd.f32 0.0, %v4624
        %v4626 = vpop.f32.mrb[0].mxu0
        %4627 = vmatprep.mubr.bf16.mxu0 0
        %4628 = vmatmul.mubr.bf16.gmra.mrb[0].mxu0 %v4535
        %v4629 = vpop.f32.mrb[0].mxu0
        %v4630 = vadd.f32 0.0, %v4629
        %v4631 = vpop.f32.mrb[0].mxu0
        %v4632 = vpop.f32.mrb[0].mxu0
        %v4633 = vadd.f32 0.0, %v4632
        %v4634 = vpop.f32.mrb[0].mxu0
        %4635 = vmatprep.mubr.bf16.mxu0 0
        %4636 = vmatmul.mubr.bf16.gmra.mrb[0].mxu0 %v4538
        %v4637 = vpop.f32.mrb[0].mxu0
        %v4638 = vadd.f32 0.0, %v4637
        %v4639 = vpop.f32.mrb[0].mxu0
        %v4640 = vpop.f32.mrb[0].mxu0
        %v4641 = vadd.f32 0.0, %v4640
        %v4642 = vpop.f32.mrb[0].mxu0
        %4643 = vmatprep.mubr.bf16.mxu0 0
        %4644 = vmatmul.mubr.bf16.gmra.mrb[0].mxu0 %v4541
        %v4645 = vpop.f32.mrb[0].mxu0
        %v4646 = vadd.f32 0.0, %v4645
        %v4647 = vpop.f32.mrb[0].mxu0
        %v4648 = vpop.f32.mrb[0].mxu0
        %v4649 = vadd.f32 0.0, %v4648
        %v4650 = vpop.f32.mrb[0].mxu0
        %4651 = vmatprep.mubr.bf16.mxu0 0
        %4652 = vmatmul.mubr.bf16.gmra.mrb[0].mxu0 %v4544
        %v4653 = vpop.f32.mrb[0].mxu0
        %v4654 = vadd.f32 0.0, %v4653
        %v4655 = vpop.f32.mrb[0].mxu0
        %v4656 = vpop.f32.mrb[0].mxu0
        %v4657 = vadd.f32 0.0, %v4656
        %v4658 = vpop.f32.mrb[0].mxu0
        %4659 = vmatprep.mubr.bf16.mxu0 0
        %4660 = vmatmul.mubr.bf16.gmra.mrb[0].mxu0 %v4547
        %v4661 = vpop.f32.mrb[0].mxu0
        %v4662 = vadd.f32 0.0, %v4661
        %v4663 = vpop.f32.mrb[0].mxu0
        %v4664 = vpop.f32.mrb[0].mxu0
        %v4665 = vadd.f32 0.0, %v4664
        %v4666 = vpop.f32.mrb[0].mxu0
        %4667 = vmatprep.mubr.bf16.mxu0 0
        %4668 = vmatmul.mubr.bf16.gmra.mrb[0].mxu0 %v4550
        %v4669 = vpop.f32.mrb[0].mxu0
        %v4670 = vadd.f32 0.0, %v4669
        %v4671 = vpop.f32.mrb[0].mxu0
        %v4672 = vpop.f32.mrb[0].mxu0
        %v4673 = vadd.f32 0.0, %v4672
        %v4674 = vpop.f32.mrb[0].mxu0
        %4675 = vmatprep.mubr.bf16.mxu0 0
        %4676 = vmatmul.mubr.bf16.gmra.mrb[0].mxu0 %v4553
        %v4677 = vpop.f32.mrb[0].mxu0
        %v4678 = vadd.f32 0.0, %v4677
        %v4679 = vpop.f32.mrb[0].mxu0
        %v4680 = vpop.f32.mrb[0].mxu0
        %v4681 = vadd.f32 0.0, %v4680
        %v4682 = vpop.f32.mrb[0].mxu0
        %4683 = vmatprep.mubr.bf16.mxu0 0
        %4684 = vmatmul.mubr.bf16.gmra.mrb[0].mxu0 %v4556
        %v4685 = vpop.f32.mrb[0].mxu0
        %v4686 = vadd.f32 0.0, %v4685
        %v4687 = vpop.f32.mrb[0].mxu0
        %v4688 = vpop.f32.mrb[0].mxu0
        %v4689 = vadd.f32 0.0, %v4688
        %v4690 = vpop.f32.mrb[0].mxu0
        %4691 = vmatprep.mubr.bf16.mxu0 0
        %4692 = vmatmul.mubr.bf16.gmra.mrb[0].mxu0 %v4559
        %v4693 = vpop.f32.mrb[0].mxu0
        %v4694 = vadd.f32 0.0, %v4693
        %v4695 = vpop.f32.mrb[0].mxu0
        %v4696 = vpop.f32.mrb[0].mxu0
        %v4697 = vadd.f32 0.0, %v4696
        %v4698 = vpop.f32.mrb[0].mxu0
        %4699 = vmatprep.mubr.bf16.mxu0 0
        %4700 = vmatmul.mubr.bf16.gmra.mrb[0].mxu0 %v4562
        %v4701 = vpop.f32.mrb[0].mxu0
        %v4702 = vadd.f32 0.0, %v4701
        %v4703 = vpop.f32.mrb[0].mxu0
        %v4704 = vpop.f32.mrb[0].mxu0
        %v4705 = vadd.f32 0.0, %v4704
        %v4706 = vpop.f32.mrb[0].mxu0
        %4707 = vmatprep.mubr.bf16.mxu0 0
        %4708 = vmatmul.mubr.bf16.gmra.mrb[0].mxu0 %v4565
        %v4709 = vpop.f32.mrb[0].mxu0
        %v4710 = vadd.f32 0.0, %v4709
        %v4711 = vpop.f32.mrb[0].mxu0
        %v4712 = vpop.f32.mrb[0].mxu0
        %v4713 = vadd.f32 0.0, %v4712
        %v4714 = vpop.f32.mrb[0].mxu0
        %4715 = vmatprep.mubr.bf16.mxu0 0
        %4716 = vmatmul.mubr.bf16.gmra.mrb[0].mxu0 %v4568
        %v4717 = vpop.f32.mrb[0].mxu0
        %v4718 = vadd.f32 0.0, %v4717
        %v4719 = vpop.f32.mrb[0].mxu0
        %v4720 = vpop.f32.mrb[0].mxu0
        %v4721 = vadd.f32 0.0, %v4720
        %v4722 = vpop.f32.mrb[0].mxu0
        %4723 = vmatprep.mubr.bf16.mxu0 0
        %4724 = vmatmul.mubr.bf16.gmra.mrb[0].mxu0 %v4571
        %v4725 = vpop.f32.mrb[0].mxu0
        %v4726 = vadd.f32 0.0, %v4725
        %v4727 = vpop.f32.mrb[0].mxu0
        %v4728 = vpop.f32.mrb[0].mxu0
        %v4729 = vadd.f32 0.0, %v4728
        %v4730 = vpop.f32.mrb[0].mxu0
        %4731 = vmatprep.mubr.bf16.mxu0 0
        %4732 = vmatmul.mubr.bf16.gmra.mrb[0].mxu0 %v4574
        %v4733 = vpop.f32.mrb[0].mxu0
        %v4734 = vadd.f32 0.0, %v4733
        %v4735 = vpop.f32.mrb[0].mxu0
        %v4736 = vpop.f32.mrb[0].mxu0
        %v4737 = vadd.f32 0.0, %v4736
        %v4738 = vpop.f32.mrb[0].mxu0
        %4739 = vdwg.mxu0
        %v4740 = vadd.f32 %v4270, %v4614
        %v4741 = vadd.f32 %v4271, %v4617
        %v4742 = vadd.f32 %v4272, %v4622
        %v4743 = vadd.f32 %v4273, %v4625
        %v4744 = vadd.f32 %v4274, %v4630
        %v4745 = vadd.f32 %v4275, %v4633
        %v4746 = vadd.f32 %v4276, %v4638
        %v4747 = vadd.f32 %v4277, %v4641
        %v4748 = vadd.f32 %v4278, %v4646
        %v4749 = vadd.f32 %v4279, %v4649
        %v4750 = vadd.f32 %v4280, %v4654
        %v4751 = vadd.f32 %v4281, %v4657
        %v4752 = vadd.f32 %v4282, %v4662
        %v4753 = vadd.f32 %v4283, %v4665
        %v4754 = vadd.f32 %v4284, %v4670
        %v4755 = vadd.f32 %v4285, %v4673
        %v4756 = vadd.f32 %v4286, %v4678
        %v4757 = vadd.f32 %v4287, %v4681
        %v4758 = vadd.f32 %v4288, %v4686
        %v4759 = vadd.f32 %v4289, %v4689
        %v4760 = vadd.f32 %v4290, %v4694
        %v4761 = vadd.f32 %v4291, %v4697
        %v4762 = vadd.f32 %v4292, %v4702
        %v4763 = vadd.f32 %v4293, %v4705
        %v4764 = vadd.f32 %v4294, %v4710
        %v4765 = vadd.f32 %v4295, %v4713
        %v4766 = vadd.f32 %v4296, %v4718
        %v4767 = vadd.f32 %v4297, %v4721
        %v4768 = vadd.f32 %v4298, %v4726
        %v4769 = vadd.f32 %v4299, %v4729
        %v4770 = vadd.f32 %v4300, %v4734
        %v4771 = vadd.f32 %v4301, %v4737
        %4772 = vst [vmem:[%s194] sm:$0xff] %v4740
        %4773 = vst [vmem:[%s194 + $0x8] sm:$0xff] %v4741
        %4774 = vst [vmem:[%s194 + $0x10] sm:$0xff] %v4742
        %4775 = vst [vmem:[%s194 + $0x18] sm:$0xff] %v4743
        %4776 = vst [vmem:[%s194 + $0x20] sm:$0xff] %v4744
        %4777 = vst [vmem:[%s194 + $0x28] sm:$0xff] %v4745
        %4778 = vst [vmem:[%s194 + $0x30] sm:$0xff] %v4746
        %4779 = vst [vmem:[%s194 + $0x38] sm:$0xff] %v4747
        %4780 = vst [vmem:[%s194 + $0x40] sm:$0xff] %v4748
        %4781 = vst [vmem:[%s194 + $0x48] sm:$0xff] %v4749
        %4782 = vst [vmem:[%s194 + $0x50] sm:$0xff] %v4750
        %4783 = vst [vmem:[%s194 + $0x58] sm:$0xff] %v4751
        %4784 = vst [vmem:[%s194 + $0x60] sm:$0xff] %v4752
        %4785 = vst [vmem:[%s194 + $0x68] sm:$0xff] %v4753
        %4786 = vst [vmem:[%s194 + $0x70] sm:$0xff] %v4754
        %4787 = vst [vmem:[%s194 + $0x78] sm:$0xff] %v4755
        %4788 = vst [vmem:[%s194 + $0x80] sm:$0xff] %v4756
        %4789 = vst [vmem:[%s194 + $0x88] sm:$0xff] %v4757
        %4790 = vst [vmem:[%s194 + $0x90] sm:$0xff] %v4758
        %4791 = vst [vmem:[%s194 + $0x98] sm:$0xff] %v4759
        %4792 = vst [vmem:[%s194 + $0xa0] sm:$0xff] %v4760
        %4793 = vst [vmem:[%s194 + $0xa8] sm:$0xff] %v4761
        %4794 = vst [vmem:[%s194 + $0xb0] sm:$0xff] %v4762
        %4795 = vst [vmem:[%s194 + $0xb8] sm:$0xff] %v4763
        %4796 = vst [vmem:[%s194 + $0xc0] sm:$0xff] %v4764
        %4797 = vst [vmem:[%s194 + $0xc8] sm:$0xff] %v4765
        %4798 = vst [vmem:[%s194 + $0xd0] sm:$0xff] %v4766
        %4799 = vst [vmem:[%s194 + $0xd8] sm:$0xff] %v4767
        %4800 = vst [vmem:[%s194 + $0xe0] sm:$0xff] %v4768
        %4801 = vst [vmem:[%s194 + $0xe8] sm:$0xff] %v4769
        %4802 = vst [vmem:[%s194 + $0xf0] sm:$0xff] %v4770
        %4803 = vst [vmem:[%s194 + $0xf8] sm:$0xff] %v4771
        %v4804 = vadd.f32 %v4740, %v4741
        %v4805 = vadd.f32 %v4804, %v4742
        %v4806 = vadd.f32 %v4805, %v4743
        %v4807 = vadd.f32 %v4806, %v4744
        %v4808 = vadd.f32 %v4807, %v4745
        %v4809 = vadd.f32 %v4808, %v4746
        %v4810 = vadd.f32 %v4809, %v4747
        %v4811 = vadd.f32 %v4810, %v4748
        %v4812 = vadd.f32 %v4811, %v4749
        %v4813 = vadd.f32 %v4812, %v4750
        %v4814 = vadd.f32 %v4813, %v4751
        %v4815 = vadd.f32 %v4814, %v4752
        %v4816 = vadd.f32 %v4815, %v4753
        %v4817 = vadd.f32 %v4816, %v4754
        %v4818 = vadd.f32 %v4817, %v4755
        %v4819 = vadd.f32 %v4818, %v4756
        %v4820 = vadd.f32 %v4819, %v4757
        %v4821 = vadd.f32 %v4820, %v4758
        %v4822 = vadd.f32 %v4821, %v4759
        %v4823 = vadd.f32 %v4822, %v4760
        %v4824 = vadd.f32 %v4823, %v4761
        %v4825 = vadd.f32 %v4824, %v4762
        %v4826 = vadd.f32 %v4825, %v4763
        %v4827 = vadd.f32 %v4826, %v4764
        %v4828 = vadd.f32 %v4827, %v4765
        %v4829 = vadd.f32 %v4828, %v4766
        %v4830 = vadd.f32 %v4829, %v4767
        %v4831 = vadd.f32 %v4830, %v4768
        %v4832 = vadd.f32 %v4831, %v4769
        %v4833 = vadd.f32 %v4832, %v4770
        %v4834 = vadd.f32 %v4833, %v4771
        %v4835 = vrot.slane %v4834, 4
        %v4836 = vadd.f32 %v4834, %v4835
        %v4837 = vrot.slane %v4836, 2
        %v4838 = vadd.f32 %v4836, %v4837
        %v4839 = vrot.slane %v4838, 1
        %v4840 = vadd.f32 %v4838, %v4839
        %4841 = vst [vmem:[%s200] sm:$0x1] %v4840
        %v4842 = vmul.f32 %v4740, %v4740
        %v4843 = vmul.f32 %v4741, %v4741
        %v4844 = vmul.f32 %v4742, %v4742
        %v4845 = vmul.f32 %v4743, %v4743
        %v4846 = vmul.f32 %v4744, %v4744
        %v4847 = vmul.f32 %v4745, %v4745
        %v4848 = vmul.f32 %v4746, %v4746
        %v4849 = vmul.f32 %v4747, %v4747
        %v4850 = vmul.f32 %v4748, %v4748
        %v4851 = vmul.f32 %v4749, %v4749
        %v4852 = vmul.f32 %v4750, %v4750
        %v4853 = vmul.f32 %v4751, %v4751
        %v4854 = vmul.f32 %v4752, %v4752
        %v4855 = vmul.f32 %v4753, %v4753
        %v4856 = vmul.f32 %v4754, %v4754
        %v4857 = vmul.f32 %v4755, %v4755
        %v4858 = vmul.f32 %v4756, %v4756
        %v4859 = vmul.f32 %v4757, %v4757
        %v4860 = vmul.f32 %v4758, %v4758
        %v4861 = vmul.f32 %v4759, %v4759
        %v4862 = vmul.f32 %v4760, %v4760
        %v4863 = vmul.f32 %v4761, %v4761
        %v4864 = vmul.f32 %v4762, %v4762
        %v4865 = vmul.f32 %v4763, %v4763
        %v4866 = vmul.f32 %v4764, %v4764
        %v4867 = vmul.f32 %v4765, %v4765
        %v4868 = vmul.f32 %v4766, %v4766
        %v4869 = vmul.f32 %v4767, %v4767
        %v4870 = vmul.f32 %v4768, %v4768
        %v4871 = vmul.f32 %v4769, %v4769
        %v4872 = vmul.f32 %v4770, %v4770
        %v4873 = vmul.f32 %v4771, %v4771
        %v4874 = vadd.f32 %v4842, %v4843
        %v4875 = vadd.f32 %v4874, %v4844
        %v4876 = vadd.f32 %v4875, %v4845
        %v4877 = vadd.f32 %v4876, %v4846
        %v4878 = vadd.f32 %v4877, %v4847
        %v4879 = vadd.f32 %v4878, %v4848
        %v4880 = vadd.f32 %v4879, %v4849
        %v4881 = vadd.f32 %v4880, %v4850
        %v4882 = vadd.f32 %v4881, %v4851
        %v4883 = vadd.f32 %v4882, %v4852
        %v4884 = vadd.f32 %v4883, %v4853
        %v4885 = vadd.f32 %v4884, %v4854
        %v4886 = vadd.f32 %v4885, %v4855
        %v4887 = vadd.f32 %v4886, %v4856
        %v4888 = vadd.f32 %v4887, %v4857
        %v4889 = vadd.f32 %v4888, %v4858
        %v4890 = vadd.f32 %v4889, %v4859
        %v4891 = vadd.f32 %v4890, %v4860
        %v4892 = vadd.f32 %v4891, %v4861
        %v4893 = vadd.f32 %v4892, %v4862
        %v4894 = vadd.f32 %v4893, %v4863
        %v4895 = vadd.f32 %v4894, %v4864
        %v4896 = vadd.f32 %v4895, %v4865
        %v4897 = vadd.f32 %v4896, %v4866
        %v4898 = vadd.f32 %v4897, %v4867
        %v4899 = vadd.f32 %v4898, %v4868
        %v4900 = vadd.f32 %v4899, %v4869
        %v4901 = vadd.f32 %v4900, %v4870
        %v4902 = vadd.f32 %v4901, %v4871
        %v4903 = vadd.f32 %v4902, %v4872
        %v4904 = vadd.f32 %v4903, %v4873
        %v4905 = vrot.slane %v4904, 4
        %v4906 = vadd.f32 %v4904, %v4905
        %v4907 = vrot.slane %v4906, 2
        %v4908 = vadd.f32 %v4906, %v4907
        %v4909 = vrot.slane %v4908, 1
        %v4910 = vadd.f32 %v4908, %v4909
        %4911 = vst [vmem:[%s206] sm:$0x1] %v4910
        %s4912 = sand.u32 %s77, 1
        %s4913 = scalar_lea.sflag [#allocation3], %s4912
        %s4914 = sand.u32 %s77, 1
        %s4915 = smul.addr %s4914, 256
        %s4916 = scalar_lea.vmem [#allocation2], %s4915
        %s4917 = sand.u32 %s22, 1
        %s4918 = scalar_lea.sflag [#allocation5], %s4917
        %s4919 = sand.u32 %s103, 1
        %s4920 = scalar_lea.vmem [#allocation4], %s4919
        %s4921 = sand.u32 %s22, 1
        %s4922 = scalar_lea.sflag [#allocation5], %s4921
        %s4923 = sand.u32 %s129, 1
        %s4924 = scalar_lea.vmem [#allocation6], %s4923
        // Predicated region
        $region29: #{tpu_custom_call.1} parent=27 // pred_check
          %p4925 = pneg %p87
        $region30: #{tpu_custom_call.1} parent=27 // pred_check_branch
          %4927 = sbr.rel (%p4925) target = $region32
        $region31: #{tpu_custom_call.1} parent=27 // pred_region
          %s4929 = ssub.s32 4096, 4096
          %4930 = vsyncadd %s4913, %s4929
          %s4931 = smul.addr %s22, 32
          %s4932 = smul.addr %s4931, 128
          %s4933 = scalar_lea.hbm %s2, %s4932
          %s4934 = sshll.u32 %s4916, 4
          %s4935 = int_to_ptr.vmem [resolvable:$true] %s4934
          %4940 = dma.vmem_to_hbm [thread:$0]  %s4935, 4096, %s4933, %s4913, 128, 128, 8
        $region32: #{tpu_custom_call.1} parent=27 // pred_fallthru
          _
        // Predicated region
        $region33: #{tpu_custom_call.1} parent=27 // pred_check
          %p4941 = pneg %p113
        $region34: #{tpu_custom_call.1} parent=27 // pred_check_branch
          %4943 = sbr.rel (%p4941) target = $region36
        $region35: #{tpu_custom_call.1} parent=27 // pred_region
          %s4945 = ssub.s32 16, 16
          %4946 = vsyncadd %s4918, %s4945
          %s4947 = smul.addr %s22, 16
          %s4948 = scalar_lea.hbm %s3, %s4947
          %s4950 = sshll.u32 %s4920, 4
          %s4951 = int_to_ptr.vmem [resolvable:$true] %s4950
          %4953 = dma.vmem_to_hbm [thread:$0]  %s4951, 16, %s4948, %s4918
        $region36: #{tpu_custom_call.1} parent=27 // pred_fallthru
          _
        // Predicated region
        $region37: #{tpu_custom_call.1} parent=27 // pred_check
          %p4954 = pneg %p139
        $region38: #{tpu_custom_call.1} parent=27 // pred_check_branch
          %4956 = sbr.rel (%p4954) target = $region40
        $region39: #{tpu_custom_call.1} parent=27 // pred_region
          %s4958 = ssub.s32 16, 16
          %4959 = vsyncadd %s4922, %s4958
          %s4960 = smul.addr %s22, 16
          %s4961 = scalar_lea.hbm %s4, %s4960
          %s4963 = sshll.u32 %s4924, 4
          %s4964 = int_to_ptr.vmem [resolvable:$true] %s4963
          %4966 = dma.vmem_to_hbm [thread:$0]  %s4964, 16, %s4961, %s4922
        $region40: #{tpu_custom_call.1} parent=27 // pred_fallthru
          _
      $region28: #{tpu_custom_call.1} parent=5 // pred_fallthru
        _
      %p4967 = scmp.le.s32.totalorder 2, %s17
      // Predicated region
      $region41: #{tpu_custom_call.1} parent=5 // pred_check
        %p4968 = pneg %p4967
      $region42: #{tpu_custom_call.1} parent=5 // pred_check_branch
        %4970 = sbr.rel (%p4968) target = $region44
      $region43: #{tpu_custom_call.1} parent=5 // pred_region
        %s4971 = ssub.s32 %s17, 2
        // Predicated region
        $region45: #{tpu_custom_call.1} parent=43 // pred_check
          %p4972 = pneg %p93
        $region46: #{tpu_custom_call.1} parent=43 // pred_check_branch
          %4974 = sbr.rel (%p4972) target = $region48
        $region47: #{tpu_custom_call.1} parent=43 // pred_region
          %s4975 = sand.u32 %s78, 1
          %s4976 = scalar_lea.sflag [#allocation3], %s4975
          %s4977 = sand.u32 %s78, 1
          %s4978 = smul.addr %s4977, 256
          %s4979 = scalar_lea.vmem [#allocation2], %s4978
          %4980 = dma.done %s4976, 4096
        $region48: #{tpu_custom_call.1} parent=43 // pred_fallthru
          _
        // Predicated region
        $region49: #{tpu_custom_call.1} parent=43 // pred_check
          %p4981 = pneg %p119
        $region50: #{tpu_custom_call.1} parent=43 // pred_check_branch
          %4983 = sbr.rel (%p4981) target = $region52
        $region51: #{tpu_custom_call.1} parent=43 // pred_region
          %s4984 = sand.u32 %s23, 1
          %s4985 = scalar_lea.sflag [#allocation5], %s4984
          %s4986 = sand.u32 %s104, 1
          %s4987 = scalar_lea.vmem [#allocation4], %s4986
          %4988 = dma.done %s4985, 16
        $region52: #{tpu_custom_call.1} parent=43 // pred_fallthru
          _
        // Predicated region
        $region53: #{tpu_custom_call.1} parent=43 // pred_check
          %p4989 = pneg %p145
        $region54: #{tpu_custom_call.1} parent=43 // pred_check_branch
          %4991 = sbr.rel (%p4989) target = $region56
        $region55: #{tpu_custom_call.1} parent=43 // pred_region
          %s4992 = sand.u32 %s23, 1
          %s4993 = scalar_lea.sflag [#allocation5], %s4992
          %s4994 = sand.u32 %s130, 1
          %s4995 = scalar_lea.vmem [#allocation6], %s4994
          %4996 = dma.done %s4993, 16
        $region56: #{tpu_custom_call.1} parent=43 // pred_fallthru
          _
      $region44: #{tpu_custom_call.1} parent=5 // pred_fallthru
        _
    $region6: #{tpu_custom_call.1} parent=1 // loop_footer
      %s21 = sadd.s32 1, %s17
    $region7: #{tpu_custom_call.1} parent=1 // loop_footer_branch
      %16 = sbr.rel target = $region3
    $region8: #{tpu_custom_call.1} parent=1 // loop_exit
      _
    %4997 = vsyncpa [#allocation3], 1
    %s4998 = scalar_lea.sflag [#allocation3], 1
    %4999 = vsyncpa %s4998, 1
    %5000 = vsyncpa [#allocation5], 1
    %s5001 = scalar_lea.sflag [#allocation5], 1
    %5002 = vsyncpa %s5001, 1

</llo_original>
